<compile_context>
chip_gen: v5e
topology: v5e:2x2
jax: 0.10.0
libtpu: 0.0.40
codegen_flags: <defaults>
</compile_context>

<pallas_src>
import jax
import jax.numpy as jnp
import numpy as np
from jax.experimental import pallas as pl
from jax.experimental.pallas import tpu as pltpu


def _round_up(x, m):
    return ((x + m - 1) // m) * m


def make_group_mat(C, G):
    gm = np.zeros((C, G), np.float32)
    gm[np.arange(C), np.arange(C) // (C // G)] = 1.0
    return jnp.asarray(gm)


def make_resnet_kernel(H, W, Cin, Cout, has_shortcut, eps=1e-5):
    HW = H * W
    PAD = _round_up(W + 1, 16)      # >= max |tap offset| = W+1; 16-aligned bf16 stores
    taps = [(dy, dx) for dy in (-1, 0, 1) for dx in (-1, 0, 1)]

    def silu(x):
        # exp + approx reciprocal both go to the EUP slot, keeping VALU free.
        return x * pl.reciprocal(1.0 + jnp.exp(-x), approx=True)

    def group_norm(x, gmat, gamma, beta):
        # x: (HW, C) f32. gmat: (C, G) one-hot group membership. Stats in f32.
        C = x.shape[1]
        G = gmat.shape[1]
        cnt = float(HW * (C // G))
        csum = jnp.sum(x, axis=0, keepdims=True)                  # (1, C)
        csq = jnp.sum(x * x, axis=0, keepdims=True)               # (1, C)
        gsum = jnp.dot(csum, gmat, preferred_element_type=jnp.float32)   # (1, G)
        gsq = jnp.dot(csq, gmat, preferred_element_type=jnp.float32)     # (1, G)
        gmean = gsum / cnt
        gvar = jnp.maximum(gsq / cnt - gmean * gmean, 0.0)        # clamped single-pass var
        ginv = jax.lax.rsqrt(gvar + eps)
        dn = (((1,), (1,)), ((), ()))                             # (1,G)x(C,G) -> (1,C)
        mean_c = jax.lax.dot_general(gmean, gmat, dn, preferred_element_type=jnp.float32)
        inv_c = jax.lax.dot_general(ginv, gmat, dn, preferred_element_type=jnp.float32)
        scale = inv_c * gamma                                     # (1, C)
        shift = beta - mean_c * scale                             # (1, C)
        return x * scale + shift                                  # single FMA on (HW, C)

    def tap_slices(pad_ref, mc0, mcl):
        # Yields (tap_index, shifted bf16 source) with column-wrap rows zeroed.
        for k, (dy, dx) in enumerate(taps):
            o = dy * W + dx
            sh = pad_ref[pl.ds(PAD + o, HW), :]                   # shifted bf16 view
            if dx == 1:
                sh = sh * mcl                                     # outputs at col W-1 invalid
            elif dx == -1:
                sh = sh * mc0                                     # outputs at col 0 invalid
            yield k, sh

    def kernel(x_ref, t_ref, mc0_ref, mcl_ref,
               g1_ref, gamma1_ref, beta1_ref, w1_ref, b1_ref,
               g2_ref, gamma2_ref, beta2_ref, w2_ref, b2_ref, *rest):
        if has_shortcut:
            wsc_ref, bsc_ref, out_ref, pad_a, pad_b = rest
        else:
            out_ref, pad_a, pad_b = rest

        bf16 = jnp.bfloat16
        mc0 = mc0_ref[...]                                        # (HW, 1) bf16, 0 at col 0
        mcl = mcl_ref[...]                                        # (HW, 1) bf16, 0 at col W-1

        # Zero scratch margins every step (cheap; a program_id==0 guard would be
        # wrong on the second core under megacore "parallel" grid splitting).
        pad_a[pl.ds(0, PAD), :] = jnp.zeros((PAD, Cin), bf16)
        pad_a[pl.ds(PAD + HW, PAD), :] = jnp.zeros((PAD, Cin), bf16)
        pad_b[pl.ds(0, PAD), :] = jnp.zeros((PAD, Cout), bf16)
        pad_b[pl.ds(PAD + HW, PAD), :] = jnp.zeros((PAD, Cout), bf16)

        xb = x_ref[0].astype(jnp.float32)                         # (HW, Cin) bf16 -> f32

        # ---- GroupNorm1 (normalized x also feeds the residual / shortcut) ----
        xn = group_norm(xb, g1_ref[...], gamma1_ref[...], beta1_ref[...])

        # ---- residual / 1x1 shortcut first; seed out_ref = residual + conv2 bias
        #      so neither it nor a conv2 accumulator stays live across the convs ----
        if has_shortcut:
            sc = jnp.dot(xn.astype(bf16), wsc_ref[...],
                         preferred_element_type=jnp.float32) + bsc_ref[...]
        else:
            sc = xn                                               # identity residual = norm1(x)
        out_ref[0] = sc + b2_ref[...]

        # ---- conv1 (3x3 SAME): one bf16 interior store + 9 shifted-slice MXU taps ----
        pad_a[pl.ds(PAD, HW), :] = silu(xn).astype(bf16)
        acc = jnp.zeros((HW, Cout), jnp.float32)
        for k, sh in tap_slices(pad_a, mc0, mcl):
            acc = acc + jnp.dot(sh, w1_ref[k], preferred_element_type=jnp.float32)
        acc = acc + (b1_ref[...] + t_ref[0])                      # conv1 bias + silu(temb proj)

        # ---- GroupNorm2 + SiLU ----
        h2 = silu(group_norm(acc, g2_ref[...], gamma2_ref[...], beta2_ref[...]))
        # TODO(synk): dropout omitted; module default p=0.0 -> identity.

        # ---- conv2 (3x3 SAME): taps accumulate directly into out_ref ----
        pad_b[pl.ds(PAD, HW), :] = h2.astype(bf16)
        for k, sh in tap_slices(pad_b, mc0, mcl):
            out_ref[0] += jnp.dot(sh, w2_ref[k], preferred_element_type=jnp.float32)

    return kernel


def resnet_block_pallas(x_nhwc, temb, params, num_groups=32):
    N, H, W, Cin = x_nhwc.shape
    Cout = params['w1'].shape[-1]
    HW = H * W
    PAD = _round_up(W + 1, 16)
    has_shortcut = (Cin != Cout)
    bf16 = jnp.bfloat16

    # Activations shipped as bf16 (halves the dominant HBM read traffic).
    x_rows = x_nhwc.reshape(N, HW, Cin).astype(bf16)

    # Hoisted temb projection: one batched matmul + SiLU outside the kernel.
    t_proj = jax.nn.silu(
        jnp.dot(temb.astype(jnp.float32), params['tw'],
                precision=jax.lax.Precision.HIGHEST) + params['tb']
    ).reshape(N, 1, Cout).astype(jnp.float32)

    # Conv weights shipped as bf16, tap-major (HWIO -> (9, Cin, Cout)).
    w1r = params['w1'].reshape(9, Cin, Cout).astype(bf16)
    w2r = params['w2'].reshape(9, Cout, Cout).astype(bf16)
    g1 = make_group_mat(Cin, num_groups)
    g2 = make_group_mat(Cout, num_groups)

    col = np.arange(HW) % W
    mc0 = jnp.asarray((col != 0).astype(np.float32).reshape(HW, 1)).astype(bf16)
    mcl = jnp.asarray((col != W - 1).astype(np.float32).reshape(HW, 1)).astype(bf16)

    args = [x_rows, t_proj, mc0, mcl,
            g1, params['gamma1'], params['beta1'], w1r, params['b1'],
            g2, params['gamma2'], params['beta2'], w2r, params['b2']]
    if has_shortcut:
        args += [params['wsc'].astype(bf16), params['bsc']]

    def full(a):
        nd = a.ndim
        return pl.BlockSpec(a.shape, lambda n, _nd=nd: (0,) * _nd)

    in_specs = [pl.BlockSpec((1, HW, Cin), lambda n: (n, 0, 0)),
                pl.BlockSpec((1, 1, Cout), lambda n: (n, 0, 0))]
    in_specs += [full(a) for a in args[2:]]

    kernel = make_resnet_kernel(H, W, Cin, Cout, has_shortcut)

    flops = 2 * N * HW * (9 * Cin * Cout + 9 * Cout * Cout
                          + (Cin * Cout if has_shortcut else 0))
    bytes_accessed = (x_rows.size * 2 + N * HW * Cout * 4
                      + (w1r.size + w2r.size) * 2)
    cost = pl.CostEstimate(flops=int(flops),
                           transcendentals=int(N * HW * (Cin + Cout)),
                           bytes_accessed=int(bytes_accessed))

    # Explicit scoped-VMEM budget (v5e default is only 16 MiB).
    const_bytes = sum(int(np.prod(a.shape)) * a.dtype.itemsize for a in args[2:])
    block_bytes = 2 * (HW * Cin * 2 + Cout * 4 + HW * Cout * 4)     # double-buffered blocks
    scratch_bytes = (HW + 2 * PAD) * (Cin + Cout) * 2
    live_f32 = 6 * HW * max(Cin, Cout) * 4                          # headroom for f32 temps
    vmem_limit = int(min(max(2 * const_bytes + block_bytes + scratch_bytes
                             + live_f32 + (4 << 20), 16 << 20), 64 << 20))

    out = pl.pallas_call(
        kernel,
        out_shape=jax.ShapeDtypeStruct((N, HW, Cout), jnp.float32),
        grid_spec=pltpu.PrefetchScalarGridSpec(
            num_scalar_prefetch=0,
            grid=(N,),
            in_specs=in_specs,
            out_specs=pl.BlockSpec((1, HW, Cout), lambda n: (n, 0, 0)),
            scratch_shapes=[pltpu.VMEM((HW + 2 * PAD, Cin), bf16),
                            pltpu.VMEM((HW + 2 * PAD, Cout), bf16)]),
        compiler_params=pltpu.CompilerParams(
            dimension_semantics=("parallel",),
            vmem_limit_bytes=vmem_limit),
        cost_estimate=cost,
    )(*args)
    return out.reshape(N, H, W, Cout)


def init_params(key, in_ch, temb_ch, out_ch):
    ks = jax.random.split(key, 12)
    f = jnp.float32
    return {
        'gamma1': (1.0 + 0.1 * jax.random.normal(ks[0], (1, in_ch))).astype(f),
        'beta1': (0.1 * jax.random.normal(ks[1], (1, in_ch))).astype(f),
        'w1': (jax.random.normal(ks[2], (3, 3, in_ch, out_ch)) / np.sqrt(9 * in_ch)).astype(f),
        'b1': (0.05 * jax.random.normal(ks[3], (1, out_ch))).astype(f),
        'tw': (jax.random.normal(ks[4], (temb_ch, out_ch)) / np.sqrt(temb_ch)).astype(f),
        'tb': (0.05 * jax.random.normal(ks[5], (1, out_ch))).astype(f),
        'gamma2': (1.0 + 0.1 * jax.random.normal(ks[6], (1, out_ch))).astype(f),
        'beta2': (0.1 * jax.random.normal(ks[7], (1, out_ch))).astype(f),
        'w2': (jax.random.normal(ks[8], (3, 3, out_ch, out_ch)) / np.sqrt(9 * out_ch)).astype(f),
        'b2': (0.05 * jax.random.normal(ks[9], (1, out_ch))).astype(f),
        'wsc': (jax.random.normal(ks[10], (in_ch, out_ch)) / np.sqrt(in_ch)).astype(f),
        'bsc': (0.05 * jax.random.normal(ks[11], (1, out_ch))).astype(f),
    }


def ref_forward(x_nhwc, temb, params, num_groups=32, eps=1e-5):
    hi = jax.lax.Precision.HIGHEST

    def gn(x, gamma, beta):
        N, H, W, C = x.shape
        xg = x.reshape(N, H, W, num_groups, C // num_groups)
        mean = xg.mean(axis=(1, 2, 4), keepdims=True)
        var = ((xg - mean) ** 2).mean(axis=(1, 2, 4), keepdims=True)
        xn = ((xg - mean) / jnp.sqrt(var + eps)).reshape(N, H, W, C)
        return xn * gamma.reshape(1, 1, 1, C) + beta.reshape(1, 1, 1, C)

    def conv3(x, w, b):
        y = jax.lax.conv_general_dilated(
            x, w, (1, 1), 'SAME', dimension_numbers=('NHWC', 'HWIO', 'NHWC'),
            precision=hi)
        return y + b.reshape(1, 1, 1, -1)

    xn = gn(x_nhwc, params['gamma1'], params['beta1'])
    h = jax.nn.silu(xn)
    h = conv3(h, params['w1'], params['b1'])
    t = jax.nn.silu(jnp.dot(temb, params['tw'], precision=hi) + params['tb'])
    h = h + t[:, None, None, :]
    h = jax.nn.silu(gn(h, params['gamma2'], params['beta2']))
    h = conv3(h, params['w2'], params['b2'])
    Cin, Cout = x_nhwc.shape[-1], params['w1'].shape[-1]
    if Cin != Cout:
        xn = jnp.einsum('nhwc,cd->nhwd', xn, params['wsc'], precision=hi) \
             + params['bsc'].reshape(1, 1, 1, -1)
    return xn + h


if __name__ == "__main__":
    key = jax.random.PRNGKey(0)
    N, H, W = 2, 8, 8
    # (in_ch, temb_ch, out_ch): first exercises the 1x1-shortcut path,
    # second the identity-residual path. GroupNorm(32) needs channels % 32 == 0.
    configs = [(32, 64, 64), (64, 64, 64)]
    for in_ch, temb_ch, out_ch in configs:
        kx, kt, kp, key = jax.random.split(key, 4)
        x_nchw = jax.random.normal(kx, (N, in_ch, H, W), jnp.float32)  # PyTorch-style NCHW
        temb = jax.random.normal(kt, (N, temb_ch), jnp.float32)
        params = init_params(kp, in_ch, temb_ch, out_ch)

        x_nhwc = jnp.transpose(x_nchw, (0, 2, 3, 1))
        out = jax.block_until_ready(resnet_block_pallas(x_nhwc, temb, params))
        ref = ref_forward(x_nhwc, temb, params)
        err = float(jnp.max(jnp.abs(out - ref)))
        assert out.shape == (N, H, W, out_ch)
        assert np.isfinite(np.asarray(out)).all()
        assert err < 5e-2, f"in_ch={in_ch} out_ch={out_ch}: max abs error {err}"
    print("KERNEL_OK")
</pallas_src>

<mosaic_0001>
module attributes {stable_mosaic.version = 11 : i64} {
  func.func @kernel(%arg0: i32, %arg1: memref<1x64x32xbf16, #tpu.memory_space<vmem>>, %arg2: memref<1x1x64xf32, #tpu.memory_space<vmem>>, %arg3: memref<64x1xbf16, #tpu.memory_space<vmem>>, %arg4: memref<64x1xbf16, #tpu.memory_space<vmem>>, %arg5: memref<32x32xf32, #tpu.memory_space<vmem>>, %arg6: memref<1x32xf32, #tpu.memory_space<vmem>>, %arg7: memref<1x32xf32, #tpu.memory_space<vmem>>, %arg8: memref<9x32x64xbf16, #tpu.memory_space<vmem>>, %arg9: memref<1x64xf32, #tpu.memory_space<vmem>>, %arg10: memref<64x32xf32, #tpu.memory_space<vmem>>, %arg11: memref<1x64xf32, #tpu.memory_space<vmem>>, %arg12: memref<1x64xf32, #tpu.memory_space<vmem>>, %arg13: memref<9x64x64xbf16, #tpu.memory_space<vmem>>, %arg14: memref<1x64xf32, #tpu.memory_space<vmem>>, %arg15: memref<32x64xbf16, #tpu.memory_space<vmem>>, %arg16: memref<1x64xf32, #tpu.memory_space<vmem>>, %arg17: memref<1x64x64xf32, #tpu.memory_space<vmem>>, %arg18: memref<96x32xbf16, #tpu.memory_space<vmem>>, %arg19: memref<96x64xbf16, #tpu.memory_space<vmem>>) attributes {dimension_semantics = [#tpu.dimension_semantics<parallel>], iteration_bounds = array<i64: 2>, scalar_prefetch = 0 : i64, scratch_operands = 2 : i64, tpu.core_type = #tpu.core_type<tc>, window_params = [{transform_indices = @transform_0, window_bounds = array<i64: 1, 64, 32>}, {transform_indices = @transform_1, window_bounds = array<i64: 1, 1, 64>}, {pipeline_mode = #tpu.pipeline_mode<synchronous>, transform_indices = @transform_2, window_bounds = array<i64: 64, 1>}, {pipeline_mode = #tpu.pipeline_mode<synchronous>, transform_indices = @transform_3, window_bounds = array<i64: 64, 1>}, {pipeline_mode = #tpu.pipeline_mode<synchronous>, transform_indices = @transform_4, window_bounds = array<i64: 32, 32>}, {pipeline_mode = #tpu.pipeline_mode<synchronous>, transform_indices = @transform_5, window_bounds = array<i64: 1, 32>}, {pipeline_mode = #tpu.pipeline_mode<synchronous>, transform_indices = @transform_6, window_bounds = array<i64: 1, 32>}, {pipeline_mode = #tpu.pipeline_mode<synchronous>, transform_indices = @transform_7, window_bounds = array<i64: 9, 32, 64>}, {pipeline_mode = #tpu.pipeline_mode<synchronous>, transform_indices = @transform_8, window_bounds = array<i64: 1, 64>}, {pipeline_mode = #tpu.pipeline_mode<synchronous>, transform_indices = @transform_9, window_bounds = array<i64: 64, 32>}, {pipeline_mode = #tpu.pipeline_mode<synchronous>, transform_indices = @transform_10, window_bounds = array<i64: 1, 64>}, {pipeline_mode = #tpu.pipeline_mode<synchronous>, transform_indices = @transform_11, window_bounds = array<i64: 1, 64>}, {pipeline_mode = #tpu.pipeline_mode<synchronous>, transform_indices = @transform_12, window_bounds = array<i64: 9, 64, 64>}, {pipeline_mode = #tpu.pipeline_mode<synchronous>, transform_indices = @transform_13, window_bounds = array<i64: 1, 64>}, {pipeline_mode = #tpu.pipeline_mode<synchronous>, transform_indices = @transform_14, window_bounds = array<i64: 32, 64>}, {pipeline_mode = #tpu.pipeline_mode<synchronous>, transform_indices = @transform_15, window_bounds = array<i64: 1, 64>}, {transform_indices = @transform_16, window_bounds = array<i64: 1, 64, 64>}]} {
    %c0 = arith.constant 0 : index
    %c0_0 = arith.constant 0 : index
    %0 = vector.load %arg3[%c0, %c0_0] : memref<64x1xbf16, #tpu.memory_space<vmem>>, vector<64x1xbf16>
    %c0_1 = arith.constant 0 : index
    %c0_2 = arith.constant 0 : index
    %1 = vector.load %arg4[%c0_1, %c0_2] : memref<64x1xbf16, #tpu.memory_space<vmem>>, vector<64x1xbf16>
    %cst = arith.constant 0.000000e+00 : bf16
    %2 = vector.broadcast %cst : bf16 to vector<16x32xbf16>
    %c0_3 = arith.constant 0 : index
    %c0_4 = arith.constant 0 : index
    %3 = vector.load %arg18[%c0_3, %c0_4] : memref<96x32xbf16, #tpu.memory_space<vmem>>, vector<16x32xbf16>
    tpu.vector_store %arg18[%c0_3, %c0_4], %2 {strides = array<i32>} : memref<96x32xbf16, #tpu.memory_space<vmem>>, vector<16x32xbf16>,
    %cst_5 = arith.constant 0.000000e+00 : bf16
    %4 = vector.broadcast %cst_5 : bf16 to vector<16x32xbf16>
    %c80 = arith.constant 80 : index
    %c0_6 = arith.constant 0 : index
    %5 = vector.load %arg18[%c80, %c0_6] : memref<96x32xbf16, #tpu.memory_space<vmem>>, vector<16x32xbf16>
    tpu.vector_store %arg18[%c80, %c0_6], %4 {strides = array<i32>} : memref<96x32xbf16, #tpu.memory_space<vmem>>, vector<16x32xbf16>,
    %cst_7 = arith.constant 0.000000e+00 : bf16
    %6 = vector.broadcast %cst_7 : bf16 to vector<16x64xbf16>
    %c0_8 = arith.constant 0 : index
    %c0_9 = arith.constant 0 : index
    %7 = vector.load %arg19[%c0_8, %c0_9] : memref<96x64xbf16, #tpu.memory_space<vmem>>, vector<16x64xbf16>
    tpu.vector_store %arg19[%c0_8, %c0_9], %6 {strides = array<i32>} : memref<96x64xbf16, #tpu.memory_space<vmem>>, vector<16x64xbf16>,
    %cst_10 = arith.constant 0.000000e+00 : bf16
    %8 = vector.broadcast %cst_10 : bf16 to vector<16x64xbf16>
    %c80_11 = arith.constant 80 : index
    %c0_12 = arith.constant 0 : index
    %9 = vector.load %arg19[%c80_11, %c0_12] : memref<96x64xbf16, #tpu.memory_space<vmem>>, vector<16x64xbf16>
    tpu.vector_store %arg19[%c80_11, %c0_12], %8 {strides = array<i32>} : memref<96x64xbf16, #tpu.memory_space<vmem>>, vector<16x64xbf16>,
    %c0_13 = arith.constant 0 : index
    %c0_14 = arith.constant 0 : index
    %c0_15 = arith.constant 0 : index
    %10 = vector.load %arg1[%c0_13, %c0_14, %c0_15] : memref<1x64x32xbf16, #tpu.memory_space<vmem>>, vector<1x64x32xbf16>
    %11 = vector.shape_cast %10 : vector<1x64x32xbf16> to vector<64x32xbf16>
    %12 = arith.extf %11 : vector<64x32xbf16> to vector<64x32xf32>
    %c0_16 = arith.constant 0 : index
    %c0_17 = arith.constant 0 : index
    %13 = vector.load %arg5[%c0_16, %c0_17] : memref<32x32xf32, #tpu.memory_space<vmem>>, vector<32x32xf32>
    %c0_18 = arith.constant 0 : index
    %c0_19 = arith.constant 0 : index
    %14 = vector.load %arg6[%c0_18, %c0_19] : memref<1x32xf32, #tpu.memory_space<vmem>>, vector<1x32xf32>
    %c0_20 = arith.constant 0 : index
    %c0_21 = arith.constant 0 : index
    %15 = vector.load %arg7[%c0_20, %c0_21] : memref<1x32xf32, #tpu.memory_space<vmem>>, vector<1x32xf32>
    %cst_22 = arith.constant dense<0.000000e+00> : vector<32xf32>
    %16 = vector.multi_reduction <add>, %12, %cst_22 [0] : vector<64x32xf32> to vector<32xf32>
    %17 = vector.shape_cast %16 : vector<32xf32> to vector<1x32xf32>
    %18 = arith.mulf %12, %12 : vector<64x32xf32>
    %cst_23 = arith.constant dense<0.000000e+00> : vector<32xf32>
    %19 = vector.multi_reduction <add>, %18, %cst_23 [0] : vector<64x32xf32> to vector<32xf32>
    %20 = vector.shape_cast %19 : vector<32xf32> to vector<1x32xf32>
    %cst_24 = arith.constant dense<0.000000e+00> : vector<1x32xf32>
    %21 = tpu.matmul %17, %13, %cst_24 {dimension_numbers = #tpu.dot_dimension_numbers<[1], [0], [0], [1], [0, 0, 1, 1], [], []>} : vector<1x32xf32>, vector<32x32xf32>, vector<1x32xf32> -> vector<1x32xf32>
    %cst_25 = arith.constant dense<0.000000e+00> : vector<1x32xf32>
    %22 = tpu.matmul %20, %13, %cst_25 {dimension_numbers = #tpu.dot_dimension_numbers<[1], [0], [0], [1], [0, 0, 1, 1], [], []>} : vector<1x32xf32>, vector<32x32xf32>, vector<1x32xf32> -> vector<1x32xf32>
    %cst_26 = arith.constant 6.400000e+01 : f32
    %23 = vector.broadcast %cst_26 : f32 to vector<1x32xf32>
    %24 = arith.divf %21, %23 : vector<1x32xf32>
    %cst_27 = arith.constant 6.400000e+01 : f32
    %25 = vector.broadcast %cst_27 : f32 to vector<1x32xf32>
    %26 = arith.divf %22, %25 : vector<1x32xf32>
    %27 = arith.mulf %24, %24 : vector<1x32xf32>
    %28 = arith.subf %26, %27 : vector<1x32xf32>
    %cst_28 = arith.constant 0.000000e+00 : f32
    %29 = vector.broadcast %cst_28 : f32 to vector<1x32xf32>
    %30 = arith.maximumf %28, %29 : vector<1x32xf32>
    %cst_29 = arith.constant 9.99999974E-6 : f32
    %31 = vector.broadcast %cst_29 : f32 to vector<1x32xf32>
    %32 = arith.addf %30, %31 : vector<1x32xf32>
    %33 = math.rsqrt %32 : vector<1x32xf32>
    %cst_30 = arith.constant dense<0.000000e+00> : vector<1x32xf32>
    %34 = tpu.matmul %24, %13, %cst_30 {dimension_numbers = #tpu.dot_dimension_numbers<[1], [1], [0], [0], [0, 0, 1, 0], [], []>} : vector<1x32xf32>, vector<32x32xf32>, vector<1x32xf32> -> vector<1x32xf32>
    %cst_31 = arith.constant dense<0.000000e+00> : vector<1x32xf32>
    %35 = tpu.matmul %33, %13, %cst_31 {dimension_numbers = #tpu.dot_dimension_numbers<[1], [1], [0], [0], [0, 0, 1, 0], [], []>} : vector<1x32xf32>, vector<32x32xf32>, vector<1x32xf32> -> vector<1x32xf32>
    %36 = arith.mulf %35, %14 : vector<1x32xf32>
    %37 = arith.mulf %34, %36 : vector<1x32xf32>
    %38 = arith.subf %15, %37 : vector<1x32xf32>
    %39 = vector.broadcast %36 : vector<1x32xf32> to vector<64x32xf32>
    %40 = arith.mulf %12, %39 : vector<64x32xf32>
    %41 = vector.broadcast %38 : vector<1x32xf32> to vector<64x32xf32>
    %42 = arith.addf %40, %41 : vector<64x32xf32>
    %43 = arith.truncf %42 : vector<64x32xf32> to vector<64x32xbf16>
    %c0_32 = arith.constant 0 : index
    %c0_33 = arith.constant 0 : index
    %44 = vector.load %arg15[%c0_32, %c0_33] : memref<32x64xbf16, #tpu.memory_space<vmem>>, vector<32x64xbf16>
    %cst_34 = arith.constant dense<0.000000e+00> : vector<64x64xf32>
    %45 = tpu.matmul %43, %44, %cst_34 {dimension_numbers = #tpu.dot_dimension_numbers<[1], [0], [0], [1], [0, 0, 1, 1], [], []>} : vector<64x32xbf16>, vector<32x64xbf16>, vector<64x64xf32> -> vector<64x64xf32>
    %c0_35 = arith.constant 0 : index
    %c0_36 = arith.constant 0 : index
    %46 = vector.load %arg16[%c0_35, %c0_36] : memref<1x64xf32, #tpu.memory_space<vmem>>, vector<1x64xf32>
    %47 = vector.broadcast %46 : vector<1x64xf32> to vector<64x64xf32>
    %48 = arith.addf %45, %47 : vector<64x64xf32>
    %c0_37 = arith.constant 0 : index
    %c0_38 = arith.constant 0 : index
    %49 = vector.load %arg14[%c0_37, %c0_38] : memref<1x64xf32, #tpu.memory_space<vmem>>, vector<1x64xf32>
    %50 = vector.broadcast %49 : vector<1x64xf32> to vector<64x64xf32>
    %51 = arith.addf %48, %50 : vector<64x64xf32>
    %c0_39 = arith.constant 0 : index
    %c0_40 = arith.constant 0 : index
    %c0_41 = arith.constant 0 : index
    %52 = vector.load %arg17[%c0_39, %c0_40, %c0_41] : memref<1x64x64xf32, #tpu.memory_space<vmem>>, vector<1x64x64xf32>
    %53 = vector.shape_cast %52 : vector<1x64x64xf32> to vector<64x64xf32>
    %54 = vector.shape_cast %51 : vector<64x64xf32> to vector<1x64x64xf32>
    tpu.vector_store %arg17[%c0_39, %c0_40, %c0_41], %54 {strides = array<i32>} : memref<1x64x64xf32, #tpu.memory_space<vmem>>, vector<1x64x64xf32>,
    %cst_42 = arith.constant 0.000000e+00 : f32
    %55 = vector.broadcast %cst_42 : f32 to vector<64x32xf32>
    %56 = arith.subf %55, %42 : vector<64x32xf32>
    %57 = math.exp %56 : vector<64x32xf32>
    %cst_43 = arith.constant 1.000000e+00 : f32
    %58 = vector.broadcast %cst_43 : f32 to vector<64x32xf32>
    %59 = arith.addf %58, %57 : vector<64x32xf32>
    %60 = tpu.reciprocal %59 {approx = true} : vector<64x32xf32> -> vector<64x32xf32>
    %61 = arith.mulf %42, %60 : vector<64x32xf32>
    %62 = arith.truncf %61 : vector<64x32xf32> to vector<64x32xbf16>
    %c16 = arith.constant 16 : index
    %c0_44 = arith.constant 0 : index
    %63 = vector.load %arg18[%c16, %c0_44] : memref<96x32xbf16, #tpu.memory_space<vmem>>, vector<64x32xbf16>
    tpu.vector_store %arg18[%c16, %c0_44], %62 {strides = array<i32>} : memref<96x32xbf16, #tpu.memory_space<vmem>>, vector<64x32xbf16>,
    %cst_45 = arith.constant 0.000000e+00 : f32
    %64 = vector.broadcast %cst_45 : f32 to vector<64x64xf32>
    %c7 = arith.constant 7 : index
    %c0_46 = arith.constant 0 : index
    %65 = vector.load %arg18[%c7, %c0_46] : memref<96x32xbf16, #tpu.memory_space<vmem>>, vector<64x32xbf16>
    %66 = vector.broadcast %0 : vector<64x1xbf16> to vector<64x32xbf16>
    %67 = arith.mulf %65, %66 : vector<64x32xbf16>
    %c0_47 = arith.constant 0 : index
    %c0_48 = arith.constant 0 : index
    %c0_49 = arith.constant 0 : index
    %68 = vector.load %arg8[%c0_47, %c0_48, %c0_49] : memref<9x32x64xbf16, #tpu.memory_space<vmem>>, vector<1x32x64xbf16>
    %69 = vector.shape_cast %68 : vector<1x32x64xbf16> to vector<32x64xbf16>
    %cst_50 = arith.constant dense<0.000000e+00> : vector<64x64xf32>
    %70 = tpu.matmul %67, %69, %cst_50 {dimension_numbers = #tpu.dot_dimension_numbers<[1], [0], [0], [1], [0, 0, 1, 1], [], []>} : vector<64x32xbf16>, vector<32x64xbf16>, vector<64x64xf32> -> vector<64x64xf32>
    %71 = arith.addf %64, %70 : vector<64x64xf32>
    %c8 = arith.constant 8 : index
    %c0_51 = arith.constant 0 : index
    %72 = vector.load %arg18[%c8, %c0_51] : memref<96x32xbf16, #tpu.memory_space<vmem>>, vector<64x32xbf16>
    %c1 = arith.constant 1 : index
    %c0_52 = arith.constant 0 : index
    %c0_53 = arith.constant 0 : index
    %73 = vector.load %arg8[%c1, %c0_52, %c0_53] : memref<9x32x64xbf16, #tpu.memory_space<vmem>>, vector<1x32x64xbf16>
    %74 = vector.shape_cast %73 : vector<1x32x64xbf16> to vector<32x64xbf16>
    %cst_54 = arith.constant dense<0.000000e+00> : vector<64x64xf32>
    %75 = tpu.matmul %72, %74, %cst_54 {dimension_numbers = #tpu.dot_dimension_numbers<[1], [0], [0], [1], [0, 0, 1, 1], [], []>} : vector<64x32xbf16>, vector<32x64xbf16>, vector<64x64xf32> -> vector<64x64xf32>
    %76 = arith.addf %71, %75 : vector<64x64xf32>
    %c9 = arith.constant 9 : index
    %c0_55 = arith.constant 0 : index
    %77 = vector.load %arg18[%c9, %c0_55] : memref<96x32xbf16, #tpu.memory_space<vmem>>, vector<64x32xbf16>
    %78 = vector.broadcast %1 : vector<64x1xbf16> to vector<64x32xbf16>
    %79 = arith.mulf %77, %78 : vector<64x32xbf16>
    %c2 = arith.constant 2 : index
    %c0_56 = arith.constant 0 : index
    %c0_57 = arith.constant 0 : index
    %80 = vector.load %arg8[%c2, %c0_56, %c0_57] : memref<9x32x64xbf16, #tpu.memory_space<vmem>>, vector<1x32x64xbf16>
    %81 = vector.shape_cast %80 : vector<1x32x64xbf16> to vector<32x64xbf16>
    %cst_58 = arith.constant dense<0.000000e+00> : vector<64x64xf32>
    %82 = tpu.matmul %79, %81, %cst_58 {dimension_numbers = #tpu.dot_dimension_numbers<[1], [0], [0], [1], [0, 0, 1, 1], [], []>} : vector<64x32xbf16>, vector<32x64xbf16>, vector<64x64xf32> -> vector<64x64xf32>
    %83 = arith.addf %76, %82 : vector<64x64xf32>
    %c15 = arith.constant 15 : index
    %c0_59 = arith.constant 0 : index
    %84 = vector.load %arg18[%c15, %c0_59] : memref<96x32xbf16, #tpu.memory_space<vmem>>, vector<64x32xbf16>
    %85 = vector.broadcast %0 : vector<64x1xbf16> to vector<64x32xbf16>
    %86 = arith.mulf %84, %85 : vector<64x32xbf16>
    %c3 = arith.constant 3 : index
    %c0_60 = arith.constant 0 : index
    %c0_61 = arith.constant 0 : index
    %87 = vector.load %arg8[%c3, %c0_60, %c0_61] : memref<9x32x64xbf16, #tpu.memory_space<vmem>>, vector<1x32x64xbf16>
    %88 = vector.shape_cast %87 : vector<1x32x64xbf16> to vector<32x64xbf16>
    %cst_62 = arith.constant dense<0.000000e+00> : vector<64x64xf32>
    %89 = tpu.matmul %86, %88, %cst_62 {dimension_numbers = #tpu.dot_dimension_numbers<[1], [0], [0], [1], [0, 0, 1, 1], [], []>} : vector<64x32xbf16>, vector<32x64xbf16>, vector<64x64xf32> -> vector<64x64xf32>
    %90 = arith.addf %83, %89 : vector<64x64xf32>
    %c16_63 = arith.constant 16 : index
    %c0_64 = arith.constant 0 : index
    %91 = vector.load %arg18[%c16_63, %c0_64] : memref<96x32xbf16, #tpu.memory_space<vmem>>, vector<64x32xbf16>
    %c4 = arith.constant 4 : index
    %c0_65 = arith.constant 0 : index
    %c0_66 = arith.constant 0 : index
    %92 = vector.load %arg8[%c4, %c0_65, %c0_66] : memref<9x32x64xbf16, #tpu.memory_space<vmem>>, vector<1x32x64xbf16>
    %93 = vector.shape_cast %92 : vector<1x32x64xbf16> to vector<32x64xbf16>
    %cst_67 = arith.constant dense<0.000000e+00> : vector<64x64xf32>
    %94 = tpu.matmul %91, %93, %cst_67 {dimension_numbers = #tpu.dot_dimension_numbers<[1], [0], [0], [1], [0, 0, 1, 1], [], []>} : vector<64x32xbf16>, vector<32x64xbf16>, vector<64x64xf32> -> vector<64x64xf32>
    %95 = arith.addf %90, %94 : vector<64x64xf32>
    %c17 = arith.constant 17 : index
    %c0_68 = arith.constant 0 : index
    %96 = vector.load %arg18[%c17, %c0_68] : memref<96x32xbf16, #tpu.memory_space<vmem>>, vector<64x32xbf16>
    %97 = vector.broadcast %1 : vector<64x1xbf16> to vector<64x32xbf16>
    %98 = arith.mulf %96, %97 : vector<64x32xbf16>
    %c5 = arith.constant 5 : index
    %c0_69 = arith.constant 0 : index
    %c0_70 = arith.constant 0 : index
    %99 = vector.load %arg8[%c5, %c0_69, %c0_70] : memref<9x32x64xbf16, #tpu.memory_space<vmem>>, vector<1x32x64xbf16>
    %100 = vector.shape_cast %99 : vector<1x32x64xbf16> to vector<32x64xbf16>
    %cst_71 = arith.constant dense<0.000000e+00> : vector<64x64xf32>
    %101 = tpu.matmul %98, %100, %cst_71 {dimension_numbers = #tpu.dot_dimension_numbers<[1], [0], [0], [1], [0, 0, 1, 1], [], []>} : vector<64x32xbf16>, vector<32x64xbf16>, vector<64x64xf32> -> vector<64x64xf32>
    %102 = arith.addf %95, %101 : vector<64x64xf32>
    %c23 = arith.constant 23 : index
    %c0_72 = arith.constant 0 : index
    %103 = vector.load %arg18[%c23, %c0_72] : memref<96x32xbf16, #tpu.memory_space<vmem>>, vector<64x32xbf16>
    %104 = vector.broadcast %0 : vector<64x1xbf16> to vector<64x32xbf16>
    %105 = arith.mulf %103, %104 : vector<64x32xbf16>
    %c6 = arith.constant 6 : index
    %c0_73 = arith.constant 0 : index
    %c0_74 = arith.constant 0 : index
    %106 = vector.load %arg8[%c6, %c0_73, %c0_74] : memref<9x32x64xbf16, #tpu.memory_space<vmem>>, vector<1x32x64xbf16>
    %107 = vector.shape_cast %106 : vector<1x32x64xbf16> to vector<32x64xbf16>
    %cst_75 = arith.constant dense<0.000000e+00> : vector<64x64xf32>
    %108 = tpu.matmul %105, %107, %cst_75 {dimension_numbers = #tpu.dot_dimension_numbers<[1], [0], [0], [1], [0, 0, 1, 1], [], []>} : vector<64x32xbf16>, vector<32x64xbf16>, vector<64x64xf32> -> vector<64x64xf32>
    %109 = arith.addf %102, %108 : vector<64x64xf32>
    %c24 = arith.constant 24 : index
    %c0_76 = arith.constant 0 : index
    %110 = vector.load %arg18[%c24, %c0_76] : memref<96x32xbf16, #tpu.memory_space<vmem>>, vector<64x32xbf16>
    %c7_77 = arith.constant 7 : index
    %c0_78 = arith.constant 0 : index
    %c0_79 = arith.constant 0 : index
    %111 = vector.load %arg8[%c7_77, %c0_78, %c0_79] : memref<9x32x64xbf16, #tpu.memory_space<vmem>>, vector<1x32x64xbf16>
    %112 = vector.shape_cast %111 : vector<1x32x64xbf16> to vector<32x64xbf16>
    %cst_80 = arith.constant dense<0.000000e+00> : vector<64x64xf32>
    %113 = tpu.matmul %110, %112, %cst_80 {dimension_numbers = #tpu.dot_dimension_numbers<[1], [0], [0], [1], [0, 0, 1, 1], [], []>} : vector<64x32xbf16>, vector<32x64xbf16>, vector<64x64xf32> -> vector<64x64xf32>
    %114 = arith.addf %109, %113 : vector<64x64xf32>
    %c25 = arith.constant 25 : index
    %c0_81 = arith.constant 0 : index
    %115 = vector.load %arg18[%c25, %c0_81] : memref<96x32xbf16, #tpu.memory_space<vmem>>, vector<64x32xbf16>
    %116 = vector.broadcast %1 : vector<64x1xbf16> to vector<64x32xbf16>
    %117 = arith.mulf %115, %116 : vector<64x32xbf16>
    %c8_82 = arith.constant 8 : index
    %c0_83 = arith.constant 0 : index
    %c0_84 = arith.constant 0 : index
    %118 = vector.load %arg8[%c8_82, %c0_83, %c0_84] : memref<9x32x64xbf16, #tpu.memory_space<vmem>>, vector<1x32x64xbf16>
    %119 = vector.shape_cast %118 : vector<1x32x64xbf16> to vector<32x64xbf16>
    %cst_85 = arith.constant dense<0.000000e+00> : vector<64x64xf32>
    %120 = tpu.matmul %117, %119, %cst_85 {dimension_numbers = #tpu.dot_dimension_numbers<[1], [0], [0], [1], [0, 0, 1, 1], [], []>} : vector<64x32xbf16>, vector<32x64xbf16>, vector<64x64xf32> -> vector<64x64xf32>
    %121 = arith.addf %114, %120 : vector<64x64xf32>
    %c0_86 = arith.constant 0 : index
    %c0_87 = arith.constant 0 : index
    %122 = vector.load %arg9[%c0_86, %c0_87] : memref<1x64xf32, #tpu.memory_space<vmem>>, vector<1x64xf32>
    %c0_88 = arith.constant 0 : index
    %c0_89 = arith.constant 0 : index
    %c0_90 = arith.constant 0 : index
    %123 = vector.load %arg2[%c0_88, %c0_89, %c0_90] : memref<1x1x64xf32, #tpu.memory_space<vmem>>, vector<1x1x64xf32>
    %124 = vector.shape_cast %123 : vector<1x1x64xf32> to vector<1x64xf32>
    %125 = arith.addf %122, %124 : vector<1x64xf32>
    %126 = vector.broadcast %125 : vector<1x64xf32> to vector<64x64xf32>
    %127 = arith.addf %121, %126 : vector<64x64xf32>
    %c0_91 = arith.constant 0 : index
    %c0_92 = arith.constant 0 : index
    %128 = vector.load %arg10[%c0_91, %c0_92] : memref<64x32xf32, #tpu.memory_space<vmem>>, vector<64x32xf32>
    %c0_93 = arith.constant 0 : index
    %c0_94 = arith.constant 0 : index
    %129 = vector.load %arg11[%c0_93, %c0_94] : memref<1x64xf32, #tpu.memory_space<vmem>>, vector<1x64xf32>
    %c0_95 = arith.constant 0 : index
    %c0_96 = arith.constant 0 : index
    %130 = vector.load %arg12[%c0_95, %c0_96] : memref<1x64xf32, #tpu.memory_space<vmem>>, vector<1x64xf32>
    %cst_97 = arith.constant dense<0.000000e+00> : vector<64xf32>
    %131 = vector.multi_reduction <add>, %127, %cst_97 [0] : vector<64x64xf32> to vector<64xf32>
    %132 = vector.shape_cast %131 : vector<64xf32> to vector<1x64xf32>
    %133 = arith.mulf %127, %127 : vector<64x64xf32>
    %cst_98 = arith.constant dense<0.000000e+00> : vector<64xf32>
    %134 = vector.multi_reduction <add>, %133, %cst_98 [0] : vector<64x64xf32> to vector<64xf32>
    %135 = vector.shape_cast %134 : vector<64xf32> to vector<1x64xf32>
    %cst_99 = arith.constant dense<0.000000e+00> : vector<1x32xf32>
    %136 = tpu.matmul %132, %128, %cst_99 {dimension_numbers = #tpu.dot_dimension_numbers<[1], [0], [0], [1], [0, 0, 1, 1], [], []>} : vector<1x64xf32>, vector<64x32xf32>, vector<1x32xf32> -> vector<1x32xf32>
    %cst_100 = arith.constant dense<0.000000e+00> : vector<1x32xf32>
    %137 = tpu.matmul %135, %128, %cst_100 {dimension_numbers = #tpu.dot_dimension_numbers<[1], [0], [0], [1], [0, 0, 1, 1], [], []>} : vector<1x64xf32>, vector<64x32xf32>, vector<1x32xf32> -> vector<1x32xf32>
    %cst_101 = arith.constant 1.280000e+02 : f32
    %138 = vector.broadcast %cst_101 : f32 to vector<1x32xf32>
    %139 = arith.divf %136, %138 : vector<1x32xf32>
    %cst_102 = arith.constant 1.280000e+02 : f32
    %140 = vector.broadcast %cst_102 : f32 to vector<1x32xf32>
    %141 = arith.divf %137, %140 : vector<1x32xf32>
    %142 = arith.mulf %139, %139 : vector<1x32xf32>
    %143 = arith.subf %141, %142 : vector<1x32xf32>
    %cst_103 = arith.constant 0.000000e+00 : f32
    %144 = vector.broadcast %cst_103 : f32 to vector<1x32xf32>
    %145 = arith.maximumf %143, %144 : vector<1x32xf32>
    %cst_104 = arith.constant 9.99999974E-6 : f32
    %146 = vector.broadcast %cst_104 : f32 to vector<1x32xf32>
    %147 = arith.addf %145, %146 : vector<1x32xf32>
    %148 = math.rsqrt %147 : vector<1x32xf32>
    %cst_105 = arith.constant dense<0.000000e+00> : vector<1x64xf32>
    %149 = tpu.matmul %139, %128, %cst_105 {dimension_numbers = #tpu.dot_dimension_numbers<[1], [1], [0], [0], [0, 0, 1, 0], [], []>} : vector<1x32xf32>, vector<64x32xf32>, vector<1x64xf32> -> vector<1x64xf32>
    %cst_106 = arith.constant dense<0.000000e+00> : vector<1x64xf32>
    %150 = tpu.matmul %148, %128, %cst_106 {dimension_numbers = #tpu.dot_dimension_numbers<[1], [1], [0], [0], [0, 0, 1, 0], [], []>} : vector<1x32xf32>, vector<64x32xf32>, vector<1x64xf32> -> vector<1x64xf32>
    %151 = arith.mulf %150, %129 : vector<1x64xf32>
    %152 = arith.mulf %149, %151 : vector<1x64xf32>
    %153 = arith.subf %130, %152 : vector<1x64xf32>
    %154 = vector.broadcast %151 : vector<1x64xf32> to vector<64x64xf32>
    %155 = arith.mulf %127, %154 : vector<64x64xf32>
    %156 = vector.broadcast %153 : vector<1x64xf32> to vector<64x64xf32>
    %157 = arith.addf %155, %156 : vector<64x64xf32>
    %cst_107 = arith.constant 0.000000e+00 : f32
    %158 = vector.broadcast %cst_107 : f32 to vector<64x64xf32>
    %159 = arith.subf %158, %157 : vector<64x64xf32>
    %160 = math.exp %159 : vector<64x64xf32>
    %cst_108 = arith.constant 1.000000e+00 : f32
    %161 = vector.broadcast %cst_108 : f32 to vector<64x64xf32>
    %162 = arith.addf %161, %160 : vector<64x64xf32>
    %163 = tpu.reciprocal %162 {approx = true} : vector<64x64xf32> -> vector<64x64xf32>
    %164 = arith.mulf %157, %163 : vector<64x64xf32>
    %165 = arith.truncf %164 : vector<64x64xf32> to vector<64x64xbf16>
    %c16_109 = arith.constant 16 : index
    %c0_110 = arith.constant 0 : index
    %166 = vector.load %arg19[%c16_109, %c0_110] : memref<96x64xbf16, #tpu.memory_space<vmem>>, vector<64x64xbf16>
    tpu.vector_store %arg19[%c16_109, %c0_110], %165 {strides = array<i32>} : memref<96x64xbf16, #tpu.memory_space<vmem>>, vector<64x64xbf16>,
    %c7_111 = arith.constant 7 : index
    %c0_112 = arith.constant 0 : index
    %167 = vector.load %arg19[%c7_111, %c0_112] : memref<96x64xbf16, #tpu.memory_space<vmem>>, vector<64x64xbf16>
    %168 = vector.broadcast %0 : vector<64x1xbf16> to vector<64x64xbf16>
    %169 = arith.mulf %167, %168 : vector<64x64xbf16>
    %c0_113 = arith.constant 0 : index
    %c0_114 = arith.constant 0 : index
    %c0_115 = arith.constant 0 : index
    %170 = vector.load %arg17[%c0_113, %c0_114, %c0_115] : memref<1x64x64xf32, #tpu.memory_space<vmem>>, vector<1x64x64xf32>
    %171 = vector.shape_cast %170 : vector<1x64x64xf32> to vector<64x64xf32>
    %c0_116 = arith.constant 0 : index
    %c0_117 = arith.constant 0 : index
    %c0_118 = arith.constant 0 : index
    %172 = vector.load %arg13[%c0_116, %c0_117, %c0_118] : memref<9x64x64xbf16, #tpu.memory_space<vmem>>, vector<1x64x64xbf16>
    %173 = vector.shape_cast %172 : vector<1x64x64xbf16> to vector<64x64xbf16>
    %cst_119 = arith.constant dense<0.000000e+00> : vector<64x64xf32>
    %174 = tpu.matmul %169, %173, %cst_119 {dimension_numbers = #tpu.dot_dimension_numbers<[1], [0], [0], [1], [0, 0, 1, 1], [], []>} : vector<64x64xbf16>, vector<64x64xbf16>, vector<64x64xf32> -> vector<64x64xf32>
    %175 = arith.addf %171, %174 : vector<64x64xf32>
    %c0_120 = arith.constant 0 : index
    %c0_121 = arith.constant 0 : index
    %c0_122 = arith.constant 0 : index
    %176 = vector.load %arg17[%c0_120, %c0_121, %c0_122] : memref<1x64x64xf32, #tpu.memory_space<vmem>>, vector<1x64x64xf32>
    %177 = vector.shape_cast %176 : vector<1x64x64xf32> to vector<64x64xf32>
    %178 = vector.shape_cast %175 : vector<64x64xf32> to vector<1x64x64xf32>
    tpu.vector_store %arg17[%c0_120, %c0_121, %c0_122], %178 {strides = array<i32>} : memref<1x64x64xf32, #tpu.memory_space<vmem>>, vector<1x64x64xf32>,
    %c8_123 = arith.constant 8 : index
    %c0_124 = arith.constant 0 : index
    %179 = vector.load %arg19[%c8_123, %c0_124] : memref<96x64xbf16, #tpu.memory_space<vmem>>, vector<64x64xbf16>
    %c0_125 = arith.constant 0 : index
    %c0_126 = arith.constant 0 : index
    %c0_127 = arith.constant 0 : index
    %180 = vector.load %arg17[%c0_125, %c0_126, %c0_127] : memref<1x64x64xf32, #tpu.memory_space<vmem>>, vector<1x64x64xf32>
    %181 = vector.shape_cast %180 : vector<1x64x64xf32> to vector<64x64xf32>
    %c1_128 = arith.constant 1 : index
    %c0_129 = arith.constant 0 : index
    %c0_130 = arith.constant 0 : index
    %182 = vector.load %arg13[%c1_128, %c0_129, %c0_130] : memref<9x64x64xbf16, #tpu.memory_space<vmem>>, vector<1x64x64xbf16>
    %183 = vector.shape_cast %182 : vector<1x64x64xbf16> to vector<64x64xbf16>
    %cst_131 = arith.constant dense<0.000000e+00> : vector<64x64xf32>
    %184 = tpu.matmul %179, %183, %cst_131 {dimension_numbers = #tpu.dot_dimension_numbers<[1], [0], [0], [1], [0, 0, 1, 1], [], []>} : vector<64x64xbf16>, vector<64x64xbf16>, vector<64x64xf32> -> vector<64x64xf32>
    %185 = arith.addf %181, %184 : vector<64x64xf32>
    %c0_132 = arith.constant 0 : index
    %c0_133 = arith.constant 0 : index
    %c0_134 = arith.constant 0 : index
    %186 = vector.load %arg17[%c0_132, %c0_133, %c0_134] : memref<1x64x64xf32, #tpu.memory_space<vmem>>, vector<1x64x64xf32>
    %187 = vector.shape_cast %186 : vector<1x64x64xf32> to vector<64x64xf32>
    %188 = vector.shape_cast %185 : vector<64x64xf32> to vector<1x64x64xf32>
    tpu.vector_store %arg17[%c0_132, %c0_133, %c0_134], %188 {strides = array<i32>} : memref<1x64x64xf32, #tpu.memory_space<vmem>>, vector<1x64x64xf32>,
    %c9_135 = arith.constant 9 : index
    %c0_136 = arith.constant 0 : index
    %189 = vector.load %arg19[%c9_135, %c0_136] : memref<96x64xbf16, #tpu.memory_space<vmem>>, vector<64x64xbf16>
    %190 = vector.broadcast %1 : vector<64x1xbf16> to vector<64x64xbf16>
    %191 = arith.mulf %189, %190 : vector<64x64xbf16>
    %c0_137 = arith.constant 0 : index
    %c0_138 = arith.constant 0 : index
    %c0_139 = arith.constant 0 : index
    %192 = vector.load %arg17[%c0_137, %c0_138, %c0_139] : memref<1x64x64xf32, #tpu.memory_space<vmem>>, vector<1x64x64xf32>
    %193 = vector.shape_cast %192 : vector<1x64x64xf32> to vector<64x64xf32>
    %c2_140 = arith.constant 2 : index
    %c0_141 = arith.constant 0 : index
    %c0_142 = arith.constant 0 : index
    %194 = vector.load %arg13[%c2_140, %c0_141, %c0_142] : memref<9x64x64xbf16, #tpu.memory_space<vmem>>, vector<1x64x64xbf16>
    %195 = vector.shape_cast %194 : vector<1x64x64xbf16> to vector<64x64xbf16>
    %cst_143 = arith.constant dense<0.000000e+00> : vector<64x64xf32>
    %196 = tpu.matmul %191, %195, %cst_143 {dimension_numbers = #tpu.dot_dimension_numbers<[1], [0], [0], [1], [0, 0, 1, 1], [], []>} : vector<64x64xbf16>, vector<64x64xbf16>, vector<64x64xf32> -> vector<64x64xf32>
    %197 = arith.addf %193, %196 : vector<64x64xf32>
    %c0_144 = arith.constant 0 : index
    %c0_145 = arith.constant 0 : index
    %c0_146 = arith.constant 0 : index
    %198 = vector.load %arg17[%c0_144, %c0_145, %c0_146] : memref<1x64x64xf32, #tpu.memory_space<vmem>>, vector<1x64x64xf32>
    %199 = vector.shape_cast %198 : vector<1x64x64xf32> to vector<64x64xf32>
    %200 = vector.shape_cast %197 : vector<64x64xf32> to vector<1x64x64xf32>
    tpu.vector_store %arg17[%c0_144, %c0_145, %c0_146], %200 {strides = array<i32>} : memref<1x64x64xf32, #tpu.memory_space<vmem>>, vector<1x64x64xf32>,
    %c15_147 = arith.constant 15 : index
    %c0_148 = arith.constant 0 : index
    %201 = vector.load %arg19[%c15_147, %c0_148] : memref<96x64xbf16, #tpu.memory_space<vmem>>, vector<64x64xbf16>
    %202 = vector.broadcast %0 : vector<64x1xbf16> to vector<64x64xbf16>
    %203 = arith.mulf %201, %202 : vector<64x64xbf16>
    %c0_149 = arith.constant 0 : index
    %c0_150 = arith.constant 0 : index
    %c0_151 = arith.constant 0 : index
    %204 = vector.load %arg17[%c0_149, %c0_150, %c0_151] : memref<1x64x64xf32, #tpu.memory_space<vmem>>, vector<1x64x64xf32>
    %205 = vector.shape_cast %204 : vector<1x64x64xf32> to vector<64x64xf32>
    %c3_152 = arith.constant 3 : index
    %c0_153 = arith.constant 0 : index
    %c0_154 = arith.constant 0 : index
    %206 = vector.load %arg13[%c3_152, %c0_153, %c0_154] : memref<9x64x64xbf16, #tpu.memory_space<vmem>>, vector<1x64x64xbf16>
    %207 = vector.shape_cast %206 : vector<1x64x64xbf16> to vector<64x64xbf16>
    %cst_155 = arith.constant dense<0.000000e+00> : vector<64x64xf32>
    %208 = tpu.matmul %203, %207, %cst_155 {dimension_numbers = #tpu.dot_dimension_numbers<[1], [0], [0], [1], [0, 0, 1, 1], [], []>} : vector<64x64xbf16>, vector<64x64xbf16>, vector<64x64xf32> -> vector<64x64xf32>
    %209 = arith.addf %205, %208 : vector<64x64xf32>
    %c0_156 = arith.constant 0 : index
    %c0_157 = arith.constant 0 : index
    %c0_158 = arith.constant 0 : index
    %210 = vector.load %arg17[%c0_156, %c0_157, %c0_158] : memref<1x64x64xf32, #tpu.memory_space<vmem>>, vector<1x64x64xf32>
    %211 = vector.shape_cast %210 : vector<1x64x64xf32> to vector<64x64xf32>
    %212 = vector.shape_cast %209 : vector<64x64xf32> to vector<1x64x64xf32>
    tpu.vector_store %arg17[%c0_156, %c0_157, %c0_158], %212 {strides = array<i32>} : memref<1x64x64xf32, #tpu.memory_space<vmem>>, vector<1x64x64xf32>,
    %c16_159 = arith.constant 16 : index
    %c0_160 = arith.constant 0 : index
    %213 = vector.load %arg19[%c16_159, %c0_160] : memref<96x64xbf16, #tpu.memory_space<vmem>>, vector<64x64xbf16>
    %c0_161 = arith.constant 0 : index
    %c0_162 = arith.constant 0 : index
    %c0_163 = arith.constant 0 : index
    %214 = vector.load %arg17[%c0_161, %c0_162, %c0_163] : memref<1x64x64xf32, #tpu.memory_space<vmem>>, vector<1x64x64xf32>
    %215 = vector.shape_cast %214 : vector<1x64x64xf32> to vector<64x64xf32>
    %c4_164 = arith.constant 4 : index
    %c0_165 = arith.constant 0 : index
    %c0_166 = arith.constant 0 : index
    %216 = vector.load %arg13[%c4_164, %c0_165, %c0_166] : memref<9x64x64xbf16, #tpu.memory_space<vmem>>, vector<1x64x64xbf16>
    %217 = vector.shape_cast %216 : vector<1x64x64xbf16> to vector<64x64xbf16>
    %cst_167 = arith.constant dense<0.000000e+00> : vector<64x64xf32>
    %218 = tpu.matmul %213, %217, %cst_167 {dimension_numbers = #tpu.dot_dimension_numbers<[1], [0], [0], [1], [0, 0, 1, 1], [], []>} : vector<64x64xbf16>, vector<64x64xbf16>, vector<64x64xf32> -> vector<64x64xf32>
    %219 = arith.addf %215, %218 : vector<64x64xf32>
    %c0_168 = arith.constant 0 : index
    %c0_169 = arith.constant 0 : index
    %c0_170 = arith.constant 0 : index
    %220 = vector.load %arg17[%c0_168, %c0_169, %c0_170] : memref<1x64x64xf32, #tpu.memory_space<vmem>>, vector<1x64x64xf32>
    %221 = vector.shape_cast %220 : vector<1x64x64xf32> to vector<64x64xf32>
    %222 = vector.shape_cast %219 : vector<64x64xf32> to vector<1x64x64xf32>
    tpu.vector_store %arg17[%c0_168, %c0_169, %c0_170], %222 {strides = array<i32>} : memref<1x64x64xf32, #tpu.memory_space<vmem>>, vector<1x64x64xf32>,
    %c17_171 = arith.constant 17 : index
    %c0_172 = arith.constant 0 : index
    %223 = vector.load %arg19[%c17_171, %c0_172] : memref<96x64xbf16, #tpu.memory_space<vmem>>, vector<64x64xbf16>
    %224 = vector.broadcast %1 : vector<64x1xbf16> to vector<64x64xbf16>
    %225 = arith.mulf %223, %224 : vector<64x64xbf16>
    %c0_173 = arith.constant 0 : index
    %c0_174 = arith.constant 0 : index
    %c0_175 = arith.constant 0 : index
    %226 = vector.load %arg17[%c0_173, %c0_174, %c0_175] : memref<1x64x64xf32, #tpu.memory_space<vmem>>, vector<1x64x64xf32>
    %227 = vector.shape_cast %226 : vector<1x64x64xf32> to vector<64x64xf32>
    %c5_176 = arith.constant 5 : index
    %c0_177 = arith.constant 0 : index
    %c0_178 = arith.constant 0 : index
    %228 = vector.load %arg13[%c5_176, %c0_177, %c0_178] : memref<9x64x64xbf16, #tpu.memory_space<vmem>>, vector<1x64x64xbf16>
    %229 = vector.shape_cast %228 : vector<1x64x64xbf16> to vector<64x64xbf16>
    %cst_179 = arith.constant dense<0.000000e+00> : vector<64x64xf32>
    %230 = tpu.matmul %225, %229, %cst_179 {dimension_numbers = #tpu.dot_dimension_numbers<[1], [0], [0], [1], [0, 0, 1, 1], [], []>} : vector<64x64xbf16>, vector<64x64xbf16>, vector<64x64xf32> -> vector<64x64xf32>
    %231 = arith.addf %227, %230 : vector<64x64xf32>
    %c0_180 = arith.constant 0 : index
    %c0_181 = arith.constant 0 : index
    %c0_182 = arith.constant 0 : index
    %232 = vector.load %arg17[%c0_180, %c0_181, %c0_182] : memref<1x64x64xf32, #tpu.memory_space<vmem>>, vector<1x64x64xf32>
    %233 = vector.shape_cast %232 : vector<1x64x64xf32> to vector<64x64xf32>
    %234 = vector.shape_cast %231 : vector<64x64xf32> to vector<1x64x64xf32>
    tpu.vector_store %arg17[%c0_180, %c0_181, %c0_182], %234 {strides = array<i32>} : memref<1x64x64xf32, #tpu.memory_space<vmem>>, vector<1x64x64xf32>,
    %c23_183 = arith.constant 23 : index
    %c0_184 = arith.constant 0 : index
    %235 = vector.load %arg19[%c23_183, %c0_184] : memref<96x64xbf16, #tpu.memory_space<vmem>>, vector<64x64xbf16>
    %236 = vector.broadcast %0 : vector<64x1xbf16> to vector<64x64xbf16>
    %237 = arith.mulf %235, %236 : vector<64x64xbf16>
    %c0_185 = arith.constant 0 : index
    %c0_186 = arith.constant 0 : index
    %c0_187 = arith.constant 0 : index
    %238 = vector.load %arg17[%c0_185, %c0_186, %c0_187] : memref<1x64x64xf32, #tpu.memory_space<vmem>>, vector<1x64x64xf32>
    %239 = vector.shape_cast %238 : vector<1x64x64xf32> to vector<64x64xf32>
    %c6_188 = arith.constant 6 : index
    %c0_189 = arith.constant 0 : index
    %c0_190 = arith.constant 0 : index
    %240 = vector.load %arg13[%c6_188, %c0_189, %c0_190] : memref<9x64x64xbf16, #tpu.memory_space<vmem>>, vector<1x64x64xbf16>
    %241 = vector.shape_cast %240 : vector<1x64x64xbf16> to vector<64x64xbf16>
    %cst_191 = arith.constant dense<0.000000e+00> : vector<64x64xf32>
    %242 = tpu.matmul %237, %241, %cst_191 {dimension_numbers = #tpu.dot_dimension_numbers<[1], [0], [0], [1], [0, 0, 1, 1], [], []>} : vector<64x64xbf16>, vector<64x64xbf16>, vector<64x64xf32> -> vector<64x64xf32>
    %243 = arith.addf %239, %242 : vector<64x64xf32>
    %c0_192 = arith.constant 0 : index
    %c0_193 = arith.constant 0 : index
    %c0_194 = arith.constant 0 : index
    %244 = vector.load %arg17[%c0_192, %c0_193, %c0_194] : memref<1x64x64xf32, #tpu.memory_space<vmem>>, vector<1x64x64xf32>
    %245 = vector.shape_cast %244 : vector<1x64x64xf32> to vector<64x64xf32>
    %246 = vector.shape_cast %243 : vector<64x64xf32> to vector<1x64x64xf32>
    tpu.vector_store %arg17[%c0_192, %c0_193, %c0_194], %246 {strides = array<i32>} : memref<1x64x64xf32, #tpu.memory_space<vmem>>, vector<1x64x64xf32>,
    %c24_195 = arith.constant 24 : index
    %c0_196 = arith.constant 0 : index
    %247 = vector.load %arg19[%c24_195, %c0_196] : memref<96x64xbf16, #tpu.memory_space<vmem>>, vector<64x64xbf16>
    %c0_197 = arith.constant 0 : index
    %c0_198 = arith.constant 0 : index
    %c0_199 = arith.constant 0 : index
    %248 = vector.load %arg17[%c0_197, %c0_198, %c0_199] : memref<1x64x64xf32, #tpu.memory_space<vmem>>, vector<1x64x64xf32>
    %249 = vector.shape_cast %248 : vector<1x64x64xf32> to vector<64x64xf32>
    %c7_200 = arith.constant 7 : index
    %c0_201 = arith.constant 0 : index
    %c0_202 = arith.constant 0 : index
    %250 = vector.load %arg13[%c7_200, %c0_201, %c0_202] : memref<9x64x64xbf16, #tpu.memory_space<vmem>>, vector<1x64x64xbf16>
    %251 = vector.shape_cast %250 : vector<1x64x64xbf16> to vector<64x64xbf16>
    %cst_203 = arith.constant dense<0.000000e+00> : vector<64x64xf32>
    %252 = tpu.matmul %247, %251, %cst_203 {dimension_numbers = #tpu.dot_dimension_numbers<[1], [0], [0], [1], [0, 0, 1, 1], [], []>} : vector<64x64xbf16>, vector<64x64xbf16>, vector<64x64xf32> -> vector<64x64xf32>
    %253 = arith.addf %249, %252 : vector<64x64xf32>
    %c0_204 = arith.constant 0 : index
    %c0_205 = arith.constant 0 : index
    %c0_206 = arith.constant 0 : index
    %254 = vector.load %arg17[%c0_204, %c0_205, %c0_206] : memref<1x64x64xf32, #tpu.memory_space<vmem>>, vector<1x64x64xf32>
    %255 = vector.shape_cast %254 : vector<1x64x64xf32> to vector<64x64xf32>
    %256 = vector.shape_cast %253 : vector<64x64xf32> to vector<1x64x64xf32>
    tpu.vector_store %arg17[%c0_204, %c0_205, %c0_206], %256 {strides = array<i32>} : memref<1x64x64xf32, #tpu.memory_space<vmem>>, vector<1x64x64xf32>,
    %c25_207 = arith.constant 25 : index
    %c0_208 = arith.constant 0 : index
    %257 = vector.load %arg19[%c25_207, %c0_208] : memref<96x64xbf16, #tpu.memory_space<vmem>>, vector<64x64xbf16>
    %258 = vector.broadcast %1 : vector<64x1xbf16> to vector<64x64xbf16>
    %259 = arith.mulf %257, %258 : vector<64x64xbf16>
    %c0_209 = arith.constant 0 : index
    %c0_210 = arith.constant 0 : index
    %c0_211 = arith.constant 0 : index
    %260 = vector.load %arg17[%c0_209, %c0_210, %c0_211] : memref<1x64x64xf32, #tpu.memory_space<vmem>>, vector<1x64x64xf32>
    %261 = vector.shape_cast %260 : vector<1x64x64xf32> to vector<64x64xf32>
    %c8_212 = arith.constant 8 : index
    %c0_213 = arith.constant 0 : index
    %c0_214 = arith.constant 0 : index
    %262 = vector.load %arg13[%c8_212, %c0_213, %c0_214] : memref<9x64x64xbf16, #tpu.memory_space<vmem>>, vector<1x64x64xbf16>
    %263 = vector.shape_cast %262 : vector<1x64x64xbf16> to vector<64x64xbf16>
    %cst_215 = arith.constant dense<0.000000e+00> : vector<64x64xf32>
    %264 = tpu.matmul %259, %263, %cst_215 {dimension_numbers = #tpu.dot_dimension_numbers<[1], [0], [0], [1], [0, 0, 1, 1], [], []>} : vector<64x64xbf16>, vector<64x64xbf16>, vector<64x64xf32> -> vector<64x64xf32>
    %265 = arith.addf %261, %264 : vector<64x64xf32>
    %c0_216 = arith.constant 0 : index
    %c0_217 = arith.constant 0 : index
    %c0_218 = arith.constant 0 : index
    %266 = vector.load %arg17[%c0_216, %c0_217, %c0_218] : memref<1x64x64xf32, #tpu.memory_space<vmem>>, vector<1x64x64xf32>
    %267 = vector.shape_cast %266 : vector<1x64x64xf32> to vector<64x64xf32>
    %268 = vector.shape_cast %265 : vector<64x64xf32> to vector<1x64x64xf32>
    tpu.vector_store %arg17[%c0_216, %c0_217, %c0_218], %268 {strides = array<i32>} : memref<1x64x64xf32, #tpu.memory_space<vmem>>, vector<1x64x64xf32>,
    return
  }
  func.func @transform_0(%arg0: i32) -> (i32, i32, i32) {
    %c0_i32 = arith.constant 0 : i32
    %c0_i32_0 = arith.constant 0 : i32
    %c0_i32_1 = arith.constant 0 : i32
    return %arg0, %c0_i32, %c0_i32_0 : i32, i32, i32
  }
  func.func @transform_1(%arg0: i32) -> (i32, i32, i32) {
    %c0_i32 = arith.constant 0 : i32
    %c0_i32_0 = arith.constant 0 : i32
    %c0_i32_1 = arith.constant 0 : i32
    return %arg0, %c0_i32, %c0_i32_0 : i32, i32, i32
  }
  func.func @transform_2(%arg0: i32) -> (i32, i32) {
    %c0_i32 = arith.constant 0 : i32
    %c0_i32_0 = arith.constant 0 : i32
    %c0_i32_1 = arith.constant 0 : i32
    return %c0_i32, %c0_i32_0 : i32, i32
  }
  func.func @transform_3(%arg0: i32) -> (i32, i32) {
    %c0_i32 = arith.constant 0 : i32
    %c0_i32_0 = arith.constant 0 : i32
    %c0_i32_1 = arith.constant 0 : i32
    return %c0_i32, %c0_i32_0 : i32, i32
  }
  func.func @transform_4(%arg0: i32) -> (i32, i32) {
    %c0_i32 = arith.constant 0 : i32
    %c0_i32_0 = arith.constant 0 : i32
    %c0_i32_1 = arith.constant 0 : i32
    return %c0_i32, %c0_i32_0 : i32, i32
  }
  func.func @transform_5(%arg0: i32) -> (i32, i32) {
    %c0_i32 = arith.constant 0 : i32
    %c0_i32_0 = arith.constant 0 : i32
    %c0_i32_1 = arith.constant 0 : i32
    return %c0_i32, %c0_i32_0 : i32, i32
  }
  func.func @transform_6(%arg0: i32) -> (i32, i32) {
    %c0_i32 = arith.constant 0 : i32
    %c0_i32_0 = arith.constant 0 : i32
    %c0_i32_1 = arith.constant 0 : i32
    return %c0_i32, %c0_i32_0 : i32, i32
  }
  func.func @transform_7(%arg0: i32) -> (i32, i32, i32) {
    %c0_i32 = arith.constant 0 : i32
    %c0_i32_0 = arith.constant 0 : i32
    %c0_i32_1 = arith.constant 0 : i32
    %c0_i32_2 = arith.constant 0 : i32
    return %c0_i32, %c0_i32_0, %c0_i32_1 : i32, i32, i32
  }
  func.func @transform_8(%arg0: i32) -> (i32, i32) {
    %c0_i32 = arith.constant 0 : i32
    %c0_i32_0 = arith.constant 0 : i32
    %c0_i32_1 = arith.constant 0 : i32
    return %c0_i32, %c0_i32_0 : i32, i32
  }
  func.func @transform_9(%arg0: i32) -> (i32, i32) {
    %c0_i32 = arith.constant 0 : i32
    %c0_i32_0 = arith.constant 0 : i32
    %c0_i32_1 = arith.constant 0 : i32
    return %c0_i32, %c0_i32_0 : i32, i32
  }
  func.func @transform_10(%arg0: i32) -> (i32, i32) {
    %c0_i32 = arith.constant 0 : i32
    %c0_i32_0 = arith.constant 0 : i32
    %c0_i32_1 = arith.constant 0 : i32
    return %c0_i32, %c0_i32_0 : i32, i32
  }
  func.func @transform_11(%arg0: i32) -> (i32, i32) {
    %c0_i32 = arith.constant 0 : i32
    %c0_i32_0 = arith.constant 0 : i32
    %c0_i32_1 = arith.constant 0 : i32
    return %c0_i32, %c0_i32_0 : i32, i32
  }
  func.func @transform_12(%arg0: i32) -> (i32, i32, i32) {
    %c0_i32 = arith.constant 0 : i32
    %c0_i32_0 = arith.constant 0 : i32
    %c0_i32_1 = arith.constant 0 : i32
    %c0_i32_2 = arith.constant 0 : i32
    return %c0_i32, %c0_i32_0, %c0_i32_1 : i32, i32, i32
  }
  func.func @transform_13(%arg0: i32) -> (i32, i32) {
    %c0_i32 = arith.constant 0 : i32
    %c0_i32_0 = arith.constant 0 : i32
    %c0_i32_1 = arith.constant 0 : i32
    return %c0_i32, %c0_i32_0 : i32, i32
  }
  func.func @transform_14(%arg0: i32) -> (i32, i32) {
    %c0_i32 = arith.constant 0 : i32
    %c0_i32_0 = arith.constant 0 : i32
    %c0_i32_1 = arith.constant 0 : i32
    return %c0_i32, %c0_i32_0 : i32, i32
  }
  func.func @transform_15(%arg0: i32) -> (i32, i32) {
    %c0_i32 = arith.constant 0 : i32
    %c0_i32_0 = arith.constant 0 : i32
    %c0_i32_1 = arith.constant 0 : i32
    return %c0_i32, %c0_i32_0 : i32, i32
  }
  func.func @transform_16(%arg0: i32) -> (i32, i32, i32) {
    %c0_i32 = arith.constant 0 : i32
    %c0_i32_0 = arith.constant 0 : i32
    %c0_i32_1 = arith.constant 0 : i32
    return %arg0, %c0_i32, %c0_i32_0 : i32, i32, i32
  }
}

</mosaic_0001>

<llo_original>
// kernel: tpu_custom_call.1
$region0: #{tpu_custom_call.1}
  #allocation0 [shape = 'u32[]', space=smem, size = 0x4, offset = 0x4, fixed_abs, tag = 'smem constant byte address 0x4 - core index']
  #allocation1 [shape = 'u32[72,128]{1,0:T(1,128)}', space=vmem, size = 0x9000, scoped, tag = 'internal scratch']
  #allocation2 [shape = 'bf16[96,32]{1,0:T(8,128)(2,1)}', space=vmem, size = 0x6000, scoped, tag = 'scratch operand']
  #allocation3 [shape = 'bf16[96,64]{1,0:T(8,128)(2,1)}', space=vmem, size = 0x6000, scoped, tag = 'scratch operand']
  %s0 = inlined_call_operand.vmem [shape: bf16[2,64,32], index: 0, kind: input, shape index: {}]
  %s1 = inlined_call_operand.vmem [shape: f32[2,1,64], index: 1, kind: input, shape index: {}]
  %s2 = inlined_call_operand.vmem [shape: bf16[64,1], index: 2, kind: input, shape index: {}]
  %s3 = inlined_call_operand.vmem [shape: bf16[64,1], index: 3, kind: input, shape index: {}]
  %s4 = inlined_call_operand.vmem [shape: f32[32,32], index: 4, kind: input, shape index: {}]
  %s5 = inlined_call_operand.vmem [shape: f32[1,32], index: 5, kind: input, shape index: {}]
  %s6 = inlined_call_operand.vmem [shape: f32[1,32], index: 6, kind: input, shape index: {}]
  %s7 = inlined_call_operand.vmem [shape: bf16[9,32,64], index: 7, kind: input, shape index: {}]
  %s8 = inlined_call_operand.vmem [shape: f32[1,64], index: 8, kind: input, shape index: {}]
  %s9 = inlined_call_operand.vmem [shape: f32[64,32], index: 9, kind: input, shape index: {}]
  %s10 = inlined_call_operand.vmem [shape: f32[1,64], index: 10, kind: input, shape index: {}]
  %s11 = inlined_call_operand.vmem [shape: f32[1,64], index: 11, kind: input, shape index: {}]
  %s12 = inlined_call_operand.hbm [shape: bf16[9,64,64], index: 12, kind: input, shape index: {}]
  %s13 = inlined_call_operand.vmem [shape: f32[1,64], index: 13, kind: input, shape index: {}]
  %s14 = inlined_call_operand.vmem [shape: bf16[32,64], index: 14, kind: input, shape index: {}]
  %s15 = inlined_call_operand.vmem [shape: f32[1,64], index: 15, kind: input, shape index: {}]
  %s16 = inlined_call_operand.hbm [shape: f32[2,64,64], index: 16, kind: output, shape index: {}]
  %s17 = sld [smem:[#allocation0]]
  $region101: #{tpu_custom_call.1} parent=0
    _
  %s19 = ssub.s32 1, %s17
  %s20 = scalar_select 0, %s19, %s17
  $region1: #{tpu_custom_call.1} parent=0
    #allocation4 [shape = 'u8[147456]{0}', space=vmem, size = 0x24000, scoped, tag = 'input window, operand 12, single buffered']
    #allocation5 [shape = 's32[2]{0}', space=sflag, size = 0x8, scoped, tag = 'scoped memory for tpu_custom_call.1']
    #allocation6 [shape = 's32[2]{0}', space=sflag, size = 0x8, scoped, tag = 'scoped memory for tpu_custom_call.1']
    #allocation7 [shape = 'u8[65536]{0}', space=vmem, size = 0x10000, scoped, tag = 'output window, operand 0']
    %21 = vsyncpa [#allocation5], 0
    %22 = vsyncpa [#allocation6], 0
    %s23 = scalar_lea.sflag [#allocation6], 1
    %24 = vsyncpa %s23, 0
    loop: start=0, step=1, limit=4
    $region2: #{tpu_custom_call.1} parent=1 // loop_pre_header
      _
    $region3: #{tpu_custom_call.1} parent=1 // loop_header
      %s26 = sphi 0, %s30
      %p27 = scmp.ge.s32.totalorder %s26, 4
      %s36 = sphi 0, %s38
      %s39 = sphi 0, %s36
      %s40 = sphi 0, %s39
      %s56 = sphi 0, %s40
      %s62 = sphi 0, %s64
      %s65 = sphi 0, %s62
      %s66 = sphi 0, %s65
      %s82 = sphi 0, %s66
      %s86 = sphi 0, %s86
      %s88 = sphi 0, %s86
      %s89 = sphi 0, %s88
      %s103 = sphi 0, %s89
      %s107 = sphi 0, %s107
      %s109 = sphi 0, %s107
      %s110 = sphi 0, %s109
      %s124 = sphi 0, %s110
      %s128 = sphi 0, %s128
      %s130 = sphi 0, %s128
      %s131 = sphi 0, %s130
      %s145 = sphi 0, %s131
      %s149 = sphi 0, %s149
      %s151 = sphi 0, %s149
      %s152 = sphi 0, %s151
      %s166 = sphi 0, %s152
      %s170 = sphi 0, %s170
      %s172 = sphi 0, %s170
      %s173 = sphi 0, %s172
      %s187 = sphi 0, %s173
      %s191 = sphi 0, %s191
      %s193 = sphi 0, %s191
      %s194 = sphi 0, %s193
      %s208 = sphi 0, %s194
      %s212 = sphi 0, %s212
      %s214 = sphi 0, %s212
      %s215 = sphi 0, %s214
      %s229 = sphi 0, %s215
      %s233 = sphi 0, %s233
      %s235 = sphi 0, %s233
      %s236 = sphi 0, %s235
      %s250 = sphi 0, %s236
      %s254 = sphi 0, %s254
      %s256 = sphi 0, %s254
      %s257 = sphi 0, %s256
      %s271 = sphi 0, %s257
      %s275 = sphi 0, %s275
      %s277 = sphi 0, %s275
      %s278 = sphi 0, %s277
      %s292 = sphi 0, %s278
      %s296 = sphi 0, %s296
      %s298 = sphi 0, %s296
      %s299 = sphi 0, %s298
      %s313 = sphi 0, %s299
      %s317 = sphi 0, %s317
      %s319 = sphi 0, %s317
      %s320 = sphi 0, %s319
      %s334 = sphi 0, %s320
      %s338 = sphi 0, %s338
      %s340 = sphi 0, %s338
      %s341 = sphi 0, %s340
      %s355 = sphi 0, %s341
      %s359 = sphi 0, %s359
      %s361 = sphi 0, %s359
      %s362 = sphi 0, %s361
      %s376 = sphi 0, %s362
      %s382 = sphi 0, %s384
      %s385 = sphi 0, %s382
      %s386 = sphi 0, %s385
      %s402 = sphi 0, %s386
    $region4: #{tpu_custom_call.1} parent=1 // loop_header_branch
      %29 = sbr.rel (%p27) target = $region8
    $region5: #{tpu_custom_call.1} parent=1 // loop_body
      %s31 = ssub.s32 %s26, 1
      %s32 = ssub.s32 %s26, 2
      %s33 = sadd.s32 %s26, 1
      %s34 = ssub.s32 %s26, %s33
      %p35 = scmp.eq.s32.totalorder %s34, 0
      %s37 = sadd.s32 %s36, 1
      %s38 = scalar_select %p35, %s36, %s37
      %p41 = pneg %p35
      %p42 = scmp.eq.s32.totalorder %s26, 1
      %p43 = por %p41, %p42
      %p44 = scmp.ne.s32.totalorder %s36, %s39
      %p45 = scmp.eq.s32.totalorder %s26, 0
      %p46 = por %p44, %p45
      %p47 = scmp.ne.s32.totalorder %s36, %s39
      %p48 = scmp.eq.s32.totalorder %s31, 1
      %p49 = por %p47, %p48
      %p50 = scmp.ne.s32.totalorder %s39, %s40
      %p51 = scmp.eq.s32.totalorder %s31, 0
      %p52 = por %p50, %p51
      %p53 = scmp.ne.s32.totalorder %s39, %s40
      %p54 = scmp.eq.s32.totalorder %s32, 1
      %p55 = por %p53, %p54
      %p57 = scmp.ne.s32.totalorder %s40, %s56
      %p58 = scmp.eq.s32.totalorder %s32, 0
      %p59 = por %p57, %p58
      %s60 = ssub.s32 %s26, %s33
      %p61 = scmp.eq.s32.totalorder %s60, 0
      %s63 = sadd.s32 %s62, 1
      %s64 = scalar_select %p61, %s62, %s63
      %p67 = pneg %p61
      %p68 = scmp.eq.s32.totalorder %s26, 1
      %p69 = por %p67, %p68
      %p70 = scmp.ne.s32.totalorder %s62, %s65
      %p71 = scmp.eq.s32.totalorder %s26, 0
      %p72 = por %p70, %p71
      %p73 = scmp.ne.s32.totalorder %s62, %s65
      %p74 = scmp.eq.s32.totalorder %s31, 1
      %p75 = por %p73, %p74
      %p76 = scmp.ne.s32.totalorder %s65, %s66
      %p77 = scmp.eq.s32.totalorder %s31, 0
      %p78 = por %p76, %p77
      %p79 = scmp.ne.s32.totalorder %s65, %s66
      %p80 = scmp.eq.s32.totalorder %s32, 1
      %p81 = por %p79, %p80
      %p83 = scmp.ne.s32.totalorder %s66, %s82
      %p84 = scmp.eq.s32.totalorder %s32, 0
      %p85 = por %p83, %p84
      %s87 = sadd.s32 %s86, 1
      %p90 = scmp.eq.s32.totalorder %s26, 1
      %p91 = scmp.ne.s32.totalorder %s86, %s88
      %p92 = scmp.eq.s32.totalorder %s26, 0
      %p93 = por %p91, %p92
      %p94 = scmp.ne.s32.totalorder %s86, %s88
      %p95 = scmp.eq.s32.totalorder %s31, 1
      %p96 = por %p94, %p95
      %p97 = scmp.ne.s32.totalorder %s88, %s89
      %p98 = scmp.eq.s32.totalorder %s31, 0
      %p99 = por %p97, %p98
      %p100 = scmp.ne.s32.totalorder %s88, %s89
      %p101 = scmp.eq.s32.totalorder %s32, 1
      %p102 = por %p100, %p101
      %p104 = scmp.ne.s32.totalorder %s89, %s103
      %p105 = scmp.eq.s32.totalorder %s32, 0
      %p106 = por %p104, %p105
      %s108 = sadd.s32 %s107, 1
      %p111 = scmp.eq.s32.totalorder %s26, 1
      %p112 = scmp.ne.s32.totalorder %s107, %s109
      %p113 = scmp.eq.s32.totalorder %s26, 0
      %p114 = por %p112, %p113
      %p115 = scmp.ne.s32.totalorder %s107, %s109
      %p116 = scmp.eq.s32.totalorder %s31, 1
      %p117 = por %p115, %p116
      %p118 = scmp.ne.s32.totalorder %s109, %s110
      %p119 = scmp.eq.s32.totalorder %s31, 0
      %p120 = por %p118, %p119
      %p121 = scmp.ne.s32.totalorder %s109, %s110
      %p122 = scmp.eq.s32.totalorder %s32, 1
      %p123 = por %p121, %p122
      %p125 = scmp.ne.s32.totalorder %s110, %s124
      %p126 = scmp.eq.s32.totalorder %s32, 0
      %p127 = por %p125, %p126
      %s129 = sadd.s32 %s128, 1
      %p132 = scmp.eq.s32.totalorder %s26, 1
      %p133 = scmp.ne.s32.totalorder %s128, %s130
      %p134 = scmp.eq.s32.totalorder %s26, 0
      %p135 = por %p133, %p134
      %p136 = scmp.ne.s32.totalorder %s128, %s130
      %p137 = scmp.eq.s32.totalorder %s31, 1
      %p138 = por %p136, %p137
      %p139 = scmp.ne.s32.totalorder %s130, %s131
      %p140 = scmp.eq.s32.totalorder %s31, 0
      %p141 = por %p139, %p140
      %p142 = scmp.ne.s32.totalorder %s130, %s131
      %p143 = scmp.eq.s32.totalorder %s32, 1
      %p144 = por %p142, %p143
      %p146 = scmp.ne.s32.totalorder %s131, %s145
      %p147 = scmp.eq.s32.totalorder %s32, 0
      %p148 = por %p146, %p147
      %s150 = sadd.s32 %s149, 1
      %p153 = scmp.eq.s32.totalorder %s26, 1
      %p154 = scmp.ne.s32.totalorder %s149, %s151
      %p155 = scmp.eq.s32.totalorder %s26, 0
      %p156 = por %p154, %p155
      %p157 = scmp.ne.s32.totalorder %s149, %s151
      %p158 = scmp.eq.s32.totalorder %s31, 1
      %p159 = por %p157, %p158
      %p160 = scmp.ne.s32.totalorder %s151, %s152
      %p161 = scmp.eq.s32.totalorder %s31, 0
      %p162 = por %p160, %p161
      %p163 = scmp.ne.s32.totalorder %s151, %s152
      %p164 = scmp.eq.s32.totalorder %s32, 1
      %p165 = por %p163, %p164
      %p167 = scmp.ne.s32.totalorder %s152, %s166
      %p168 = scmp.eq.s32.totalorder %s32, 0
      %p169 = por %p167, %p168
      %s171 = sadd.s32 %s170, 1
      %p174 = scmp.eq.s32.totalorder %s26, 1
      %p175 = scmp.ne.s32.totalorder %s170, %s172
      %p176 = scmp.eq.s32.totalorder %s26, 0
      %p177 = por %p175, %p176
      %p178 = scmp.ne.s32.totalorder %s170, %s172
      %p179 = scmp.eq.s32.totalorder %s31, 1
      %p180 = por %p178, %p179
      %p181 = scmp.ne.s32.totalorder %s172, %s173
      %p182 = scmp.eq.s32.totalorder %s31, 0
      %p183 = por %p181, %p182
      %p184 = scmp.ne.s32.totalorder %s172, %s173
      %p185 = scmp.eq.s32.totalorder %s32, 1
      %p186 = por %p184, %p185
      %p188 = scmp.ne.s32.totalorder %s173, %s187
      %p189 = scmp.eq.s32.totalorder %s32, 0
      %p190 = por %p188, %p189
      %s192 = sadd.s32 %s191, 1
      %p195 = scmp.eq.s32.totalorder %s26, 1
      %p196 = scmp.ne.s32.totalorder %s191, %s193
      %p197 = scmp.eq.s32.totalorder %s26, 0
      %p198 = por %p196, %p197
      %p199 = scmp.ne.s32.totalorder %s191, %s193
      %p200 = scmp.eq.s32.totalorder %s31, 1
      %p201 = por %p199, %p200
      %p202 = scmp.ne.s32.totalorder %s193, %s194
      %p203 = scmp.eq.s32.totalorder %s31, 0
      %p204 = por %p202, %p203
      %p205 = scmp.ne.s32.totalorder %s193, %s194
      %p206 = scmp.eq.s32.totalorder %s32, 1
      %p207 = por %p205, %p206
      %p209 = scmp.ne.s32.totalorder %s194, %s208
      %p210 = scmp.eq.s32.totalorder %s32, 0
      %p211 = por %p209, %p210
      %s213 = sadd.s32 %s212, 1
      %p216 = scmp.eq.s32.totalorder %s26, 1
      %p217 = scmp.ne.s32.totalorder %s212, %s214
      %p218 = scmp.eq.s32.totalorder %s26, 0
      %p219 = por %p217, %p218
      %p220 = scmp.ne.s32.totalorder %s212, %s214
      %p221 = scmp.eq.s32.totalorder %s31, 1
      %p222 = por %p220, %p221
      %p223 = scmp.ne.s32.totalorder %s214, %s215
      %p224 = scmp.eq.s32.totalorder %s31, 0
      %p225 = por %p223, %p224
      %p226 = scmp.ne.s32.totalorder %s214, %s215
      %p227 = scmp.eq.s32.totalorder %s32, 1
      %p228 = por %p226, %p227
      %p230 = scmp.ne.s32.totalorder %s215, %s229
      %p231 = scmp.eq.s32.totalorder %s32, 0
      %p232 = por %p230, %p231
      %s234 = sadd.s32 %s233, 1
      %p237 = scmp.eq.s32.totalorder %s26, 1
      %p238 = scmp.ne.s32.totalorder %s233, %s235
      %p239 = scmp.eq.s32.totalorder %s26, 0
      %p240 = por %p238, %p239
      %p241 = scmp.ne.s32.totalorder %s233, %s235
      %p242 = scmp.eq.s32.totalorder %s31, 1
      %p243 = por %p241, %p242
      %p244 = scmp.ne.s32.totalorder %s235, %s236
      %p245 = scmp.eq.s32.totalorder %s31, 0
      %p246 = por %p244, %p245
      %p247 = scmp.ne.s32.totalorder %s235, %s236
      %p248 = scmp.eq.s32.totalorder %s32, 1
      %p249 = por %p247, %p248
      %p251 = scmp.ne.s32.totalorder %s236, %s250
      %p252 = scmp.eq.s32.totalorder %s32, 0
      %p253 = por %p251, %p252
      %s255 = sadd.s32 %s254, 1
      %p258 = scmp.eq.s32.totalorder %s26, 1
      %p259 = scmp.ne.s32.totalorder %s254, %s256
      %p260 = scmp.eq.s32.totalorder %s26, 0
      %p261 = por %p259, %p260
      %p262 = scmp.ne.s32.totalorder %s254, %s256
      %p263 = scmp.eq.s32.totalorder %s31, 1
      %p264 = por %p262, %p263
      %p265 = scmp.ne.s32.totalorder %s256, %s257
      %p266 = scmp.eq.s32.totalorder %s31, 0
      %p267 = por %p265, %p266
      %p268 = scmp.ne.s32.totalorder %s256, %s257
      %p269 = scmp.eq.s32.totalorder %s32, 1
      %p270 = por %p268, %p269
      %p272 = scmp.ne.s32.totalorder %s257, %s271
      %p273 = scmp.eq.s32.totalorder %s32, 0
      %p274 = por %p272, %p273
      %s276 = sadd.s32 %s275, 1
      %p279 = scmp.eq.s32.totalorder %s26, 1
      %p280 = scmp.ne.s32.totalorder %s275, %s277
      %p281 = scmp.eq.s32.totalorder %s26, 0
      %p282 = por %p280, %p281
      %p283 = scmp.ne.s32.totalorder %s275, %s277
      %p284 = scmp.eq.s32.totalorder %s31, 1
      %p285 = por %p283, %p284
      %p286 = scmp.ne.s32.totalorder %s277, %s278
      %p287 = scmp.eq.s32.totalorder %s31, 0
      %p288 = por %p286, %p287
      %p289 = scmp.ne.s32.totalorder %s277, %s278
      %p290 = scmp.eq.s32.totalorder %s32, 1
      %p291 = por %p289, %p290
      %p293 = scmp.ne.s32.totalorder %s278, %s292
      %p294 = scmp.eq.s32.totalorder %s32, 0
      %p295 = por %p293, %p294
      %s297 = sadd.s32 %s296, 1
      %p300 = scmp.eq.s32.totalorder %s26, 1
      %p301 = scmp.ne.s32.totalorder %s296, %s298
      %p302 = scmp.eq.s32.totalorder %s26, 0
      %p303 = por %p301, %p302
      %p304 = scmp.ne.s32.totalorder %s296, %s298
      %p305 = scmp.eq.s32.totalorder %s31, 1
      %p306 = por %p304, %p305
      %p307 = scmp.ne.s32.totalorder %s298, %s299
      %p308 = scmp.eq.s32.totalorder %s31, 0
      %p309 = por %p307, %p308
      %p310 = scmp.ne.s32.totalorder %s298, %s299
      %p311 = scmp.eq.s32.totalorder %s32, 1
      %p312 = por %p310, %p311
      %p314 = scmp.ne.s32.totalorder %s299, %s313
      %p315 = scmp.eq.s32.totalorder %s32, 0
      %p316 = por %p314, %p315
      %s318 = sadd.s32 %s317, 1
      %p321 = scmp.eq.s32.totalorder %s26, 1
      %p322 = scmp.ne.s32.totalorder %s317, %s319
      %p323 = scmp.eq.s32.totalorder %s26, 0
      %p324 = por %p322, %p323
      %p325 = scmp.ne.s32.totalorder %s317, %s319
      %p326 = scmp.eq.s32.totalorder %s31, 1
      %p327 = por %p325, %p326
      %p328 = scmp.ne.s32.totalorder %s319, %s320
      %p329 = scmp.eq.s32.totalorder %s31, 0
      %p330 = por %p328, %p329
      %p331 = scmp.ne.s32.totalorder %s319, %s320
      %p332 = scmp.eq.s32.totalorder %s32, 1
      %p333 = por %p331, %p332
      %p335 = scmp.ne.s32.totalorder %s320, %s334
      %p336 = scmp.eq.s32.totalorder %s32, 0
      %p337 = por %p335, %p336
      %s339 = sadd.s32 %s338, 1
      %p342 = scmp.eq.s32.totalorder %s26, 1
      %p343 = scmp.ne.s32.totalorder %s338, %s340
      %p344 = scmp.eq.s32.totalorder %s26, 0
      %p345 = por %p343, %p344
      %p346 = scmp.ne.s32.totalorder %s338, %s340
      %p347 = scmp.eq.s32.totalorder %s31, 1
      %p348 = por %p346, %p347
      %p349 = scmp.ne.s32.totalorder %s340, %s341
      %p350 = scmp.eq.s32.totalorder %s31, 0
      %p351 = por %p349, %p350
      %p352 = scmp.ne.s32.totalorder %s340, %s341
      %p353 = scmp.eq.s32.totalorder %s32, 1
      %p354 = por %p352, %p353
      %p356 = scmp.ne.s32.totalorder %s341, %s355
      %p357 = scmp.eq.s32.totalorder %s32, 0
      %p358 = por %p356, %p357
      %s360 = sadd.s32 %s359, 1
      %p363 = scmp.eq.s32.totalorder %s26, 1
      %p364 = scmp.ne.s32.totalorder %s359, %s361
      %p365 = scmp.eq.s32.totalorder %s26, 0
      %p366 = por %p364, %p365
      %p367 = scmp.ne.s32.totalorder %s359, %s361
      %p368 = scmp.eq.s32.totalorder %s31, 1
      %p369 = por %p367, %p368
      %p370 = scmp.ne.s32.totalorder %s361, %s362
      %p371 = scmp.eq.s32.totalorder %s31, 0
      %p372 = por %p370, %p371
      %p373 = scmp.ne.s32.totalorder %s361, %s362
      %p374 = scmp.eq.s32.totalorder %s32, 1
      %p375 = por %p373, %p374
      %p377 = scmp.ne.s32.totalorder %s362, %s376
      %p378 = scmp.eq.s32.totalorder %s32, 0
      %p379 = por %p377, %p378
      %s380 = ssub.s32 %s26, %s33
      %p381 = scmp.eq.s32.totalorder %s380, 0
      %s383 = sadd.s32 %s382, 1
      %s384 = scalar_select %p381, %s382, %s383
      %p387 = pneg %p381
      %p388 = scmp.eq.s32.totalorder %s26, 1
      %p389 = por %p387, %p388
      %p390 = scmp.ne.s32.totalorder %s382, %s385
      %p391 = scmp.eq.s32.totalorder %s26, 0
      %p392 = por %p390, %p391
      %p393 = scmp.ne.s32.totalorder %s382, %s385
      %p394 = scmp.eq.s32.totalorder %s31, 1
      %p395 = por %p393, %p394
      %p396 = scmp.ne.s32.totalorder %s385, %s386
      %p397 = scmp.eq.s32.totalorder %s31, 0
      %p398 = por %p396, %p397
      %p399 = scmp.ne.s32.totalorder %s385, %s386
      %p400 = scmp.eq.s32.totalorder %s32, 1
      %p401 = por %p399, %p400
      %p403 = scmp.ne.s32.totalorder %s386, %s402
      %p404 = scmp.eq.s32.totalorder %s32, 0
      %p405 = por %p403, %p404
      %p406 = scmp.le.s32.totalorder 1, %s26
      %p407 = scmp.lt.s32.totalorder %s26, 3
      %p408 = pnand %p406, %p407
      %p409 = pneg %p408
      // Predicated region
      $region9: #{tpu_custom_call.1} parent=5 // pred_check
        _
      $region10: #{tpu_custom_call.1} parent=5 // pred_check_branch
        %411 = sbr.rel (%p408) target = $region12
      $region11: #{tpu_custom_call.1} parent=5 // pred_region
        %s412 = ssub.s32 %s26, 1
        // Predicated region
        $region13: #{tpu_custom_call.1} parent=11 // pred_check
          %p413 = pneg %p99
        $region14: #{tpu_custom_call.1} parent=11 // pred_check_branch
          %415 = sbr.rel (%p413) target = $region16
        $region15: #{tpu_custom_call.1} parent=11 // pred_region
          _
        $region16: #{tpu_custom_call.1} parent=11 // pred_fallthru
          _
        // Predicated region
        $region17: #{tpu_custom_call.1} parent=11 // pred_check
          %p416 = pneg %p120
        $region18: #{tpu_custom_call.1} parent=11 // pred_check_branch
          %418 = sbr.rel (%p416) target = $region20
        $region19: #{tpu_custom_call.1} parent=11 // pred_region
          _
        $region20: #{tpu_custom_call.1} parent=11 // pred_fallthru
          _
        // Predicated region
        $region21: #{tpu_custom_call.1} parent=11 // pred_check
          %p419 = pneg %p141
        $region22: #{tpu_custom_call.1} parent=11 // pred_check_branch
          %421 = sbr.rel (%p419) target = $region24
        $region23: #{tpu_custom_call.1} parent=11 // pred_region
          _
        $region24: #{tpu_custom_call.1} parent=11 // pred_fallthru
          _
        // Predicated region
        $region25: #{tpu_custom_call.1} parent=11 // pred_check
          %p422 = pneg %p162
        $region26: #{tpu_custom_call.1} parent=11 // pred_check_branch
          %424 = sbr.rel (%p422) target = $region28
        $region27: #{tpu_custom_call.1} parent=11 // pred_region
          _
        $region28: #{tpu_custom_call.1} parent=11 // pred_fallthru
          _
        // Predicated region
        $region29: #{tpu_custom_call.1} parent=11 // pred_check
          %p425 = pneg %p183
        $region30: #{tpu_custom_call.1} parent=11 // pred_check_branch
          %427 = sbr.rel (%p425) target = $region32
        $region31: #{tpu_custom_call.1} parent=11 // pred_region
          _
        $region32: #{tpu_custom_call.1} parent=11 // pred_fallthru
          _
        // Predicated region
        $region33: #{tpu_custom_call.1} parent=11 // pred_check
          %p428 = pneg %p204
        $region34: #{tpu_custom_call.1} parent=11 // pred_check_branch
          %430 = sbr.rel (%p428) target = $region36
        $region35: #{tpu_custom_call.1} parent=11 // pred_region
          _
        $region36: #{tpu_custom_call.1} parent=11 // pred_fallthru
          _
        // Predicated region
        $region37: #{tpu_custom_call.1} parent=11 // pred_check
          %p431 = pneg %p225
        $region38: #{tpu_custom_call.1} parent=11 // pred_check_branch
          %433 = sbr.rel (%p431) target = $region40
        $region39: #{tpu_custom_call.1} parent=11 // pred_region
          _
        $region40: #{tpu_custom_call.1} parent=11 // pred_fallthru
          _
        // Predicated region
        $region41: #{tpu_custom_call.1} parent=11 // pred_check
          %p434 = pneg %p246
        $region42: #{tpu_custom_call.1} parent=11 // pred_check_branch
          %436 = sbr.rel (%p434) target = $region44
        $region43: #{tpu_custom_call.1} parent=11 // pred_region
          _
        $region44: #{tpu_custom_call.1} parent=11 // pred_fallthru
          _
        // Predicated region
        $region45: #{tpu_custom_call.1} parent=11 // pred_check
          %p437 = pneg %p267
        $region46: #{tpu_custom_call.1} parent=11 // pred_check_branch
          %439 = sbr.rel (%p437) target = $region48
        $region47: #{tpu_custom_call.1} parent=11 // pred_region
          _
        $region48: #{tpu_custom_call.1} parent=11 // pred_fallthru
          _
        // Predicated region
        $region49: #{tpu_custom_call.1} parent=11 // pred_check
          %p440 = pneg %p288
        $region50: #{tpu_custom_call.1} parent=11 // pred_check_branch
          %442 = sbr.rel (%p440) target = $region52
        $region51: #{tpu_custom_call.1} parent=11 // pred_region
          _
        $region52: #{tpu_custom_call.1} parent=11 // pred_fallthru
          _
        // Predicated region
        $region53: #{tpu_custom_call.1} parent=11 // pred_check
          %p443 = pneg %p309
        $region54: #{tpu_custom_call.1} parent=11 // pred_check_branch
          %445 = sbr.rel (%p443) target = $region56
        $region55: #{tpu_custom_call.1} parent=11 // pred_region
          %447 = vsyncadd [#allocation5], 0
          %s448 = sshll.u32 %s12, 4
          %s449 = int_to_ptr.hbm [resolvable:$true] %s448
          %s450 = sshll.u32 [#allocation4], 4
          %s451 = int_to_ptr.vmem [resolvable:$true] %s450
          %456 = dma.hbm_to_vmem [thread:$0]  %s449, 4608, %s451, [#allocation5], 64, 64, 4
        $region56: #{tpu_custom_call.1} parent=11 // pred_fallthru
          _
        // Predicated region
        $region57: #{tpu_custom_call.1} parent=11 // pred_check
          %p457 = pneg %p330
        $region58: #{tpu_custom_call.1} parent=11 // pred_check_branch
          %459 = sbr.rel (%p457) target = $region60
        $region59: #{tpu_custom_call.1} parent=11 // pred_region
          _
        $region60: #{tpu_custom_call.1} parent=11 // pred_fallthru
          _
        // Predicated region
        $region61: #{tpu_custom_call.1} parent=11 // pred_check
          %p460 = pneg %p351
        $region62: #{tpu_custom_call.1} parent=11 // pred_check_branch
          %462 = sbr.rel (%p460) target = $region64
        $region63: #{tpu_custom_call.1} parent=11 // pred_region
          _
        $region64: #{tpu_custom_call.1} parent=11 // pred_fallthru
          _
        // Predicated region
        $region65: #{tpu_custom_call.1} parent=11 // pred_check
          %p463 = pneg %p372
        $region66: #{tpu_custom_call.1} parent=11 // pred_check_branch
          %465 = sbr.rel (%p463) target = $region68
        $region67: #{tpu_custom_call.1} parent=11 // pred_region
          _
        $region68: #{tpu_custom_call.1} parent=11 // pred_fallthru
          _
      $region12: #{tpu_custom_call.1} parent=5 // pred_fallthru
        _
      %p466 = scmp.lt.s32.totalorder %s26, 2
      // Predicated region
      $region69: #{tpu_custom_call.1} parent=5 // pred_check
        %p467 = pneg %p466
      $region70: #{tpu_custom_call.1} parent=5 // pred_check_branch
        %469 = sbr.rel (%p467) target = $region72
      $region71: #{tpu_custom_call.1} parent=5 // pred_region
        // Predicated region
        $region73: #{tpu_custom_call.1} parent=71 // pred_check
          %p470 = pneg %p46
        $region74: #{tpu_custom_call.1} parent=71 // pred_check_branch
          %472 = sbr.rel (%p470) target = $region76
        $region75: #{tpu_custom_call.1} parent=71 // pred_region
          %p473 = scmp.lt.s32.totalorder %s26, 1
          %s474 = scalar_select %p473, %s26, 1
          %s475 = smul.addr %s474, 8
          %s476 = smul.addr %s475, 4
          %s477 = scalar_lea.vmem %s0, %s476
        $region76: #{tpu_custom_call.1} parent=71 // pred_fallthru
          _
        // Predicated region
        $region77: #{tpu_custom_call.1} parent=71 // pred_check
          %p478 = pneg %p72
        $region78: #{tpu_custom_call.1} parent=71 // pred_check_branch
          %480 = sbr.rel (%p478) target = $region80
        $region79: #{tpu_custom_call.1} parent=71 // pred_region
          %p481 = scmp.lt.s32.totalorder %s26, 1
          %s482 = scalar_select %p481, %s26, 1
          %s483 = scalar_lea.vmem %s1, %s482
        $region80: #{tpu_custom_call.1} parent=71 // pred_fallthru
          _
      $region72: #{tpu_custom_call.1} parent=5 // pred_fallthru
        _
      %p484 = scmp.le.s32.totalorder 1, %s26
      %p485 = scmp.lt.s32.totalorder %s26, 3
      %p486 = pnand %p484, %p485
      %p487 = pneg %p486
      // Predicated region
      $region81: #{tpu_custom_call.1} parent=5 // pred_check
        _
      $region82: #{tpu_custom_call.1} parent=5 // pred_check_branch
        %489 = sbr.rel (%p486) target = $region84
      $region83: #{tpu_custom_call.1} parent=5 // pred_region
        %s490 = ssub.s32 %s26, 1
        // Predicated region
        $region85: #{tpu_custom_call.1} parent=83 // pred_check
          %p491 = pneg %p309
        $region86: #{tpu_custom_call.1} parent=83 // pred_check_branch
          %493 = sbr.rel (%p491) target = $region88
        $region87: #{tpu_custom_call.1} parent=83 // pred_region
          %495 = dma.done [#allocation5], 4608
        $region88: #{tpu_custom_call.1} parent=83 // pred_fallthru
          _
        %p496 = scmp.lt.s32.totalorder %s31, 1
        %s497 = scalar_select %p496, %s31, 1
        %s498 = smul.addr %s497, 8
        %s499 = smul.addr %s498, 4
        %s500 = scalar_lea.vmem %s0, %s499
        %p501 = pneg %p52
        %p502 = pneg %p49
        %p503 = scmp.lt.s32.totalorder %s31, 1
        %s504 = scalar_select %p503, %s31, 1
        %s505 = scalar_lea.vmem %s1, %s504
        %p506 = pneg %p78
        %p507 = pneg %p75
        %p508 = pneg %p99
        %p509 = pneg %p96
        %p510 = pneg %p120
        %p511 = pneg %p117
        %p512 = pneg %p141
        %p513 = pneg %p138
        %p514 = pneg %p162
        %p515 = pneg %p159
        %p516 = pneg %p183
        %p517 = pneg %p180
        %p518 = pneg %p204
        %p519 = pneg %p201
        %p520 = pneg %p225
        %p521 = pneg %p222
        %p522 = pneg %p246
        %p523 = pneg %p243
        %p524 = pneg %p267
        %p525 = pneg %p264
        %p526 = pneg %p288
        %p527 = pneg %p285
        %p528 = pneg %p309
        %p529 = pneg %p306
        %p530 = pneg %p330
        %p531 = pneg %p327
        %p532 = pneg %p351
        %p533 = pneg %p348
        %p534 = pneg %p372
        %p535 = pneg %p369
        %p536 = pneg %p398
        %p537 = pneg %p395
        %s538 = sand.u32 %s385, 1
        %s539 = scalar_lea.sflag [#allocation6], %s538
        %s540 = sand.u32 %s385, 1
        %s541 = smul.addr %s540, 64
        %s542 = scalar_lea.vmem [#allocation7], %s541
        %p543 = scmp.lt.s32.totalorder %s31, 1
        %s544 = scalar_select %p543, %s31, 1
        %s545 = smul.addr %s544, 8
        %s546 = smul.addr %s545, 4
        %s547 = scalar_lea.vmem %s0, %s546
        %p548 = scmp.lt.s32.totalorder %s31, 1
        %s549 = scalar_select %p548, %s31, 1
        %s550 = scalar_lea.vmem %s1, %s549
        %v552 = vld [vmem:[%s2] sm:$0xf]
        %v553 = vld [vmem:[%s2 + $0x4] sm:$0xf]
        %v554 = vld [vmem:[%s2 + $0x8] sm:$0xf]
        %v555 = vld [vmem:[%s2 + $0xc] sm:$0xf]
        %v556 = vld [vmem:[%s2 + $0x10] sm:$0xf]
        %v557 = vld [vmem:[%s2 + $0x14] sm:$0xf]
        %v558 = vld [vmem:[%s2 + $0x18] sm:$0xf]
        %v559 = vld [vmem:[%s2 + $0x1c] sm:$0xf]
        %v560 = vld [vmem:[%s3] sm:$0xf]
        %v561 = vld [vmem:[%s3 + $0x4] sm:$0xf]
        %v562 = vld [vmem:[%s3 + $0x8] sm:$0xf]
        %v563 = vld [vmem:[%s3 + $0xc] sm:$0xf]
        %v564 = vld [vmem:[%s3 + $0x10] sm:$0xf]
        %v565 = vld [vmem:[%s3 + $0x14] sm:$0xf]
        %v566 = vld [vmem:[%s3 + $0x18] sm:$0xf]
        %v567 = vld [vmem:[%s3 + $0x1c] sm:$0xf]
        %vm568 = vcmask 257024
        %569 = vst.msk [vmem:[#allocation2] sm:$0xf] %vm568, 0
        %570 = vst.msk [vmem:[#allocation2 + $0x4] sm:$0xf] %vm568, 0
        %571 = vst.msk [vmem:[#allocation2 + $0x28] sm:$0xf] %vm568, 0
        %572 = vst.msk [vmem:[#allocation2 + $0x2c] sm:$0xf] %vm568, 0
        %vm573 = vcmask 519168
        %574 = vst.msk [vmem:[#allocation3] sm:$0xf] %vm573, 0
        %575 = vst.msk [vmem:[#allocation3 + $0x4] sm:$0xf] %vm573, 0
        %576 = vst.msk [vmem:[#allocation3 + $0x28] sm:$0xf] %vm573, 0
        %577 = vst.msk [vmem:[#allocation3 + $0x2c] sm:$0xf] %vm573, 0
        %v578 = vld [vmem:[%s547] sm:$0xf]
        %v579 = vld [vmem:[%s547 + $0x4] sm:$0xf]
        %v580 = vld [vmem:[%s547 + $0x8] sm:$0xf]
        %v581 = vld [vmem:[%s547 + $0xc] sm:$0xf]
        %v582 = vld [vmem:[%s547 + $0x10] sm:$0xf]
        %v583 = vld [vmem:[%s547 + $0x14] sm:$0xf]
        %v584 = vld [vmem:[%s547 + $0x18] sm:$0xf]
        %v585 = vld [vmem:[%s547 + $0x1c] sm:$0xf]
        %v586 = vunpack.c.l.bf16 %v578
        %v587 = vunpack.c.l.bf16 %v579
        %v588 = vunpack.c.l.bf16 %v580
        %v589 = vunpack.c.l.bf16 %v581
        %v590 = vunpack.c.l.bf16 %v582
        %v591 = vunpack.c.l.bf16 %v583
        %v592 = vunpack.c.l.bf16 %v584
        %v593 = vunpack.c.l.bf16 %v585
        %v594 = vld [vmem:[%s4] sm:$0xff]
        %v595 = vld [vmem:[%s4 + $0x8] sm:$0xff]
        %v596 = vld [vmem:[%s4 + $0x10] sm:$0xff]
        %v597 = vld [vmem:[%s4 + $0x18] sm:$0xff]
        %v598 = vld [vmem:[%s5] sm:$0x1]
        %v599 = vld [vmem:[%s6] sm:$0x1]
        %vm600 = vcmask 261120
        %v601 = vsel %vm600, %v586, 0.0
        %v602 = vsel %vm600, %v587, 0.0
        %v603 = vadd.f32 %v601, %v602
        %v604 = vsel %vm600, %v588, 0.0
        %v605 = vadd.f32 %v603, %v604
        %v606 = vsel %vm600, %v589, 0.0
        %v607 = vadd.f32 %v605, %v606
        %v608 = vsel %vm600, %v590, 0.0
        %v609 = vadd.f32 %v607, %v608
        %v610 = vsel %vm600, %v591, 0.0
        %v611 = vadd.f32 %v609, %v610
        %v612 = vsel %vm600, %v592, 0.0
        %v613 = vadd.f32 %v611, %v612
        %v614 = vsel %vm600, %v593, 0.0
        %v615 = vadd.f32 %v613, %v614
        %v616 = vrot.slane %v615, 4
        %v617 = vadd.f32 %v615, %v616
        %v618 = vrot.slane %v617, 2
        %v619 = vadd.f32 %v617, %v618
        %v620 = vrot.slane %v619, 1
        %v621 = vadd.f32 %v619, %v620
        %v622 = vmul.f32 %v586, %v586
        %v623 = vmul.f32 %v587, %v587
        %v624 = vmul.f32 %v588, %v588
        %v625 = vmul.f32 %v589, %v589
        %v626 = vmul.f32 %v590, %v590
        %v627 = vmul.f32 %v591, %v591
        %v628 = vmul.f32 %v592, %v592
        %v629 = vmul.f32 %v593, %v593
        %v630 = vsel %vm600, %v622, 0.0
        %v631 = vsel %vm600, %v623, 0.0
        %v632 = vadd.f32 %v630, %v631
        %v633 = vsel %vm600, %v624, 0.0
        %v634 = vadd.f32 %v632, %v633
        %v635 = vsel %vm600, %v625, 0.0
        %v636 = vadd.f32 %v634, %v635
        %v637 = vsel %vm600, %v626, 0.0
        %v638 = vadd.f32 %v636, %v637
        %v639 = vsel %vm600, %v627, 0.0
        %v640 = vadd.f32 %v638, %v639
        %v641 = vsel %vm600, %v628, 0.0
        %v642 = vadd.f32 %v640, %v641
        %v643 = vsel %vm600, %v629, 0.0
        %v644 = vadd.f32 %v642, %v643
        %v645 = vrot.slane %v644, 4
        %v646 = vadd.f32 %v644, %v645
        %v647 = vrot.slane %v646, 2
        %v648 = vadd.f32 %v646, %v647
        %v649 = vrot.slane %v648, 1
        %v650 = vadd.f32 %v648, %v649
        %v652 = vsel %vm600, %v621, 0
        %654 = vmatpush.msra.mxu0 0.0
        %655 = vmatpush.msra.mxu0 0.0
        %656 = vmatpush.msra.mxu0 0.0
        %657 = vmatpush.msra.mxu0 0.0
        %658 = vmatpush.msra.mxu0 0.0
        %659 = vmatpush.msra.mxu0 0.0
        %660 = vmatpush.msra.mxu0 0.0
        %661 = vmatpush.msra.mxu0 0.0
        %662 = vmatpush.msra.mxu0 0.0
        %663 = vmatpush.msra.mxu0 0.0
        %664 = vmatpush.msra.mxu0 0.0
        %665 = vmatpush.msra.mxu0 0.0
        %666 = vmatpush.msra.mxu0 %v597
        %667 = vmatpush.msra.mxu0 %v596
        %668 = vmatpush.msra.mxu0 %v595
        %669 = vmatpush.msra.mxu0 %v594
        %670 = vmatmul.f32.gmra.mxu0 %v652
        %v671 = vpop.f32.mrf.mxu0
        %v672 = vadd.f32 0.0, %v671
        %673 = vdwg.mxu0
        %v675 = vsel %vm600, %v650, 0
        %677 = vmatpush.msra.mxu0 0.0
        %678 = vmatpush.msra.mxu0 0.0
        %679 = vmatpush.msra.mxu0 0.0
        %680 = vmatpush.msra.mxu0 0.0
        %681 = vmatpush.msra.mxu0 0.0
        %682 = vmatpush.msra.mxu0 0.0
        %683 = vmatpush.msra.mxu0 0.0
        %684 = vmatpush.msra.mxu0 0.0
        %685 = vmatpush.msra.mxu0 0.0
        %686 = vmatpush.msra.mxu0 0.0
        %687 = vmatpush.msra.mxu0 0.0
        %688 = vmatpush.msra.mxu0 0.0
        %689 = vmatpush.msra.mxu0 %v597
        %690 = vmatpush.msra.mxu0 %v596
        %691 = vmatpush.msra.mxu0 %v595
        %692 = vmatpush.msra.mxu0 %v594
        %693 = vmatmul.f32.gmra.mxu0 %v675
        %v694 = vpop.f32.mrf.mxu0
        %v695 = vadd.f32 0.0, %v694
        %696 = vdwg.mxu0
        %v697 = vrcp.pop 64.0
        %v698 = vmul.f32 64.0, %v697
        %v699 = vsub.f32 1.0, %v698
        %v700 = vmul.f32 %v697, %v699
        %v701 = vadd.f32 %v697, %v700
        %vm702 = vweird.f32 %v697
        %v703 = vsel %vm702, %v697, %v701
        %v704 = vmul.f32 %v672, %v703
        %v705 = vmul.f32 %v695, %v703
        %v706 = vmul.f32 %v704, %v704
        %v707 = vsub.f32 %v705, %v706
        %v708 = vmax.f32 %v707, 0.0
        %v709 = vadd.f32 %v708, 1e-05
        %v710 = vrsqrt.pop %v709
        %v711 = vmul.f32 %v710, %v709
        %v712 = vmul.f32 %v711, %v710
        %v713 = vmul.f32 0.5, %v712
        %v714 = vsub.f32 1.5, %v713
        %v715 = vmul.f32 %v710, %v714
        %vm716 = vweird.f32 %v709
        %vm717 = vweird.f32 %v710
        %vm718 = vmor %vm716, %vm717
        %v719 = vsel %vm718, %v710, %v715
        %v721 = vsel %vm600, %v704, 0
        %v724 = vsel %vm600, %v594, 0
        %v727 = vsel %vm600, %v595, 0
        %v730 = vsel %vm600, %v596, 0
        %v733 = vsel %vm600, %v597, 0
        %735 = vmatpush.xpose.msra.mxu0 0.0
        %736 = vmatpush.xpose.msra.mxu0 0.0
        %737 = vmatpush.xpose.msra.mxu0 0.0
        %738 = vmatpush.xpose.msra.mxu0 0.0
        %739 = vmatpush.xpose.msra.mxu0 0.0
        %740 = vmatpush.xpose.msra.mxu0 0.0
        %741 = vmatpush.xpose.msra.mxu0 0.0
        %742 = vmatpush.xpose.msra.mxu0 0.0
        %743 = vmatpush.xpose.msra.mxu0 0.0
        %744 = vmatpush.xpose.msra.mxu0 0.0
        %745 = vmatpush.xpose.msra.mxu0 0.0
        %746 = vmatpush.xpose.msra.mxu0 0.0
        %747 = vmatpush.xpose.msra.mxu0 %v733
        %748 = vmatpush.xpose.msra.mxu0 %v730
        %749 = vmatpush.xpose.msra.mxu0 %v727
        %750 = vmatpush.xpose.msra.mxu0 %v724
        %751 = vmatmul.f32.gmra.mxu0 %v721
        %v752 = vpop.f32.mrf.mxu0
        %v753 = vadd.f32 0.0, %v752
        %754 = vdwg.mxu0
        %v756 = vsel %vm600, %v719, 0
        %758 = vmatpush.xpose.msra.mxu0 0.0
        %759 = vmatpush.xpose.msra.mxu0 0.0
        %760 = vmatpush.xpose.msra.mxu0 0.0
        %761 = vmatpush.xpose.msra.mxu0 0.0
        %762 = vmatpush.xpose.msra.mxu0 0.0
        %763 = vmatpush.xpose.msra.mxu0 0.0
        %764 = vmatpush.xpose.msra.mxu0 0.0
        %765 = vmatpush.xpose.msra.mxu0 0.0
        %766 = vmatpush.xpose.msra.mxu0 0.0
        %767 = vmatpush.xpose.msra.mxu0 0.0
        %768 = vmatpush.xpose.msra.mxu0 0.0
        %769 = vmatpush.xpose.msra.mxu0 0.0
        %770 = vmatpush.xpose.msra.mxu0 %v733
        %771 = vmatpush.xpose.msra.mxu0 %v730
        %772 = vmatpush.xpose.msra.mxu0 %v727
        %773 = vmatpush.xpose.msra.mxu0 %v724
        %774 = vmatmul.f32.gmra.mxu0 %v756
        %v775 = vpop.f32.mrf.mxu0
        %v776 = vadd.f32 0.0, %v775
        %777 = vdwg.mxu0
        %v778 = vmul.f32 %v776, %v598
        %v779 = vmul.f32 %v753, %v778
        %v780 = vsub.f32 %v599, %v779
        %v781 = vperm.slane %v778, 0
        %v782 = vmul.f32 %v586, %v781
        %v783 = vmul.f32 %v587, %v781
        %v784 = vmul.f32 %v588, %v781
        %v785 = vmul.f32 %v589, %v781
        %v786 = vmul.f32 %v590, %v781
        %v787 = vmul.f32 %v591, %v781
        %v788 = vmul.f32 %v592, %v781
        %v789 = vmul.f32 %v593, %v781
        %v791 = vperm.slane %v780, 0
        %v793 = vadd.f32 %v782, %v791
        %v794 = vadd.f32 %v783, %v791
        %v795 = vadd.f32 %v784, %v791
        %v796 = vadd.f32 %v785, %v791
        %v797 = vadd.f32 %v786, %v791
        %v798 = vadd.f32 %v787, %v791
        %v799 = vadd.f32 %v788, %v791
        %v800 = vadd.f32 %v789, %v791
        %v801 = vpack.c.bf16 %v794, %v793
        %v802 = vpack.c.bf16 %v796, %v795
        %v803 = vpack.c.bf16 %v798, %v797
        %v804 = vpack.c.bf16 %v800, %v799
        %v805 = vld [vmem:[%s14] sm:$0xf]
        %v806 = vld [vmem:[%s14 + $0x4] sm:$0xf]
        %v807 = vld [vmem:[%s14 + $0x8] sm:$0xf]
        %v808 = vld [vmem:[%s14 + $0xc] sm:$0xf]
        %v809 = vld [vmem:[%s15] sm:$0x1]
        %v811 = vperm.slane %v809, 0
        %v817 = vunpack.c.l.b16 %v805
        %v818 = vunpack.c.l.b16 %v806
        %v819 = vunpack.c.l.b16 %v807
        %v820 = vunpack.c.l.b16 %v808
        %v821 = vpack.c.b16 %v818, %v817
        %v822 = vpack.c.b16 %v820, %v819
        %v826 = vsel %vm600, %v801, 0
        %v829 = vsel %vm600, %v802, 0
        %v832 = vsel %vm600, %v803, 0
        %v835 = vsel %vm600, %v804, 0
        %837 = vmatpush.bf16.msra.mxu0 0
        %838 = vmatpush.bf16.msra.mxu0 0
        %839 = vmatpush.bf16.msra.mxu0 0
        %840 = vmatpush.bf16.msra.mxu0 0
        %841 = vmatpush.bf16.msra.mxu0 0
        %842 = vmatpush.bf16.msra.mxu0 0
        %843 = vmatpush.bf16.msra.mxu0 %v822
        %844 = vmatpush.bf16.msra.mxu0 %v821
        %845 = vmatmul.bf16.gmra.mxu0 %v826
        %v846 = vpop.f32.mrf.mxu0
        %v847 = vadd.f32 %v811, %v846
        %v848 = vpop.f32.mrf.mxu0
        %v849 = vadd.f32 %v811, %v848
        %850 = vmatmul.bf16.gmra.mxu0 %v829
        %v851 = vpop.f32.mrf.mxu0
        %v852 = vadd.f32 %v811, %v851
        %v853 = vpop.f32.mrf.mxu0
        %v854 = vadd.f32 %v811, %v853
        %855 = vmatmul.bf16.gmra.mxu0 %v832
        %v856 = vpop.f32.mrf.mxu0
        %v857 = vadd.f32 %v811, %v856
        %v858 = vpop.f32.mrf.mxu0
        %v859 = vadd.f32 %v811, %v858
        %860 = vmatmul.bf16.gmra.mxu0 %v835
        %v861 = vpop.f32.mrf.mxu0
        %v862 = vadd.f32 %v811, %v861
        %v863 = vpop.f32.mrf.mxu0
        %v864 = vadd.f32 %v811, %v863
        %865 = vdwg.mxu0
        %v866 = vld [vmem:[%s13] sm:$0x1]
        %v868 = vperm.slane %v866, 0
        %v870 = vadd.f32 %v847, %v868
        %v871 = vadd.f32 %v849, %v868
        %v872 = vadd.f32 %v852, %v868
        %v873 = vadd.f32 %v854, %v868
        %v874 = vadd.f32 %v857, %v868
        %v875 = vadd.f32 %v859, %v868
        %v876 = vadd.f32 %v862, %v868
        %v877 = vadd.f32 %v864, %v868
        %vm878 = vcmask 523264
        %879 = vst.msk [vmem:[%s542] sm:$0xff] %vm878, %v870
        %880 = vst.msk [vmem:[%s542 + $0x8] sm:$0xff] %vm878, %v871
        %881 = vst.msk [vmem:[%s542 + $0x10] sm:$0xff] %vm878, %v872
        %882 = vst.msk [vmem:[%s542 + $0x18] sm:$0xff] %vm878, %v873
        %883 = vst.msk [vmem:[%s542 + $0x20] sm:$0xff] %vm878, %v874
        %884 = vst.msk [vmem:[%s542 + $0x28] sm:$0xff] %vm878, %v875
        %885 = vst.msk [vmem:[%s542 + $0x30] sm:$0xff] %vm878, %v876
        %886 = vst.msk [vmem:[%s542 + $0x38] sm:$0xff] %vm878, %v877
        %v887 = vsub.f32 0.0, %v793
        %v888 = vsub.f32 0.0, %v794
        %v889 = vsub.f32 0.0, %v795
        %v890 = vsub.f32 0.0, %v796
        %v891 = vsub.f32 0.0, %v797
        %v892 = vsub.f32 0.0, %v798
        %v893 = vsub.f32 0.0, %v799
        %v894 = vsub.f32 0.0, %v800
        %v895 = vmul.f32 %v887, 1.442695
        %v896 = vpow.pop %v895
        %v897 = vmul.f32 %v888, 1.442695
        %v898 = vpow.pop %v897
        %v899 = vmul.f32 %v889, 1.442695
        %v900 = vpow.pop %v899
        %v901 = vmul.f32 %v890, 1.442695
        %v902 = vpow.pop %v901
        %v903 = vmul.f32 %v891, 1.442695
        %v904 = vpow.pop %v903
        %v905 = vmul.f32 %v892, 1.442695
        %v906 = vpow.pop %v905
        %v907 = vmul.f32 %v893, 1.442695
        %v908 = vpow.pop %v907
        %v909 = vmul.f32 %v894, 1.442695
        %v910 = vpow.pop %v909
        %v911 = vadd.f32 %v896, 1.0
        %v912 = vadd.f32 %v898, 1.0
        %v913 = vadd.f32 %v900, 1.0
        %v914 = vadd.f32 %v902, 1.0
        %v915 = vadd.f32 %v904, 1.0
        %v916 = vadd.f32 %v906, 1.0
        %v917 = vadd.f32 %v908, 1.0
        %v918 = vadd.f32 %v910, 1.0
        %v919 = vrcp.pop %v911
        %v920 = vrcp.pop %v912
        %v921 = vrcp.pop %v913
        %v922 = vrcp.pop %v914
        %v923 = vrcp.pop %v915
        %v924 = vrcp.pop %v916
        %v925 = vrcp.pop %v917
        %v926 = vrcp.pop %v918
        %v927 = vmul.f32 %v793, %v919
        %v928 = vmul.f32 %v794, %v920
        %v929 = vmul.f32 %v795, %v921
        %v930 = vmul.f32 %v796, %v922
        %v931 = vmul.f32 %v797, %v923
        %v932 = vmul.f32 %v798, %v924
        %v933 = vmul.f32 %v799, %v925
        %v934 = vmul.f32 %v800, %v926
        %v935 = vpack.c.bf16 %v927, %v927
        %v936 = vpack.c.bf16 %v928, %v928
        %v937 = vpack.c.bf16 %v929, %v929
        %v938 = vpack.c.bf16 %v930, %v930
        %v939 = vpack.c.bf16 %v931, %v931
        %v940 = vpack.c.bf16 %v932, %v932
        %v941 = vpack.c.bf16 %v933, %v933
        %v942 = vpack.c.bf16 %v934, %v934
        %943 = vst.msk [vmem:[#allocation2 + $0x8] sm:$0xf] %vm568, %v935
        %944 = vst.msk [vmem:[#allocation2 + $0xc] sm:$0xf] %vm568, %v936
        %945 = vst.msk [vmem:[#allocation2 + $0x10] sm:$0xf] %vm568, %v937
        %946 = vst.msk [vmem:[#allocation2 + $0x14] sm:$0xf] %vm568, %v938
        %947 = vst.msk [vmem:[#allocation2 + $0x18] sm:$0xf] %vm568, %v939
        %948 = vst.msk [vmem:[#allocation2 + $0x1c] sm:$0xf] %vm568, %v940
        %949 = vst.msk [vmem:[#allocation2 + $0x20] sm:$0xf] %vm568, %v941
        %950 = vst.msk [vmem:[#allocation2 + $0x24] sm:$0xf] %vm568, %v942
        %v951 = vld [vmem:[#allocation2] sm:$0x8]
        %v952 = vld [vmem:[#allocation2 + $0x4] sm:$0xf]
        %v953 = vld [vmem:[#allocation2 + $0x8] sm:$0xf]
        %v954 = vld [vmem:[#allocation2 + $0xc] sm:$0xf]
        %v955 = vld [vmem:[#allocation2 + $0x10] sm:$0xf]
        %v956 = vld [vmem:[#allocation2 + $0x14] sm:$0xf]
        %v957 = vld [vmem:[#allocation2 + $0x18] sm:$0xf]
        %v958 = vld [vmem:[#allocation2 + $0x1c] sm:$0xf]
        %v959 = vld [vmem:[#allocation2 + $0x20] sm:$0xf]
        %961 = vset.pattern.permute.xlu0 0
        %962 = vperm.xlu0 %961, %v552
        %v963 = vpop.permute.xlu0 %962
        %v966 = vunpack.c.l.s4 839922192
        %v967 = vunpack.c.0.s8 %v966
        %v968 = vperm.slane %v963, %v967
        %970 = vset.pattern.permute.xlu0 0
        %971 = vperm.xlu0 %970, %v553
        %v972 = vpop.permute.xlu0 %971
        %v975 = vunpack.c.l.s4 839922192
        %v976 = vunpack.c.0.s8 %v975
        %v977 = vperm.slane %v972, %v976
        %979 = vset.pattern.permute.xlu0 0
        %980 = vperm.xlu0 %979, %v554
        %v981 = vpop.permute.xlu0 %980
        %v984 = vunpack.c.l.s4 839922192
        %v985 = vunpack.c.0.s8 %v984
        %v986 = vperm.slane %v981, %v985
        %988 = vset.pattern.permute.xlu0 0
        %989 = vperm.xlu0 %988, %v555
        %v990 = vpop.permute.xlu0 %989
        %v993 = vunpack.c.l.s4 839922192
        %v994 = vunpack.c.0.s8 %v993
        %v995 = vperm.slane %v990, %v994
        %997 = vset.pattern.permute.xlu0 0
        %998 = vperm.xlu0 %997, %v556
        %v999 = vpop.permute.xlu0 %998
        %v1002 = vunpack.c.l.s4 839922192
        %v1003 = vunpack.c.0.s8 %v1002
        %v1004 = vperm.slane %v999, %v1003
        %1006 = vset.pattern.permute.xlu0 0
        %1007 = vperm.xlu0 %1006, %v557
        %v1008 = vpop.permute.xlu0 %1007
        %v1011 = vunpack.c.l.s4 839922192
        %v1012 = vunpack.c.0.s8 %v1011
        %v1013 = vperm.slane %v1008, %v1012
        %1015 = vset.pattern.permute.xlu0 0
        %1016 = vperm.xlu0 %1015, %v558
        %v1017 = vpop.permute.xlu0 %1016
        %v1020 = vunpack.c.l.s4 839922192
        %v1021 = vunpack.c.0.s8 %v1020
        %v1022 = vperm.slane %v1017, %v1021
        %1024 = vset.pattern.permute.xlu0 0
        %1025 = vperm.xlu0 %1024, %v559
        %v1026 = vpop.permute.xlu0 %1025
        %v1029 = vunpack.c.l.s4 839922192
        %v1030 = vunpack.c.0.s8 %v1029
        %v1031 = vperm.slane %v1026, %v1030
        %v1032 = vunpack.c.l.bf16 %v951
        %v1033 = vunpack.c.l.bf16 %v952
        %v1034 = vunpack.c.l.bf16 %v953
        %v1035 = vunpack.c.l.bf16 %v954
        %v1036 = vunpack.c.l.bf16 %v955
        %v1037 = vunpack.c.l.bf16 %v956
        %v1038 = vunpack.c.l.bf16 %v957
        %v1039 = vunpack.c.l.bf16 %v958
        %v1040 = vunpack.c.l.bf16 %v959
        %v1041 = vunpack.c.l.bf16 %v968
        %v1042 = vunpack.c.l.bf16 %v977
        %v1043 = vunpack.c.l.bf16 %v986
        %v1044 = vunpack.c.l.bf16 %v995
        %v1045 = vunpack.c.l.bf16 %v1004
        %v1046 = vunpack.c.l.bf16 %v1013
        %v1047 = vunpack.c.l.bf16 %v1022
        %v1048 = vunpack.c.l.bf16 %v1031
        %vm1057 = vcmask 1046528
        %v1058 = vrot.slane %v1041, 1
        %v1059 = vrot.slane %v1042, 1
        %v1060 = vsel %vm1057, %v1058, %v1059
        %v1061 = vrot.slane %v1043, 1
        %v1062 = vsel %vm1057, %v1059, %v1061
        %v1063 = vrot.slane %v1044, 1
        %v1064 = vsel %vm1057, %v1061, %v1063
        %v1065 = vrot.slane %v1045, 1
        %v1066 = vsel %vm1057, %v1063, %v1065
        %v1067 = vrot.slane %v1046, 1
        %v1068 = vsel %vm1057, %v1065, %v1067
        %v1069 = vrot.slane %v1047, 1
        %v1070 = vsel %vm1057, %v1067, %v1069
        %v1071 = vrot.slane %v1048, 1
        %v1072 = vsel %vm1057, %v1069, %v1071
        %v1082 = vmul.f32 %v1032, %v1058
        %v1083 = vmul.f32 %v1033, %v1060
        %v1084 = vmul.f32 %v1034, %v1062
        %v1085 = vmul.f32 %v1035, %v1064
        %v1086 = vmul.f32 %v1036, %v1066
        %v1087 = vmul.f32 %v1037, %v1068
        %v1088 = vmul.f32 %v1038, %v1070
        %v1089 = vmul.f32 %v1039, %v1072
        %v1090 = vmul.f32 %v1040, %v1071
        %v1091 = vpack.c.bf16 %v1083, %v1082
        %v1092 = vpack.c.bf16 %v1085, %v1084
        %v1093 = vpack.c.bf16 %v1087, %v1086
        %v1094 = vpack.c.bf16 %v1089, %v1088
        %v1095 = vpack.c.bf16 %v1090, %v1090
        %v1096 = vld [vmem:[%s7] sm:$0xf]
        %v1097 = vld [vmem:[%s7 + $0x4] sm:$0xf]
        %v1098 = vld [vmem:[%s7 + $0x8] sm:$0xf]
        %v1099 = vld [vmem:[%s7 + $0xc] sm:$0xf]
        %s1100 = scalar_lea.vmem %s7, 16
        %v1101 = vld [vmem:[%s1100] sm:$0xf]
        %v1102 = vld [vmem:[%s1100 + $0x4] sm:$0xf]
        %v1103 = vld [vmem:[%s1100 + $0x8] sm:$0xf]
        %v1104 = vld [vmem:[%s1100 + $0xc] sm:$0xf]
        %v1113 = vunpack.c.l.b16 %v952
        %v1114 = vunpack.c.l.b16 %v953
        %v1115 = vunpack.c.l.b16 %v954
        %v1116 = vunpack.c.l.b16 %v955
        %v1117 = vunpack.c.l.b16 %v956
        %v1118 = vunpack.c.l.b16 %v957
        %v1119 = vunpack.c.l.b16 %v958
        %v1120 = vunpack.c.l.b16 %v959
        %v1121 = vpack.c.b16 %v1114, %v1113
        %v1122 = vpack.c.b16 %v1116, %v1115
        %v1123 = vpack.c.b16 %v1118, %v1117
        %v1124 = vpack.c.b16 %v1120, %v1119
        %v1129 = vunpack.c.l.b16 %v1101
        %v1130 = vunpack.c.l.b16 %v1102
        %v1131 = vunpack.c.l.b16 %v1103
        %v1132 = vunpack.c.l.b16 %v1104
        %v1133 = vpack.c.b16 %v1130, %v1129
        %v1134 = vpack.c.b16 %v1132, %v1131
        %v1138 = vsel %vm600, %v1121, 0
        %v1141 = vsel %vm600, %v1122, 0
        %v1144 = vsel %vm600, %v1123, 0
        %v1147 = vsel %vm600, %v1124, 0
        %1149 = vmatpush.bf16.msra.mxu0 0
        %1150 = vmatpush.bf16.msra.mxu0 0
        %1151 = vmatpush.bf16.msra.mxu0 0
        %1152 = vmatpush.bf16.msra.mxu0 0
        %1153 = vmatpush.bf16.msra.mxu0 0
        %1154 = vmatpush.bf16.msra.mxu0 0
        %1155 = vmatpush.bf16.msra.mxu0 %v1134
        %1156 = vmatpush.bf16.msra.mxu0 %v1133
        %1157 = vmatmul.bf16.gmra.mxu0 %v1138
        %v1158 = vpop.f32.mrf.mxu0
        %v1159 = vadd.f32 0.0, %v1158
        %v1160 = vpop.f32.mrf.mxu0
        %v1161 = vadd.f32 0.0, %v1160
        %1162 = vmatmul.bf16.gmra.mxu0 %v1141
        %v1163 = vpop.f32.mrf.mxu0
        %v1164 = vadd.f32 0.0, %v1163
        %v1165 = vpop.f32.mrf.mxu0
        %v1166 = vadd.f32 0.0, %v1165
        %1167 = vmatmul.bf16.gmra.mxu0 %v1144
        %v1168 = vpop.f32.mrf.mxu0
        %v1169 = vadd.f32 0.0, %v1168
        %v1170 = vpop.f32.mrf.mxu0
        %v1171 = vadd.f32 0.0, %v1170
        %1172 = vmatmul.bf16.gmra.mxu0 %v1147
        %v1173 = vpop.f32.mrf.mxu0
        %v1174 = vadd.f32 0.0, %v1173
        %v1175 = vpop.f32.mrf.mxu0
        %v1176 = vadd.f32 0.0, %v1175
        %1177 = vdwg.mxu0
        %vm1178 = vsmask.f32 4352
        %v1180 = vshrl.u32 %v1091, 16
        %v1182 = vrot.slane %v1180, 3
        %v1183 = vshll.u32 %v1091, 16
        %v1185 = vrot.slane %v1183, 4
        %v1186 = vor.u32 %v1182, %v1185
        %v1188 = vshrl.u32 %v1092, 16
        %v1190 = vrot.slane %v1188, 3
        %v1191 = vshll.u32 %v1092, 16
        %v1193 = vrot.slane %v1191, 4
        %v1194 = vor.u32 %v1190, %v1193
        %v1195 = vsel %vm1178, %v1186, %v1194
        %v1197 = vshrl.u32 %v1093, 16
        %v1199 = vrot.slane %v1197, 3
        %v1200 = vshll.u32 %v1093, 16
        %v1202 = vrot.slane %v1200, 4
        %v1203 = vor.u32 %v1199, %v1202
        %v1204 = vsel %vm1178, %v1194, %v1203
        %v1206 = vshrl.u32 %v1094, 16
        %v1208 = vrot.slane %v1206, 3
        %v1209 = vshll.u32 %v1094, 16
        %v1211 = vrot.slane %v1209, 4
        %v1212 = vor.u32 %v1208, %v1211
        %v1213 = vsel %vm1178, %v1203, %v1212
        %v1215 = vshrl.u32 %v1095, 16
        %v1217 = vrot.slane %v1215, 3
        %v1218 = vshll.u32 %v1095, 16
        %v1220 = vrot.slane %v1218, 4
        %v1221 = vor.u32 %v1217, %v1220
        %v1222 = vsel %vm1178, %v1212, %v1221
        %v1227 = vunpack.c.l.b16 %v1096
        %v1228 = vunpack.c.l.b16 %v1097
        %v1229 = vunpack.c.l.b16 %v1098
        %v1230 = vunpack.c.l.b16 %v1099
        %v1231 = vpack.c.b16 %v1228, %v1227
        %v1232 = vpack.c.b16 %v1230, %v1229
        %v1236 = vsel %vm600, %v1195, 0
        %v1239 = vsel %vm600, %v1204, 0
        %v1242 = vsel %vm600, %v1213, 0
        %v1245 = vsel %vm600, %v1222, 0
        %1247 = vmatpush.bf16.msra.mxu0 0
        %1248 = vmatpush.bf16.msra.mxu0 0
        %1249 = vmatpush.bf16.msra.mxu0 0
        %1250 = vmatpush.bf16.msra.mxu0 0
        %1251 = vmatpush.bf16.msra.mxu0 0
        %1252 = vmatpush.bf16.msra.mxu0 0
        %1253 = vmatpush.bf16.msra.mxu0 %v1232
        %1254 = vmatpush.bf16.msra.mxu0 %v1231
        %1255 = vmatmul.bf16.gmra.mxu0 %v1236
        %v1256 = vpop.f32.mrf.mxu0
        %v1257 = vadd.f32 %v1159, %v1256
        %v1258 = vpop.f32.mrf.mxu0
        %v1259 = vadd.f32 %v1161, %v1258
        %1260 = vmatmul.bf16.gmra.mxu0 %v1239
        %v1261 = vpop.f32.mrf.mxu0
        %v1262 = vadd.f32 %v1164, %v1261
        %v1263 = vpop.f32.mrf.mxu0
        %v1264 = vadd.f32 %v1166, %v1263
        %1265 = vmatmul.bf16.gmra.mxu0 %v1242
        %v1266 = vpop.f32.mrf.mxu0
        %v1267 = vadd.f32 %v1169, %v1266
        %v1268 = vpop.f32.mrf.mxu0
        %v1269 = vadd.f32 %v1171, %v1268
        %1270 = vmatmul.bf16.gmra.mxu0 %v1245
        %v1271 = vpop.f32.mrf.mxu0
        %v1272 = vadd.f32 %v1174, %v1271
        %v1273 = vpop.f32.mrf.mxu0
        %v1274 = vadd.f32 %v1176, %v1273
        %1275 = vdwg.mxu0
        %v1276 = vld [vmem:[#allocation2 + $0x4] sm:$0xf]
        %v1277 = vld [vmem:[#allocation2 + $0x8] sm:$0xf]
        %v1278 = vld [vmem:[#allocation2 + $0xc] sm:$0xf]
        %v1279 = vld [vmem:[#allocation2 + $0x10] sm:$0xf]
        %v1280 = vld [vmem:[#allocation2 + $0x14] sm:$0xf]
        %v1281 = vld [vmem:[#allocation2 + $0x18] sm:$0xf]
        %v1282 = vld [vmem:[#allocation2 + $0x1c] sm:$0xf]
        %v1283 = vld [vmem:[#allocation2 + $0x20] sm:$0xf]
        %v1284 = vld [vmem:[#allocation2 + $0x24] sm:$0x1]
        %1286 = vset.pattern.permute.xlu0 0
        %1287 = vperm.xlu0 %1286, %v560
        %v1288 = vpop.permute.xlu0 %1287
        %v1291 = vunpack.c.l.s4 839922192
        %v1292 = vunpack.c.0.s8 %v1291
        %v1293 = vperm.slane %v1288, %v1292
        %1295 = vset.pattern.permute.xlu0 0
        %1296 = vperm.xlu0 %1295, %v561
        %v1297 = vpop.permute.xlu0 %1296
        %v1300 = vunpack.c.l.s4 839922192
        %v1301 = vunpack.c.0.s8 %v1300
        %v1302 = vperm.slane %v1297, %v1301
        %1304 = vset.pattern.permute.xlu0 0
        %1305 = vperm.xlu0 %1304, %v562
        %v1306 = vpop.permute.xlu0 %1305
        %v1309 = vunpack.c.l.s4 839922192
        %v1310 = vunpack.c.0.s8 %v1309
        %v1311 = vperm.slane %v1306, %v1310
        %1313 = vset.pattern.permute.xlu0 0
        %1314 = vperm.xlu0 %1313, %v563
        %v1315 = vpop.permute.xlu0 %1314
        %v1318 = vunpack.c.l.s4 839922192
        %v1319 = vunpack.c.0.s8 %v1318
        %v1320 = vperm.slane %v1315, %v1319
        %1322 = vset.pattern.permute.xlu0 0
        %1323 = vperm.xlu0 %1322, %v564
        %v1324 = vpop.permute.xlu0 %1323
        %v1327 = vunpack.c.l.s4 839922192
        %v1328 = vunpack.c.0.s8 %v1327
        %v1329 = vperm.slane %v1324, %v1328
        %1331 = vset.pattern.permute.xlu0 0
        %1332 = vperm.xlu0 %1331, %v565
        %v1333 = vpop.permute.xlu0 %1332
        %v1336 = vunpack.c.l.s4 839922192
        %v1337 = vunpack.c.0.s8 %v1336
        %v1338 = vperm.slane %v1333, %v1337
        %1340 = vset.pattern.permute.xlu0 0
        %1341 = vperm.xlu0 %1340, %v566
        %v1342 = vpop.permute.xlu0 %1341
        %v1345 = vunpack.c.l.s4 839922192
        %v1346 = vunpack.c.0.s8 %v1345
        %v1347 = vperm.slane %v1342, %v1346
        %1349 = vset.pattern.permute.xlu0 0
        %1350 = vperm.xlu0 %1349, %v567
        %v1351 = vpop.permute.xlu0 %1350
        %v1354 = vunpack.c.l.s4 839922192
        %v1355 = vunpack.c.0.s8 %v1354
        %v1356 = vperm.slane %v1351, %v1355
        %v1357 = vunpack.c.l.bf16 %v1276
        %v1358 = vunpack.c.l.bf16 %v1277
        %v1359 = vunpack.c.l.bf16 %v1278
        %v1360 = vunpack.c.l.bf16 %v1279
        %v1361 = vunpack.c.l.bf16 %v1280
        %v1362 = vunpack.c.l.bf16 %v1281
        %v1363 = vunpack.c.l.bf16 %v1282
        %v1364 = vunpack.c.l.bf16 %v1283
        %v1365 = vunpack.c.l.bf16 %v1284
        %v1366 = vunpack.c.l.bf16 %v1293
        %v1367 = vunpack.c.l.bf16 %v1302
        %v1368 = vunpack.c.l.bf16 %v1311
        %v1369 = vunpack.c.l.bf16 %v1320
        %v1370 = vunpack.c.l.bf16 %v1329
        %v1371 = vunpack.c.l.bf16 %v1338
        %v1372 = vunpack.c.l.bf16 %v1347
        %v1373 = vunpack.c.l.bf16 %v1356
        %vm1382 = vcmask 1040384
        %v1383 = vrot.slane %v1366, 7
        %v1384 = vrot.slane %v1367, 7
        %v1385 = vsel %vm1382, %v1383, %v1384
        %v1386 = vrot.slane %v1368, 7
        %v1387 = vsel %vm1382, %v1384, %v1386
        %v1388 = vrot.slane %v1369, 7
        %v1389 = vsel %vm1382, %v1386, %v1388
        %v1390 = vrot.slane %v1370, 7
        %v1391 = vsel %vm1382, %v1388, %v1390
        %v1392 = vrot.slane %v1371, 7
        %v1393 = vsel %vm1382, %v1390, %v1392
        %v1394 = vrot.slane %v1372, 7
        %v1395 = vsel %vm1382, %v1392, %v1394
        %v1396 = vrot.slane %v1373, 7
        %v1397 = vsel %vm1382, %v1394, %v1396
        %v1407 = vmul.f32 %v1357, %v1383
        %v1408 = vmul.f32 %v1358, %v1385
        %v1409 = vmul.f32 %v1359, %v1387
        %v1410 = vmul.f32 %v1360, %v1389
        %v1411 = vmul.f32 %v1361, %v1391
        %v1412 = vmul.f32 %v1362, %v1393
        %v1413 = vmul.f32 %v1363, %v1395
        %v1414 = vmul.f32 %v1364, %v1397
        %v1415 = vmul.f32 %v1365, %v1396
        %v1416 = vpack.c.bf16 %v1408, %v1407
        %v1417 = vpack.c.bf16 %v1410, %v1409
        %v1418 = vpack.c.bf16 %v1412, %v1411
        %v1419 = vpack.c.bf16 %v1414, %v1413
        %v1420 = vpack.c.bf16 %v1415, %v1415
        %s1421 = scalar_lea.vmem %s7, 32
        %v1422 = vld [vmem:[%s1421] sm:$0xf]
        %v1423 = vld [vmem:[%s1421 + $0x4] sm:$0xf]
        %v1424 = vld [vmem:[%s1421 + $0x8] sm:$0xf]
        %v1425 = vld [vmem:[%s1421 + $0xc] sm:$0xf]
        %vm1426 = vsmask.f32 7424
        %v1428 = vshrl.u32 %v1416, 16
        %v1430 = vshll.u32 %v1416, 16
        %v1432 = vrot.slane %v1430, 1
        %v1433 = vor.u32 %v1428, %v1432
        %v1435 = vshll.u32 %v1417, 16
        %v1437 = vrot.slane %v1435, 1
        %v1438 = vsel %vm1426, %v1433, %v1437
        %v1439 = vshrl.u32 %v1417, 16
        %v1441 = vor.u32 %v1439, %v1437
        %v1443 = vshll.u32 %v1418, 16
        %v1445 = vrot.slane %v1443, 1
        %v1446 = vsel %vm1426, %v1441, %v1445
        %v1447 = vshrl.u32 %v1418, 16
        %v1449 = vor.u32 %v1447, %v1445
        %v1451 = vshll.u32 %v1419, 16
        %v1453 = vrot.slane %v1451, 1
        %v1454 = vsel %vm1426, %v1449, %v1453
        %v1455 = vshrl.u32 %v1419, 16
        %v1457 = vor.u32 %v1455, %v1453
        %v1459 = vshll.u32 %v1420, 16
        %v1461 = vrot.slane %v1459, 1
        %v1462 = vsel %vm1426, %v1457, %v1461
        %v1467 = vunpack.c.l.b16 %v1422
        %v1468 = vunpack.c.l.b16 %v1423
        %v1469 = vunpack.c.l.b16 %v1424
        %v1470 = vunpack.c.l.b16 %v1425
        %v1471 = vpack.c.b16 %v1468, %v1467
        %v1472 = vpack.c.b16 %v1470, %v1469
        %v1476 = vsel %vm600, %v1438, 0
        %v1479 = vsel %vm600, %v1446, 0
        %v1482 = vsel %vm600, %v1454, 0
        %v1485 = vsel %vm600, %v1462, 0
        %1487 = vmatpush.bf16.msra.mxu0 0
        %1488 = vmatpush.bf16.msra.mxu0 0
        %1489 = vmatpush.bf16.msra.mxu0 0
        %1490 = vmatpush.bf16.msra.mxu0 0
        %1491 = vmatpush.bf16.msra.mxu0 0
        %1492 = vmatpush.bf16.msra.mxu0 0
        %1493 = vmatpush.bf16.msra.mxu0 %v1472
        %1494 = vmatpush.bf16.msra.mxu0 %v1471
        %1495 = vmatmul.bf16.gmra.mxu0 %v1476
        %v1496 = vpop.f32.mrf.mxu0
        %v1497 = vadd.f32 0.0, %v1496
        %v1498 = vpop.f32.mrf.mxu0
        %v1499 = vadd.f32 0.0, %v1498
        %1500 = vmatmul.bf16.gmra.mxu0 %v1479
        %v1501 = vpop.f32.mrf.mxu0
        %v1502 = vadd.f32 0.0, %v1501
        %v1503 = vpop.f32.mrf.mxu0
        %v1504 = vadd.f32 0.0, %v1503
        %1505 = vmatmul.bf16.gmra.mxu0 %v1482
        %v1506 = vpop.f32.mrf.mxu0
        %v1507 = vadd.f32 0.0, %v1506
        %v1508 = vpop.f32.mrf.mxu0
        %v1509 = vadd.f32 0.0, %v1508
        %1510 = vmatmul.bf16.gmra.mxu0 %v1485
        %v1511 = vpop.f32.mrf.mxu0
        %v1512 = vadd.f32 0.0, %v1511
        %v1513 = vpop.f32.mrf.mxu0
        %v1514 = vadd.f32 0.0, %v1513
        %1515 = vdwg.mxu0
        %v1516 = vadd.f32 %v1257, %v1497
        %v1517 = vadd.f32 %v1259, %v1499
        %v1518 = vadd.f32 %v1262, %v1502
        %v1519 = vadd.f32 %v1264, %v1504
        %v1520 = vadd.f32 %v1267, %v1507
        %v1521 = vadd.f32 %v1269, %v1509
        %v1522 = vadd.f32 %v1272, %v1512
        %v1523 = vadd.f32 %v1274, %v1514
        %v1524 = vld [vmem:[#allocation2 + $0x4] sm:$0x8]
        %v1525 = vld [vmem:[#allocation2 + $0x24] sm:$0xf]
        %v1526 = vunpack.c.l.bf16 %v1524
        %v1527 = vunpack.c.l.bf16 %v1525
        %v1528 = vmul.f32 %v1526, %v1058
        %v1529 = vmul.f32 %v1358, %v1060
        %v1530 = vmul.f32 %v1359, %v1062
        %v1531 = vmul.f32 %v1360, %v1064
        %v1532 = vmul.f32 %v1361, %v1066
        %v1533 = vmul.f32 %v1362, %v1068
        %v1534 = vmul.f32 %v1363, %v1070
        %v1535 = vmul.f32 %v1364, %v1072
        %v1536 = vmul.f32 %v1527, %v1071
        %v1537 = vpack.c.bf16 %v1529, %v1528
        %v1538 = vpack.c.bf16 %v1531, %v1530
        %v1539 = vpack.c.bf16 %v1533, %v1532
        %v1540 = vpack.c.bf16 %v1535, %v1534
        %v1541 = vpack.c.bf16 %v1536, %v1536
        %s1542 = scalar_lea.vmem %s7, 48
        %v1543 = vld [vmem:[%s1542] sm:$0xf]
        %v1544 = vld [vmem:[%s1542 + $0x4] sm:$0xf]
        %v1545 = vld [vmem:[%s1542 + $0x8] sm:$0xf]
        %v1546 = vld [vmem:[%s1542 + $0xc] sm:$0xf]
        %v1548 = vshrl.u32 %v1537, 16
        %v1550 = vrot.slane %v1548, 3
        %v1551 = vshll.u32 %v1537, 16
        %v1553 = vrot.slane %v1551, 4
        %v1554 = vor.u32 %v1550, %v1553
        %v1556 = vshrl.u32 %v1538, 16
        %v1558 = vrot.slane %v1556, 3
        %v1559 = vshll.u32 %v1538, 16
        %v1561 = vrot.slane %v1559, 4
        %v1562 = vor.u32 %v1558, %v1561
        %v1563 = vsel %vm1178, %v1554, %v1562
        %v1565 = vshrl.u32 %v1539, 16
        %v1567 = vrot.slane %v1565, 3
        %v1568 = vshll.u32 %v1539, 16
        %v1570 = vrot.slane %v1568, 4
        %v1571 = vor.u32 %v1567, %v1570
        %v1572 = vsel %vm1178, %v1562, %v1571
        %v1574 = vshrl.u32 %v1540, 16
        %v1576 = vrot.slane %v1574, 3
        %v1577 = vshll.u32 %v1540, 16
        %v1579 = vrot.slane %v1577, 4
        %v1580 = vor.u32 %v1576, %v1579
        %v1581 = vsel %vm1178, %v1571, %v1580
        %v1583 = vshrl.u32 %v1541, 16
        %v1585 = vrot.slane %v1583, 3
        %v1586 = vshll.u32 %v1541, 16
        %v1588 = vrot.slane %v1586, 4
        %v1589 = vor.u32 %v1585, %v1588
        %v1590 = vsel %vm1178, %v1580, %v1589
        %v1595 = vunpack.c.l.b16 %v1543
        %v1596 = vunpack.c.l.b16 %v1544
        %v1597 = vunpack.c.l.b16 %v1545
        %v1598 = vunpack.c.l.b16 %v1546
        %v1599 = vpack.c.b16 %v1596, %v1595
        %v1600 = vpack.c.b16 %v1598, %v1597
        %v1604 = vsel %vm600, %v1563, 0
        %v1607 = vsel %vm600, %v1572, 0
        %v1610 = vsel %vm600, %v1581, 0
        %v1613 = vsel %vm600, %v1590, 0
        %1615 = vmatpush.bf16.msra.mxu0 0
        %1616 = vmatpush.bf16.msra.mxu0 0
        %1617 = vmatpush.bf16.msra.mxu0 0
        %1618 = vmatpush.bf16.msra.mxu0 0
        %1619 = vmatpush.bf16.msra.mxu0 0
        %1620 = vmatpush.bf16.msra.mxu0 0
        %1621 = vmatpush.bf16.msra.mxu0 %v1600
        %1622 = vmatpush.bf16.msra.mxu0 %v1599
        %1623 = vmatmul.bf16.gmra.mxu0 %v1604
        %v1624 = vpop.f32.mrf.mxu0
        %v1625 = vadd.f32 0.0, %v1624
        %v1626 = vpop.f32.mrf.mxu0
        %v1627 = vadd.f32 0.0, %v1626
        %1628 = vmatmul.bf16.gmra.mxu0 %v1607
        %v1629 = vpop.f32.mrf.mxu0
        %v1630 = vadd.f32 0.0, %v1629
        %v1631 = vpop.f32.mrf.mxu0
        %v1632 = vadd.f32 0.0, %v1631
        %1633 = vmatmul.bf16.gmra.mxu0 %v1610
        %v1634 = vpop.f32.mrf.mxu0
        %v1635 = vadd.f32 0.0, %v1634
        %v1636 = vpop.f32.mrf.mxu0
        %v1637 = vadd.f32 0.0, %v1636
        %1638 = vmatmul.bf16.gmra.mxu0 %v1613
        %v1639 = vpop.f32.mrf.mxu0
        %v1640 = vadd.f32 0.0, %v1639
        %v1641 = vpop.f32.mrf.mxu0
        %v1642 = vadd.f32 0.0, %v1641
        %1643 = vdwg.mxu0
        %v1644 = vadd.f32 %v1516, %v1625
        %v1645 = vadd.f32 %v1517, %v1627
        %v1646 = vadd.f32 %v1518, %v1630
        %v1647 = vadd.f32 %v1519, %v1632
        %v1648 = vadd.f32 %v1520, %v1635
        %v1649 = vadd.f32 %v1521, %v1637
        %v1650 = vadd.f32 %v1522, %v1640
        %v1651 = vadd.f32 %v1523, %v1642
        %s1652 = scalar_lea.vmem %s7, 64
        %v1653 = vld [vmem:[%s1652] sm:$0xf]
        %v1654 = vld [vmem:[%s1652 + $0x4] sm:$0xf]
        %v1655 = vld [vmem:[%s1652 + $0x8] sm:$0xf]
        %v1656 = vld [vmem:[%s1652 + $0xc] sm:$0xf]
        %v1665 = vunpack.c.l.b16 %v1277
        %v1666 = vunpack.c.l.b16 %v1278
        %v1667 = vunpack.c.l.b16 %v1279
        %v1668 = vunpack.c.l.b16 %v1280
        %v1669 = vunpack.c.l.b16 %v1281
        %v1670 = vunpack.c.l.b16 %v1282
        %v1671 = vunpack.c.l.b16 %v1283
        %v1672 = vunpack.c.l.b16 %v1525
        %v1673 = vpack.c.b16 %v1666, %v1665
        %v1674 = vpack.c.b16 %v1668, %v1667
        %v1675 = vpack.c.b16 %v1670, %v1669
        %v1676 = vpack.c.b16 %v1672, %v1671
        %v1681 = vunpack.c.l.b16 %v1653
        %v1682 = vunpack.c.l.b16 %v1654
        %v1683 = vunpack.c.l.b16 %v1655
        %v1684 = vunpack.c.l.b16 %v1656
        %v1685 = vpack.c.b16 %v1682, %v1681
        %v1686 = vpack.c.b16 %v1684, %v1683
        %v1690 = vsel %vm600, %v1673, 0
        %v1693 = vsel %vm600, %v1674, 0
        %v1696 = vsel %vm600, %v1675, 0
        %v1699 = vsel %vm600, %v1676, 0
        %1701 = vmatpush.bf16.msra.mxu0 0
        %1702 = vmatpush.bf16.msra.mxu0 0
        %1703 = vmatpush.bf16.msra.mxu0 0
        %1704 = vmatpush.bf16.msra.mxu0 0
        %1705 = vmatpush.bf16.msra.mxu0 0
        %1706 = vmatpush.bf16.msra.mxu0 0
        %1707 = vmatpush.bf16.msra.mxu0 %v1686
        %1708 = vmatpush.bf16.msra.mxu0 %v1685
        %1709 = vmatmul.bf16.gmra.mxu0 %v1690
        %v1710 = vpop.f32.mrf.mxu0
        %v1711 = vadd.f32 0.0, %v1710
        %v1712 = vpop.f32.mrf.mxu0
        %v1713 = vadd.f32 0.0, %v1712
        %1714 = vmatmul.bf16.gmra.mxu0 %v1693
        %v1715 = vpop.f32.mrf.mxu0
        %v1716 = vadd.f32 0.0, %v1715
        %v1717 = vpop.f32.mrf.mxu0
        %v1718 = vadd.f32 0.0, %v1717
        %1719 = vmatmul.bf16.gmra.mxu0 %v1696
        %v1720 = vpop.f32.mrf.mxu0
        %v1721 = vadd.f32 0.0, %v1720
        %v1722 = vpop.f32.mrf.mxu0
        %v1723 = vadd.f32 0.0, %v1722
        %1724 = vmatmul.bf16.gmra.mxu0 %v1699
        %v1725 = vpop.f32.mrf.mxu0
        %v1726 = vadd.f32 0.0, %v1725
        %v1727 = vpop.f32.mrf.mxu0
        %v1728 = vadd.f32 0.0, %v1727
        %1729 = vdwg.mxu0
        %v1730 = vadd.f32 %v1644, %v1711
        %v1731 = vadd.f32 %v1645, %v1713
        %v1732 = vadd.f32 %v1646, %v1716
        %v1733 = vadd.f32 %v1647, %v1718
        %v1734 = vadd.f32 %v1648, %v1721
        %v1735 = vadd.f32 %v1649, %v1723
        %v1736 = vadd.f32 %v1650, %v1726
        %v1737 = vadd.f32 %v1651, %v1728
        %v1738 = vld [vmem:[#allocation2 + $0x8] sm:$0xf]
        %v1739 = vld [vmem:[#allocation2 + $0xc] sm:$0xf]
        %v1740 = vld [vmem:[#allocation2 + $0x10] sm:$0xf]
        %v1741 = vld [vmem:[#allocation2 + $0x14] sm:$0xf]
        %v1742 = vld [vmem:[#allocation2 + $0x18] sm:$0xf]
        %v1743 = vld [vmem:[#allocation2 + $0x1c] sm:$0xf]
        %v1744 = vld [vmem:[#allocation2 + $0x20] sm:$0xf]
        %v1745 = vld [vmem:[#allocation2 + $0x24] sm:$0xf]
        %v1746 = vld [vmem:[#allocation2 + $0x28] sm:$0x1]
        %v1747 = vunpack.c.l.bf16 %v1738
        %v1748 = vunpack.c.l.bf16 %v1739
        %v1749 = vunpack.c.l.bf16 %v1740
        %v1750 = vunpack.c.l.bf16 %v1741
        %v1751 = vunpack.c.l.bf16 %v1742
        %v1752 = vunpack.c.l.bf16 %v1743
        %v1753 = vunpack.c.l.bf16 %v1744
        %v1754 = vunpack.c.l.bf16 %v1745
        %v1755 = vunpack.c.l.bf16 %v1746
        %v1756 = vmul.f32 %v1747, %v1383
        %v1757 = vmul.f32 %v1748, %v1385
        %v1758 = vmul.f32 %v1749, %v1387
        %v1759 = vmul.f32 %v1750, %v1389
        %v1760 = vmul.f32 %v1751, %v1391
        %v1761 = vmul.f32 %v1752, %v1393
        %v1762 = vmul.f32 %v1753, %v1395
        %v1763 = vmul.f32 %v1754, %v1397
        %v1764 = vmul.f32 %v1755, %v1396
        %v1765 = vpack.c.bf16 %v1757, %v1756
        %v1766 = vpack.c.bf16 %v1759, %v1758
        %v1767 = vpack.c.bf16 %v1761, %v1760
        %v1768 = vpack.c.bf16 %v1763, %v1762
        %v1769 = vpack.c.bf16 %v1764, %v1764
        %s1770 = scalar_lea.vmem %s7, 80
        %v1771 = vld [vmem:[%s1770] sm:$0xf]
        %v1772 = vld [vmem:[%s1770 + $0x4] sm:$0xf]
        %v1773 = vld [vmem:[%s1770 + $0x8] sm:$0xf]
        %v1774 = vld [vmem:[%s1770 + $0xc] sm:$0xf]
        %v1776 = vshrl.u32 %v1765, 16
        %v1778 = vshll.u32 %v1765, 16
        %v1780 = vrot.slane %v1778, 1
        %v1781 = vor.u32 %v1776, %v1780
        %v1783 = vshll.u32 %v1766, 16
        %v1785 = vrot.slane %v1783, 1
        %v1786 = vsel %vm1426, %v1781, %v1785
        %v1787 = vshrl.u32 %v1766, 16
        %v1789 = vor.u32 %v1787, %v1785
        %v1791 = vshll.u32 %v1767, 16
        %v1793 = vrot.slane %v1791, 1
        %v1794 = vsel %vm1426, %v1789, %v1793
        %v1795 = vshrl.u32 %v1767, 16
        %v1797 = vor.u32 %v1795, %v1793
        %v1799 = vshll.u32 %v1768, 16
        %v1801 = vrot.slane %v1799, 1
        %v1802 = vsel %vm1426, %v1797, %v1801
        %v1803 = vshrl.u32 %v1768, 16
        %v1805 = vor.u32 %v1803, %v1801
        %v1807 = vshll.u32 %v1769, 16
        %v1809 = vrot.slane %v1807, 1
        %v1810 = vsel %vm1426, %v1805, %v1809
        %v1815 = vunpack.c.l.b16 %v1771
        %v1816 = vunpack.c.l.b16 %v1772
        %v1817 = vunpack.c.l.b16 %v1773
        %v1818 = vunpack.c.l.b16 %v1774
        %v1819 = vpack.c.b16 %v1816, %v1815
        %v1820 = vpack.c.b16 %v1818, %v1817
        %v1824 = vsel %vm600, %v1786, 0
        %v1827 = vsel %vm600, %v1794, 0
        %v1830 = vsel %vm600, %v1802, 0
        %v1833 = vsel %vm600, %v1810, 0
        %1835 = vmatpush.bf16.msra.mxu0 0
        %1836 = vmatpush.bf16.msra.mxu0 0
        %1837 = vmatpush.bf16.msra.mxu0 0
        %1838 = vmatpush.bf16.msra.mxu0 0
        %1839 = vmatpush.bf16.msra.mxu0 0
        %1840 = vmatpush.bf16.msra.mxu0 0
        %1841 = vmatpush.bf16.msra.mxu0 %v1820
        %1842 = vmatpush.bf16.msra.mxu0 %v1819
        %1843 = vmatmul.bf16.gmra.mxu0 %v1824
        %v1844 = vpop.f32.mrf.mxu0
        %v1845 = vadd.f32 0.0, %v1844
        %v1846 = vpop.f32.mrf.mxu0
        %v1847 = vadd.f32 0.0, %v1846
        %1848 = vmatmul.bf16.gmra.mxu0 %v1827
        %v1849 = vpop.f32.mrf.mxu0
        %v1850 = vadd.f32 0.0, %v1849
        %v1851 = vpop.f32.mrf.mxu0
        %v1852 = vadd.f32 0.0, %v1851
        %1853 = vmatmul.bf16.gmra.mxu0 %v1830
        %v1854 = vpop.f32.mrf.mxu0
        %v1855 = vadd.f32 0.0, %v1854
        %v1856 = vpop.f32.mrf.mxu0
        %v1857 = vadd.f32 0.0, %v1856
        %1858 = vmatmul.bf16.gmra.mxu0 %v1833
        %v1859 = vpop.f32.mrf.mxu0
        %v1860 = vadd.f32 0.0, %v1859
        %v1861 = vpop.f32.mrf.mxu0
        %v1862 = vadd.f32 0.0, %v1861
        %1863 = vdwg.mxu0
        %v1864 = vadd.f32 %v1730, %v1845
        %v1865 = vadd.f32 %v1731, %v1847
        %v1866 = vadd.f32 %v1732, %v1850
        %v1867 = vadd.f32 %v1733, %v1852
        %v1868 = vadd.f32 %v1734, %v1855
        %v1869 = vadd.f32 %v1735, %v1857
        %v1870 = vadd.f32 %v1736, %v1860
        %v1871 = vadd.f32 %v1737, %v1862
        %v1872 = vld [vmem:[#allocation2 + $0x8] sm:$0x8]
        %v1873 = vld [vmem:[#allocation2 + $0x28] sm:$0xf]
        %v1874 = vunpack.c.l.bf16 %v1872
        %v1875 = vunpack.c.l.bf16 %v1873
        %v1876 = vmul.f32 %v1874, %v1058
        %v1877 = vmul.f32 %v1748, %v1060
        %v1878 = vmul.f32 %v1749, %v1062
        %v1879 = vmul.f32 %v1750, %v1064
        %v1880 = vmul.f32 %v1751, %v1066
        %v1881 = vmul.f32 %v1752, %v1068
        %v1882 = vmul.f32 %v1753, %v1070
        %v1883 = vmul.f32 %v1754, %v1072
        %v1884 = vmul.f32 %v1875, %v1071
        %v1885 = vpack.c.bf16 %v1877, %v1876
        %v1886 = vpack.c.bf16 %v1879, %v1878
        %v1887 = vpack.c.bf16 %v1881, %v1880
        %v1888 = vpack.c.bf16 %v1883, %v1882
        %v1889 = vpack.c.bf16 %v1884, %v1884
        %s1890 = scalar_lea.vmem %s7, 96
        %v1891 = vld [vmem:[%s1890] sm:$0xf]
        %v1892 = vld [vmem:[%s1890 + $0x4] sm:$0xf]
        %v1893 = vld [vmem:[%s1890 + $0x8] sm:$0xf]
        %v1894 = vld [vmem:[%s1890 + $0xc] sm:$0xf]
        %v1896 = vshrl.u32 %v1885, 16
        %v1898 = vrot.slane %v1896, 3
        %v1899 = vshll.u32 %v1885, 16
        %v1901 = vrot.slane %v1899, 4
        %v1902 = vor.u32 %v1898, %v1901
        %v1904 = vshrl.u32 %v1886, 16
        %v1906 = vrot.slane %v1904, 3
        %v1907 = vshll.u32 %v1886, 16
        %v1909 = vrot.slane %v1907, 4
        %v1910 = vor.u32 %v1906, %v1909
        %v1911 = vsel %vm1178, %v1902, %v1910
        %v1913 = vshrl.u32 %v1887, 16
        %v1915 = vrot.slane %v1913, 3
        %v1916 = vshll.u32 %v1887, 16
        %v1918 = vrot.slane %v1916, 4
        %v1919 = vor.u32 %v1915, %v1918
        %v1920 = vsel %vm1178, %v1910, %v1919
        %v1922 = vshrl.u32 %v1888, 16
        %v1924 = vrot.slane %v1922, 3
        %v1925 = vshll.u32 %v1888, 16
        %v1927 = vrot.slane %v1925, 4
        %v1928 = vor.u32 %v1924, %v1927
        %v1929 = vsel %vm1178, %v1919, %v1928
        %v1931 = vshrl.u32 %v1889, 16
        %v1933 = vrot.slane %v1931, 3
        %v1934 = vshll.u32 %v1889, 16
        %v1936 = vrot.slane %v1934, 4
        %v1937 = vor.u32 %v1933, %v1936
        %v1938 = vsel %vm1178, %v1928, %v1937
        %v1943 = vunpack.c.l.b16 %v1891
        %v1944 = vunpack.c.l.b16 %v1892
        %v1945 = vunpack.c.l.b16 %v1893
        %v1946 = vunpack.c.l.b16 %v1894
        %v1947 = vpack.c.b16 %v1944, %v1943
        %v1948 = vpack.c.b16 %v1946, %v1945
        %v1952 = vsel %vm600, %v1911, 0
        %v1955 = vsel %vm600, %v1920, 0
        %v1958 = vsel %vm600, %v1929, 0
        %v1961 = vsel %vm600, %v1938, 0
        %1963 = vmatpush.bf16.msra.mxu0 0
        %1964 = vmatpush.bf16.msra.mxu0 0
        %1965 = vmatpush.bf16.msra.mxu0 0
        %1966 = vmatpush.bf16.msra.mxu0 0
        %1967 = vmatpush.bf16.msra.mxu0 0
        %1968 = vmatpush.bf16.msra.mxu0 0
        %1969 = vmatpush.bf16.msra.mxu0 %v1948
        %1970 = vmatpush.bf16.msra.mxu0 %v1947
        %1971 = vmatmul.bf16.gmra.mxu0 %v1952
        %v1972 = vpop.f32.mrf.mxu0
        %v1973 = vadd.f32 0.0, %v1972
        %v1974 = vpop.f32.mrf.mxu0
        %v1975 = vadd.f32 0.0, %v1974
        %1976 = vmatmul.bf16.gmra.mxu0 %v1955
        %v1977 = vpop.f32.mrf.mxu0
        %v1978 = vadd.f32 0.0, %v1977
        %v1979 = vpop.f32.mrf.mxu0
        %v1980 = vadd.f32 0.0, %v1979
        %1981 = vmatmul.bf16.gmra.mxu0 %v1958
        %v1982 = vpop.f32.mrf.mxu0
        %v1983 = vadd.f32 0.0, %v1982
        %v1984 = vpop.f32.mrf.mxu0
        %v1985 = vadd.f32 0.0, %v1984
        %1986 = vmatmul.bf16.gmra.mxu0 %v1961
        %v1987 = vpop.f32.mrf.mxu0
        %v1988 = vadd.f32 0.0, %v1987
        %v1989 = vpop.f32.mrf.mxu0
        %v1990 = vadd.f32 0.0, %v1989
        %1991 = vdwg.mxu0
        %v1992 = vadd.f32 %v1864, %v1973
        %v1993 = vadd.f32 %v1865, %v1975
        %v1994 = vadd.f32 %v1866, %v1978
        %v1995 = vadd.f32 %v1867, %v1980
        %v1996 = vadd.f32 %v1868, %v1983
        %v1997 = vadd.f32 %v1869, %v1985
        %v1998 = vadd.f32 %v1870, %v1988
        %v1999 = vadd.f32 %v1871, %v1990
        %s2000 = scalar_lea.vmem %s7, 112
        %v2001 = vld [vmem:[%s2000] sm:$0xf]
        %v2002 = vld [vmem:[%s2000 + $0x4] sm:$0xf]
        %v2003 = vld [vmem:[%s2000 + $0x8] sm:$0xf]
        %v2004 = vld [vmem:[%s2000 + $0xc] sm:$0xf]
        %v2013 = vunpack.c.l.b16 %v1739
        %v2014 = vunpack.c.l.b16 %v1740
        %v2015 = vunpack.c.l.b16 %v1741
        %v2016 = vunpack.c.l.b16 %v1742
        %v2017 = vunpack.c.l.b16 %v1743
        %v2018 = vunpack.c.l.b16 %v1744
        %v2019 = vunpack.c.l.b16 %v1745
        %v2020 = vunpack.c.l.b16 %v1873
        %v2021 = vpack.c.b16 %v2014, %v2013
        %v2022 = vpack.c.b16 %v2016, %v2015
        %v2023 = vpack.c.b16 %v2018, %v2017
        %v2024 = vpack.c.b16 %v2020, %v2019
        %v2029 = vunpack.c.l.b16 %v2001
        %v2030 = vunpack.c.l.b16 %v2002
        %v2031 = vunpack.c.l.b16 %v2003
        %v2032 = vunpack.c.l.b16 %v2004
        %v2033 = vpack.c.b16 %v2030, %v2029
        %v2034 = vpack.c.b16 %v2032, %v2031
        %v2038 = vsel %vm600, %v2021, 0
        %v2041 = vsel %vm600, %v2022, 0
        %v2044 = vsel %vm600, %v2023, 0
        %v2047 = vsel %vm600, %v2024, 0
        %2049 = vmatpush.bf16.msra.mxu0 0
        %2050 = vmatpush.bf16.msra.mxu0 0
        %2051 = vmatpush.bf16.msra.mxu0 0
        %2052 = vmatpush.bf16.msra.mxu0 0
        %2053 = vmatpush.bf16.msra.mxu0 0
        %2054 = vmatpush.bf16.msra.mxu0 0
        %2055 = vmatpush.bf16.msra.mxu0 %v2034
        %2056 = vmatpush.bf16.msra.mxu0 %v2033
        %2057 = vmatmul.bf16.gmra.mxu0 %v2038
        %v2058 = vpop.f32.mrf.mxu0
        %v2059 = vadd.f32 0.0, %v2058
        %v2060 = vpop.f32.mrf.mxu0
        %v2061 = vadd.f32 0.0, %v2060
        %2062 = vmatmul.bf16.gmra.mxu0 %v2041
        %v2063 = vpop.f32.mrf.mxu0
        %v2064 = vadd.f32 0.0, %v2063
        %v2065 = vpop.f32.mrf.mxu0
        %v2066 = vadd.f32 0.0, %v2065
        %2067 = vmatmul.bf16.gmra.mxu0 %v2044
        %v2068 = vpop.f32.mrf.mxu0
        %v2069 = vadd.f32 0.0, %v2068
        %v2070 = vpop.f32.mrf.mxu0
        %v2071 = vadd.f32 0.0, %v2070
        %2072 = vmatmul.bf16.gmra.mxu0 %v2047
        %v2073 = vpop.f32.mrf.mxu0
        %v2074 = vadd.f32 0.0, %v2073
        %v2075 = vpop.f32.mrf.mxu0
        %v2076 = vadd.f32 0.0, %v2075
        %2077 = vdwg.mxu0
        %v2078 = vadd.f32 %v1992, %v2059
        %v2079 = vadd.f32 %v1993, %v2061
        %v2080 = vadd.f32 %v1994, %v2064
        %v2081 = vadd.f32 %v1995, %v2066
        %v2082 = vadd.f32 %v1996, %v2069
        %v2083 = vadd.f32 %v1997, %v2071
        %v2084 = vadd.f32 %v1998, %v2074
        %v2085 = vadd.f32 %v1999, %v2076
        %v2086 = vld [vmem:[#allocation2 + $0xc] sm:$0xf]
        %v2087 = vld [vmem:[#allocation2 + $0x10] sm:$0xf]
        %v2088 = vld [vmem:[#allocation2 + $0x14] sm:$0xf]
        %v2089 = vld [vmem:[#allocation2 + $0x18] sm:$0xf]
        %v2090 = vld [vmem:[#allocation2 + $0x1c] sm:$0xf]
        %v2091 = vld [vmem:[#allocation2 + $0x20] sm:$0xf]
        %v2092 = vld [vmem:[#allocation2 + $0x24] sm:$0xf]
        %v2093 = vld [vmem:[#allocation2 + $0x28] sm:$0xf]
        %v2094 = vld [vmem:[#allocation2 + $0x2c] sm:$0x1]
        %v2095 = vunpack.c.l.bf16 %v2086
        %v2096 = vunpack.c.l.bf16 %v2087
        %v2097 = vunpack.c.l.bf16 %v2088
        %v2098 = vunpack.c.l.bf16 %v2089
        %v2099 = vunpack.c.l.bf16 %v2090
        %v2100 = vunpack.c.l.bf16 %v2091
        %v2101 = vunpack.c.l.bf16 %v2092
        %v2102 = vunpack.c.l.bf16 %v2093
        %v2103 = vunpack.c.l.bf16 %v2094
        %v2104 = vmul.f32 %v2095, %v1383
        %v2105 = vmul.f32 %v2096, %v1385
        %v2106 = vmul.f32 %v2097, %v1387
        %v2107 = vmul.f32 %v2098, %v1389
        %v2108 = vmul.f32 %v2099, %v1391
        %v2109 = vmul.f32 %v2100, %v1393
        %v2110 = vmul.f32 %v2101, %v1395
        %v2111 = vmul.f32 %v2102, %v1397
        %v2112 = vmul.f32 %v2103, %v1396
        %v2113 = vpack.c.bf16 %v2105, %v2104
        %v2114 = vpack.c.bf16 %v2107, %v2106
        %v2115 = vpack.c.bf16 %v2109, %v2108
        %v2116 = vpack.c.bf16 %v2111, %v2110
        %v2117 = vpack.c.bf16 %v2112, %v2112
        %s2118 = scalar_lea.vmem %s7, 128
        %v2119 = vld [vmem:[%s2118] sm:$0xf]
        %v2120 = vld [vmem:[%s2118 + $0x4] sm:$0xf]
        %v2121 = vld [vmem:[%s2118 + $0x8] sm:$0xf]
        %v2122 = vld [vmem:[%s2118 + $0xc] sm:$0xf]
        %v2124 = vshrl.u32 %v2113, 16
        %v2126 = vshll.u32 %v2113, 16
        %v2128 = vrot.slane %v2126, 1
        %v2129 = vor.u32 %v2124, %v2128
        %v2131 = vshll.u32 %v2114, 16
        %v2133 = vrot.slane %v2131, 1
        %v2134 = vsel %vm1426, %v2129, %v2133
        %v2135 = vshrl.u32 %v2114, 16
        %v2137 = vor.u32 %v2135, %v2133
        %v2139 = vshll.u32 %v2115, 16
        %v2141 = vrot.slane %v2139, 1
        %v2142 = vsel %vm1426, %v2137, %v2141
        %v2143 = vshrl.u32 %v2115, 16
        %v2145 = vor.u32 %v2143, %v2141
        %v2147 = vshll.u32 %v2116, 16
        %v2149 = vrot.slane %v2147, 1
        %v2150 = vsel %vm1426, %v2145, %v2149
        %v2151 = vshrl.u32 %v2116, 16
        %v2153 = vor.u32 %v2151, %v2149
        %v2155 = vshll.u32 %v2117, 16
        %v2157 = vrot.slane %v2155, 1
        %v2158 = vsel %vm1426, %v2153, %v2157
        %v2163 = vunpack.c.l.b16 %v2119
        %v2164 = vunpack.c.l.b16 %v2120
        %v2165 = vunpack.c.l.b16 %v2121
        %v2166 = vunpack.c.l.b16 %v2122
        %v2167 = vpack.c.b16 %v2164, %v2163
        %v2168 = vpack.c.b16 %v2166, %v2165
        %v2172 = vsel %vm600, %v2134, 0
        %v2175 = vsel %vm600, %v2142, 0
        %v2178 = vsel %vm600, %v2150, 0
        %v2181 = vsel %vm600, %v2158, 0
        %2183 = vmatpush.bf16.msra.mxu0 0
        %2184 = vmatpush.bf16.msra.mxu0 0
        %2185 = vmatpush.bf16.msra.mxu0 0
        %2186 = vmatpush.bf16.msra.mxu0 0
        %2187 = vmatpush.bf16.msra.mxu0 0
        %2188 = vmatpush.bf16.msra.mxu0 0
        %2189 = vmatpush.bf16.msra.mxu0 %v2168
        %2190 = vmatpush.bf16.msra.mxu0 %v2167
        %2191 = vmatmul.bf16.gmra.mxu0 %v2172
        %v2192 = vpop.f32.mrf.mxu0
        %v2193 = vadd.f32 0.0, %v2192
        %v2194 = vpop.f32.mrf.mxu0
        %v2195 = vadd.f32 0.0, %v2194
        %2196 = vmatmul.bf16.gmra.mxu0 %v2175
        %v2197 = vpop.f32.mrf.mxu0
        %v2198 = vadd.f32 0.0, %v2197
        %v2199 = vpop.f32.mrf.mxu0
        %v2200 = vadd.f32 0.0, %v2199
        %2201 = vmatmul.bf16.gmra.mxu0 %v2178
        %v2202 = vpop.f32.mrf.mxu0
        %v2203 = vadd.f32 0.0, %v2202
        %v2204 = vpop.f32.mrf.mxu0
        %v2205 = vadd.f32 0.0, %v2204
        %2206 = vmatmul.bf16.gmra.mxu0 %v2181
        %v2207 = vpop.f32.mrf.mxu0
        %v2208 = vadd.f32 0.0, %v2207
        %v2209 = vpop.f32.mrf.mxu0
        %v2210 = vadd.f32 0.0, %v2209
        %2211 = vdwg.mxu0
        %v2212 = vadd.f32 %v2078, %v2193
        %v2213 = vadd.f32 %v2079, %v2195
        %v2214 = vadd.f32 %v2080, %v2198
        %v2215 = vadd.f32 %v2081, %v2200
        %v2216 = vadd.f32 %v2082, %v2203
        %v2217 = vadd.f32 %v2083, %v2205
        %v2218 = vadd.f32 %v2084, %v2208
        %v2219 = vadd.f32 %v2085, %v2210
        %v2220 = vld [vmem:[%s8] sm:$0x1]
        %v2221 = vld [vmem:[%s550] sm:$0x1]
        %v2222 = vadd.f32 %v2220, %v2221
        %v2224 = vperm.slane %v2222, 0
        %v2226 = vadd.f32 %v2212, %v2224
        %v2227 = vadd.f32 %v2213, %v2224
        %v2228 = vadd.f32 %v2214, %v2224
        %v2229 = vadd.f32 %v2215, %v2224
        %v2230 = vadd.f32 %v2216, %v2224
        %v2231 = vadd.f32 %v2217, %v2224
        %v2232 = vadd.f32 %v2218, %v2224
        %v2233 = vadd.f32 %v2219, %v2224
        %v2234 = vld [vmem:[%s9] sm:$0xff]
        %v2235 = vld [vmem:[%s9 + $0x8] sm:$0xff]
        %v2236 = vld [vmem:[%s9 + $0x10] sm:$0xff]
        %v2237 = vld [vmem:[%s9 + $0x18] sm:$0xff]
        %v2238 = vld [vmem:[%s9 + $0x20] sm:$0xff]
        %v2239 = vld [vmem:[%s9 + $0x28] sm:$0xff]
        %v2240 = vld [vmem:[%s9 + $0x30] sm:$0xff]
        %v2241 = vld [vmem:[%s9 + $0x38] sm:$0xff]
        %v2242 = vld [vmem:[%s10] sm:$0x1]
        %v2243 = vld [vmem:[%s11] sm:$0x1]
        %v2244 = vsel %vm878, %v2226, 0.0
        %v2245 = vsel %vm878, %v2227, 0.0
        %v2246 = vadd.f32 %v2244, %v2245
        %v2247 = vsel %vm878, %v2228, 0.0
        %v2248 = vadd.f32 %v2246, %v2247
        %v2249 = vsel %vm878, %v2229, 0.0
        %v2250 = vadd.f32 %v2248, %v2249
        %v2251 = vsel %vm878, %v2230, 0.0
        %v2252 = vadd.f32 %v2250, %v2251
        %v2253 = vsel %vm878, %v2231, 0.0
        %v2254 = vadd.f32 %v2252, %v2253
        %v2255 = vsel %vm878, %v2232, 0.0
        %v2256 = vadd.f32 %v2254, %v2255
        %v2257 = vsel %vm878, %v2233, 0.0
        %v2258 = vadd.f32 %v2256, %v2257
        %v2259 = vrot.slane %v2258, 4
        %v2260 = vadd.f32 %v2258, %v2259
        %v2261 = vrot.slane %v2260, 2
        %v2262 = vadd.f32 %v2260, %v2261
        %v2263 = vrot.slane %v2262, 1
        %v2264 = vadd.f32 %v2262, %v2263
        %v2265 = vmul.f32 %v2226, %v2226
        %v2266 = vmul.f32 %v2227, %v2227
        %v2267 = vmul.f32 %v2228, %v2228
        %v2268 = vmul.f32 %v2229, %v2229
        %v2269 = vmul.f32 %v2230, %v2230
        %v2270 = vmul.f32 %v2231, %v2231
        %v2271 = vmul.f32 %v2232, %v2232
        %v2272 = vmul.f32 %v2233, %v2233
        %v2273 = vsel %vm878, %v2265, 0.0
        %v2274 = vsel %vm878, %v2266, 0.0
        %v2275 = vadd.f32 %v2273, %v2274
        %v2276 = vsel %vm878, %v2267, 0.0
        %v2277 = vadd.f32 %v2275, %v2276
        %v2278 = vsel %vm878, %v2268, 0.0
        %v2279 = vadd.f32 %v2277, %v2278
        %v2280 = vsel %vm878, %v2269, 0.0
        %v2281 = vadd.f32 %v2279, %v2280
        %v2282 = vsel %vm878, %v2270, 0.0
        %v2283 = vadd.f32 %v2281, %v2282
        %v2284 = vsel %vm878, %v2271, 0.0
        %v2285 = vadd.f32 %v2283, %v2284
        %v2286 = vsel %vm878, %v2272, 0.0
        %v2287 = vadd.f32 %v2285, %v2286
        %v2288 = vrot.slane %v2287, 4
        %v2289 = vadd.f32 %v2287, %v2288
        %v2290 = vrot.slane %v2289, 2
        %v2291 = vadd.f32 %v2289, %v2290
        %v2292 = vrot.slane %v2291, 1
        %v2293 = vadd.f32 %v2291, %v2292
        %v2295 = vsel %vm878, %v2264, 0
        %2297 = vmatpush.msra.mxu0 0.0
        %2298 = vmatpush.msra.mxu0 0.0
        %2299 = vmatpush.msra.mxu0 0.0
        %2300 = vmatpush.msra.mxu0 0.0
        %2301 = vmatpush.msra.mxu0 0.0
        %2302 = vmatpush.msra.mxu0 0.0
        %2303 = vmatpush.msra.mxu0 0.0
        %2304 = vmatpush.msra.mxu0 0.0
        %2305 = vmatpush.msra.mxu0 %v2241
        %2306 = vmatpush.msra.mxu0 %v2240
        %2307 = vmatpush.msra.mxu0 %v2239
        %2308 = vmatpush.msra.mxu0 %v2238
        %2309 = vmatpush.msra.mxu0 %v2237
        %2310 = vmatpush.msra.mxu0 %v2236
        %2311 = vmatpush.msra.mxu0 %v2235
        %2312 = vmatpush.msra.mxu0 %v2234
        %2313 = vmatmul.f32.gmra.mxu0 %v2295
        %v2314 = vpop.f32.mrf.mxu0
        %v2315 = vadd.f32 0.0, %v2314
        %2316 = vdwg.mxu0
        %v2318 = vsel %vm878, %v2293, 0
        %2320 = vmatpush.msra.mxu0 0.0
        %2321 = vmatpush.msra.mxu0 0.0
        %2322 = vmatpush.msra.mxu0 0.0
        %2323 = vmatpush.msra.mxu0 0.0
        %2324 = vmatpush.msra.mxu0 0.0
        %2325 = vmatpush.msra.mxu0 0.0
        %2326 = vmatpush.msra.mxu0 0.0
        %2327 = vmatpush.msra.mxu0 0.0
        %2328 = vmatpush.msra.mxu0 %v2241
        %2329 = vmatpush.msra.mxu0 %v2240
        %2330 = vmatpush.msra.mxu0 %v2239
        %2331 = vmatpush.msra.mxu0 %v2238
        %2332 = vmatpush.msra.mxu0 %v2237
        %2333 = vmatpush.msra.mxu0 %v2236
        %2334 = vmatpush.msra.mxu0 %v2235
        %2335 = vmatpush.msra.mxu0 %v2234
        %2336 = vmatmul.f32.gmra.mxu0 %v2318
        %v2337 = vpop.f32.mrf.mxu0
        %v2338 = vadd.f32 0.0, %v2337
        %2339 = vdwg.mxu0
        %v2340 = vrcp.pop 128.0
        %v2341 = vmul.f32 128.0, %v2340
        %v2342 = vsub.f32 1.0, %v2341
        %v2343 = vmul.f32 %v2340, %v2342
        %v2344 = vadd.f32 %v2340, %v2343
        %vm2345 = vweird.f32 %v2340
        %v2346 = vsel %vm2345, %v2340, %v2344
        %v2347 = vmul.f32 %v2315, %v2346
        %v2348 = vmul.f32 %v2338, %v2346
        %v2349 = vmul.f32 %v2347, %v2347
        %v2350 = vsub.f32 %v2348, %v2349
        %v2351 = vmax.f32 %v2350, 0.0
        %v2352 = vadd.f32 %v2351, 1e-05
        %v2353 = vrsqrt.pop %v2352
        %v2354 = vmul.f32 %v2353, %v2352
        %v2355 = vmul.f32 %v2354, %v2353
        %v2356 = vmul.f32 0.5, %v2355
        %v2357 = vsub.f32 1.5, %v2356
        %v2358 = vmul.f32 %v2353, %v2357
        %vm2359 = vweird.f32 %v2352
        %vm2360 = vweird.f32 %v2353
        %vm2361 = vmor %vm2359, %vm2360
        %v2362 = vsel %vm2361, %v2353, %v2358
        %v2364 = vsel %vm600, %v2347, 0
        %v2367 = vsel %vm600, %v2234, 0
        %v2370 = vsel %vm600, %v2235, 0
        %v2373 = vsel %vm600, %v2236, 0
        %v2376 = vsel %vm600, %v2237, 0
        %v2379 = vsel %vm600, %v2238, 0
        %v2382 = vsel %vm600, %v2239, 0
        %v2385 = vsel %vm600, %v2240, 0
        %v2388 = vsel %vm600, %v2241, 0
        %2390 = vmatpush.xpose.msra.mxu0 0.0
        %2391 = vmatpush.xpose.msra.mxu0 0.0
        %2392 = vmatpush.xpose.msra.mxu0 0.0
        %2393 = vmatpush.xpose.msra.mxu0 0.0
        %2394 = vmatpush.xpose.msra.mxu0 0.0
        %2395 = vmatpush.xpose.msra.mxu0 0.0
        %2396 = vmatpush.xpose.msra.mxu0 0.0
        %2397 = vmatpush.xpose.msra.mxu0 0.0
        %2398 = vmatpush.xpose.msra.mxu0 %v2388
        %2399 = vmatpush.xpose.msra.mxu0 %v2385
        %2400 = vmatpush.xpose.msra.mxu0 %v2382
        %2401 = vmatpush.xpose.msra.mxu0 %v2379
        %2402 = vmatpush.xpose.msra.mxu0 %v2376
        %2403 = vmatpush.xpose.msra.mxu0 %v2373
        %2404 = vmatpush.xpose.msra.mxu0 %v2370
        %2405 = vmatpush.xpose.msra.mxu0 %v2367
        %2406 = vmatmul.f32.gmra.mxu0 %v2364
        %v2407 = vpop.f32.mrf.mxu0
        %v2408 = vadd.f32 0.0, %v2407
        %2409 = vdwg.mxu0
        %v2411 = vsel %vm600, %v2362, 0
        %2413 = vmatpush.xpose.msra.mxu0 0.0
        %2414 = vmatpush.xpose.msra.mxu0 0.0
        %2415 = vmatpush.xpose.msra.mxu0 0.0
        %2416 = vmatpush.xpose.msra.mxu0 0.0
        %2417 = vmatpush.xpose.msra.mxu0 0.0
        %2418 = vmatpush.xpose.msra.mxu0 0.0
        %2419 = vmatpush.xpose.msra.mxu0 0.0
        %2420 = vmatpush.xpose.msra.mxu0 0.0
        %2421 = vmatpush.xpose.msra.mxu0 %v2388
        %2422 = vmatpush.xpose.msra.mxu0 %v2385
        %2423 = vmatpush.xpose.msra.mxu0 %v2382
        %2424 = vmatpush.xpose.msra.mxu0 %v2379
        %2425 = vmatpush.xpose.msra.mxu0 %v2376
        %2426 = vmatpush.xpose.msra.mxu0 %v2373
        %2427 = vmatpush.xpose.msra.mxu0 %v2370
        %2428 = vmatpush.xpose.msra.mxu0 %v2367
        %2429 = vmatmul.f32.gmra.mxu0 %v2411
        %v2430 = vpop.f32.mrf.mxu0
        %v2431 = vadd.f32 0.0, %v2430
        %2432 = vdwg.mxu0
        %v2433 = vmul.f32 %v2431, %v2242
        %v2434 = vmul.f32 %v2408, %v2433
        %v2435 = vsub.f32 %v2243, %v2434
        %v2436 = vperm.slane %v2433, 0
        %v2437 = vmul.f32 %v2226, %v2436
        %v2438 = vmul.f32 %v2227, %v2436
        %v2439 = vmul.f32 %v2228, %v2436
        %v2440 = vmul.f32 %v2229, %v2436
        %v2441 = vmul.f32 %v2230, %v2436
        %v2442 = vmul.f32 %v2231, %v2436
        %v2443 = vmul.f32 %v2232, %v2436
        %v2444 = vmul.f32 %v2233, %v2436
        %v2446 = vperm.slane %v2435, 0
        %v2448 = vadd.f32 %v2437, %v2446
        %v2449 = vadd.f32 %v2438, %v2446
        %v2450 = vadd.f32 %v2439, %v2446
        %v2451 = vadd.f32 %v2440, %v2446
        %v2452 = vadd.f32 %v2441, %v2446
        %v2453 = vadd.f32 %v2442, %v2446
        %v2454 = vadd.f32 %v2443, %v2446
        %v2455 = vadd.f32 %v2444, %v2446
        %v2456 = vsub.f32 0.0, %v2448
        %v2457 = vsub.f32 0.0, %v2449
        %v2458 = vsub.f32 0.0, %v2450
        %v2459 = vsub.f32 0.0, %v2451
        %v2460 = vsub.f32 0.0, %v2452
        %v2461 = vsub.f32 0.0, %v2453
        %v2462 = vsub.f32 0.0, %v2454
        %v2463 = vsub.f32 0.0, %v2455
        %v2464 = vmul.f32 %v2456, 1.442695
        %v2465 = vpow.pop %v2464
        %v2466 = vmul.f32 %v2457, 1.442695
        %v2467 = vpow.pop %v2466
        %v2468 = vmul.f32 %v2458, 1.442695
        %v2469 = vpow.pop %v2468
        %v2470 = vmul.f32 %v2459, 1.442695
        %v2471 = vpow.pop %v2470
        %v2472 = vmul.f32 %v2460, 1.442695
        %v2473 = vpow.pop %v2472
        %v2474 = vmul.f32 %v2461, 1.442695
        %v2475 = vpow.pop %v2474
        %v2476 = vmul.f32 %v2462, 1.442695
        %v2477 = vpow.pop %v2476
        %v2478 = vmul.f32 %v2463, 1.442695
        %v2479 = vpow.pop %v2478
        %v2480 = vadd.f32 %v2465, 1.0
        %v2481 = vadd.f32 %v2467, 1.0
        %v2482 = vadd.f32 %v2469, 1.0
        %v2483 = vadd.f32 %v2471, 1.0
        %v2484 = vadd.f32 %v2473, 1.0
        %v2485 = vadd.f32 %v2475, 1.0
        %v2486 = vadd.f32 %v2477, 1.0
        %v2487 = vadd.f32 %v2479, 1.0
        %v2488 = vrcp.pop %v2480
        %v2489 = vrcp.pop %v2481
        %v2490 = vrcp.pop %v2482
        %v2491 = vrcp.pop %v2483
        %v2492 = vrcp.pop %v2484
        %v2493 = vrcp.pop %v2485
        %v2494 = vrcp.pop %v2486
        %v2495 = vrcp.pop %v2487
        %v2496 = vmul.f32 %v2448, %v2488
        %v2497 = vmul.f32 %v2449, %v2489
        %v2498 = vmul.f32 %v2450, %v2490
        %v2499 = vmul.f32 %v2451, %v2491
        %v2500 = vmul.f32 %v2452, %v2492
        %v2501 = vmul.f32 %v2453, %v2493
        %v2502 = vmul.f32 %v2454, %v2494
        %v2503 = vmul.f32 %v2455, %v2495
        %v2504 = vpack.c.bf16 %v2496, %v2496
        %v2505 = vpack.c.bf16 %v2497, %v2497
        %v2506 = vpack.c.bf16 %v2498, %v2498
        %v2507 = vpack.c.bf16 %v2499, %v2499
        %v2508 = vpack.c.bf16 %v2500, %v2500
        %v2509 = vpack.c.bf16 %v2501, %v2501
        %v2510 = vpack.c.bf16 %v2502, %v2502
        %v2511 = vpack.c.bf16 %v2503, %v2503
        %2512 = vst.msk [vmem:[#allocation3 + $0x8] sm:$0xf] %vm573, %v2504
        %2513 = vst.msk [vmem:[#allocation3 + $0xc] sm:$0xf] %vm573, %v2505
        %2514 = vst.msk [vmem:[#allocation3 + $0x10] sm:$0xf] %vm573, %v2506
        %2515 = vst.msk [vmem:[#allocation3 + $0x14] sm:$0xf] %vm573, %v2507
        %2516 = vst.msk [vmem:[#allocation3 + $0x18] sm:$0xf] %vm573, %v2508
        %2517 = vst.msk [vmem:[#allocation3 + $0x1c] sm:$0xf] %vm573, %v2509
        %2518 = vst.msk [vmem:[#allocation3 + $0x20] sm:$0xf] %vm573, %v2510
        %2519 = vst.msk [vmem:[#allocation3 + $0x24] sm:$0xf] %vm573, %v2511
        %v2520 = vld [vmem:[#allocation3] sm:$0x8]
        %v2521 = vld [vmem:[#allocation3 + $0x4] sm:$0xf]
        %v2522 = vld [vmem:[#allocation3 + $0x8] sm:$0xf]
        %v2523 = vld [vmem:[#allocation3 + $0xc] sm:$0xf]
        %v2524 = vld [vmem:[#allocation3 + $0x10] sm:$0xf]
        %v2525 = vld [vmem:[#allocation3 + $0x14] sm:$0xf]
        %v2526 = vld [vmem:[#allocation3 + $0x18] sm:$0xf]
        %v2527 = vld [vmem:[#allocation3 + $0x1c] sm:$0xf]
        %v2528 = vld [vmem:[#allocation3 + $0x20] sm:$0xf]
        %v2529 = vunpack.c.l.bf16 %v2520
        %v2530 = vunpack.c.l.bf16 %v2521
        %v2531 = vunpack.c.l.bf16 %v2522
        %v2532 = vunpack.c.l.bf16 %v2523
        %v2533 = vunpack.c.l.bf16 %v2524
        %v2534 = vunpack.c.l.bf16 %v2525
        %v2535 = vunpack.c.l.bf16 %v2526
        %v2536 = vunpack.c.l.bf16 %v2527
        %v2537 = vunpack.c.l.bf16 %v2528
        %v2538 = vmul.f32 %v2529, %v1058
        %v2539 = vmul.f32 %v2530, %v1060
        %v2540 = vmul.f32 %v2531, %v1062
        %v2541 = vmul.f32 %v2532, %v1064
        %v2542 = vmul.f32 %v2533, %v1066
        %v2543 = vmul.f32 %v2534, %v1068
        %v2544 = vmul.f32 %v2535, %v1070
        %v2545 = vmul.f32 %v2536, %v1072
        %v2546 = vmul.f32 %v2537, %v1071
        %v2547 = vpack.c.bf16 %v2539, %v2538
        %v2548 = vpack.c.bf16 %v2541, %v2540
        %v2549 = vpack.c.bf16 %v2543, %v2542
        %v2550 = vpack.c.bf16 %v2545, %v2544
        %v2551 = vpack.c.bf16 %v2546, %v2546
        %v2552 = vld [vmem:[%s542] sm:$0xff]
        %v2553 = vld [vmem:[%s542 + $0x8] sm:$0xff]
        %v2554 = vld [vmem:[%s542 + $0x10] sm:$0xff]
        %v2555 = vld [vmem:[%s542 + $0x18] sm:$0xff]
        %v2556 = vld [vmem:[%s542 + $0x20] sm:$0xff]
        %v2557 = vld [vmem:[%s542 + $0x28] sm:$0xff]
        %v2558 = vld [vmem:[%s542 + $0x30] sm:$0xff]
        %v2559 = vld [vmem:[%s542 + $0x38] sm:$0xff]
        %v2560 = vld [vmem:[#allocation4] sm:$0xf]
        %v2561 = vld [vmem:[#allocation4 + $0x4] sm:$0xf]
        %v2562 = vld [vmem:[#allocation4 + $0x8] sm:$0xf]
        %v2563 = vld [vmem:[#allocation4 + $0xc] sm:$0xf]
        %v2564 = vld [vmem:[#allocation4 + $0x10] sm:$0xf]
        %v2565 = vld [vmem:[#allocation4 + $0x14] sm:$0xf]
        %v2566 = vld [vmem:[#allocation4 + $0x18] sm:$0xf]
        %v2567 = vld [vmem:[#allocation4 + $0x1c] sm:$0xf]
        %v2569 = vshrl.u32 %v2547, 16
        %v2571 = vrot.slane %v2569, 3
        %v2572 = vshll.u32 %v2547, 16
        %v2574 = vrot.slane %v2572, 4
        %v2575 = vor.u32 %v2571, %v2574
        %v2577 = vshrl.u32 %v2548, 16
        %v2579 = vrot.slane %v2577, 3
        %v2580 = vshll.u32 %v2548, 16
        %v2582 = vrot.slane %v2580, 4
        %v2583 = vor.u32 %v2579, %v2582
        %v2584 = vsel %vm1178, %v2575, %v2583
        %v2586 = vshrl.u32 %v2549, 16
        %v2588 = vrot.slane %v2586, 3
        %v2589 = vshll.u32 %v2549, 16
        %v2591 = vrot.slane %v2589, 4
        %v2592 = vor.u32 %v2588, %v2591
        %v2593 = vsel %vm1178, %v2583, %v2592
        %v2595 = vshrl.u32 %v2550, 16
        %v2597 = vrot.slane %v2595, 3
        %v2598 = vshll.u32 %v2550, 16
        %v2600 = vrot.slane %v2598, 4
        %v2601 = vor.u32 %v2597, %v2600
        %v2602 = vsel %vm1178, %v2592, %v2601
        %v2604 = vshrl.u32 %v2551, 16
        %v2606 = vrot.slane %v2604, 3
        %v2607 = vshll.u32 %v2551, 16
        %v2609 = vrot.slane %v2607, 4
        %v2610 = vor.u32 %v2606, %v2609
        %v2611 = vsel %vm1178, %v2601, %v2610
        %v2620 = vunpack.c.l.b16 %v2560
        %v2621 = vunpack.c.l.b16 %v2561
        %v2622 = vunpack.c.l.b16 %v2562
        %v2623 = vunpack.c.l.b16 %v2563
        %v2624 = vunpack.c.l.b16 %v2564
        %v2625 = vunpack.c.l.b16 %v2565
        %v2626 = vunpack.c.l.b16 %v2566
        %v2627 = vunpack.c.l.b16 %v2567
        %v2628 = vpack.c.b16 %v2621, %v2620
        %v2629 = vpack.c.b16 %v2623, %v2622
        %v2630 = vpack.c.b16 %v2625, %v2624
        %v2631 = vpack.c.b16 %v2627, %v2626
        %v2637 = vsel %vm878, %v2584, 0
        %v2640 = vsel %vm878, %v2593, 0
        %v2643 = vsel %vm878, %v2602, 0
        %v2646 = vsel %vm878, %v2611, 0
        %2648 = vmatpush.bf16.msra.mxu0 0
        %2649 = vmatpush.bf16.msra.mxu0 0
        %2650 = vmatpush.bf16.msra.mxu0 0
        %2651 = vmatpush.bf16.msra.mxu0 0
        %2652 = vmatpush.bf16.msra.mxu0 %v2631
        %2653 = vmatpush.bf16.msra.mxu0 %v2630
        %2654 = vmatpush.bf16.msra.mxu0 %v2629
        %2655 = vmatpush.bf16.msra.mxu0 %v2628
        %2656 = vmatmul.bf16.gmra.mxu0 %v2637
        %v2657 = vpop.f32.mrf.mxu0
        %v2658 = vadd.f32 0.0, %v2657
        %v2659 = vpop.f32.mrf.mxu0
        %v2660 = vadd.f32 0.0, %v2659
        %2661 = vmatmul.bf16.gmra.mxu0 %v2640
        %v2662 = vpop.f32.mrf.mxu0
        %v2663 = vadd.f32 0.0, %v2662
        %v2664 = vpop.f32.mrf.mxu0
        %v2665 = vadd.f32 0.0, %v2664
        %2666 = vmatmul.bf16.gmra.mxu0 %v2643
        %v2667 = vpop.f32.mrf.mxu0
        %v2668 = vadd.f32 0.0, %v2667
        %v2669 = vpop.f32.mrf.mxu0
        %v2670 = vadd.f32 0.0, %v2669
        %2671 = vmatmul.bf16.gmra.mxu0 %v2646
        %v2672 = vpop.f32.mrf.mxu0
        %v2673 = vadd.f32 0.0, %v2672
        %v2674 = vpop.f32.mrf.mxu0
        %v2675 = vadd.f32 0.0, %v2674
        %2676 = vdwg.mxu0
        %v2677 = vadd.f32 %v2552, %v2658
        %v2678 = vadd.f32 %v2553, %v2660
        %v2679 = vadd.f32 %v2554, %v2663
        %v2680 = vadd.f32 %v2555, %v2665
        %v2681 = vadd.f32 %v2556, %v2668
        %v2682 = vadd.f32 %v2557, %v2670
        %v2683 = vadd.f32 %v2558, %v2673
        %v2684 = vadd.f32 %v2559, %v2675
        %2685 = vst.msk [vmem:[%s542] sm:$0xff] %vm878, %v2677
        %2686 = vst.msk [vmem:[%s542 + $0x8] sm:$0xff] %vm878, %v2678
        %2687 = vst.msk [vmem:[%s542 + $0x10] sm:$0xff] %vm878, %v2679
        %2688 = vst.msk [vmem:[%s542 + $0x18] sm:$0xff] %vm878, %v2680
        %2689 = vst.msk [vmem:[%s542 + $0x20] sm:$0xff] %vm878, %v2681
        %2690 = vst.msk [vmem:[%s542 + $0x28] sm:$0xff] %vm878, %v2682
        %2691 = vst.msk [vmem:[%s542 + $0x30] sm:$0xff] %vm878, %v2683
        %2692 = vst.msk [vmem:[%s542 + $0x38] sm:$0xff] %vm878, %v2684
        %v2693 = vld [vmem:[#allocation3 + $0x4] sm:$0xf]
        %v2694 = vld [vmem:[#allocation3 + $0x8] sm:$0xf]
        %v2695 = vld [vmem:[#allocation3 + $0xc] sm:$0xf]
        %v2696 = vld [vmem:[#allocation3 + $0x10] sm:$0xf]
        %v2697 = vld [vmem:[#allocation3 + $0x14] sm:$0xf]
        %v2698 = vld [vmem:[#allocation3 + $0x18] sm:$0xf]
        %v2699 = vld [vmem:[#allocation3 + $0x1c] sm:$0xf]
        %v2700 = vld [vmem:[#allocation3 + $0x20] sm:$0xf]
        %v2701 = vld [vmem:[%s542] sm:$0xff]
        %v2702 = vld [vmem:[%s542 + $0x8] sm:$0xff]
        %v2703 = vld [vmem:[%s542 + $0x10] sm:$0xff]
        %v2704 = vld [vmem:[%s542 + $0x18] sm:$0xff]
        %v2705 = vld [vmem:[%s542 + $0x20] sm:$0xff]
        %v2706 = vld [vmem:[%s542 + $0x28] sm:$0xff]
        %v2707 = vld [vmem:[%s542 + $0x30] sm:$0xff]
        %v2708 = vld [vmem:[%s542 + $0x38] sm:$0xff]
        %s2709 = scalar_lea.vmem [#allocation4], 32
        %v2710 = vld [vmem:[%s2709] sm:$0xf]
        %v2711 = vld [vmem:[%s2709 + $0x4] sm:$0xf]
        %v2712 = vld [vmem:[%s2709 + $0x8] sm:$0xf]
        %v2713 = vld [vmem:[%s2709 + $0xc] sm:$0xf]
        %v2714 = vld [vmem:[%s2709 + $0x10] sm:$0xf]
        %v2715 = vld [vmem:[%s2709 + $0x14] sm:$0xf]
        %v2716 = vld [vmem:[%s2709 + $0x18] sm:$0xf]
        %v2717 = vld [vmem:[%s2709 + $0x1c] sm:$0xf]
        %v2726 = vunpack.c.l.b16 %v2693
        %v2727 = vunpack.c.l.b16 %v2694
        %v2728 = vunpack.c.l.b16 %v2695
        %v2729 = vunpack.c.l.b16 %v2696
        %v2730 = vunpack.c.l.b16 %v2697
        %v2731 = vunpack.c.l.b16 %v2698
        %v2732 = vunpack.c.l.b16 %v2699
        %v2733 = vunpack.c.l.b16 %v2700
        %v2734 = vpack.c.b16 %v2727, %v2726
        %v2735 = vpack.c.b16 %v2729, %v2728
        %v2736 = vpack.c.b16 %v2731, %v2730
        %v2737 = vpack.c.b16 %v2733, %v2732
        %v2746 = vunpack.c.l.b16 %v2710
        %v2747 = vunpack.c.l.b16 %v2711
        %v2748 = vunpack.c.l.b16 %v2712
        %v2749 = vunpack.c.l.b16 %v2713
        %v2750 = vunpack.c.l.b16 %v2714
        %v2751 = vunpack.c.l.b16 %v2715
        %v2752 = vunpack.c.l.b16 %v2716
        %v2753 = vunpack.c.l.b16 %v2717
        %v2754 = vpack.c.b16 %v2747, %v2746
        %v2755 = vpack.c.b16 %v2749, %v2748
        %v2756 = vpack.c.b16 %v2751, %v2750
        %v2757 = vpack.c.b16 %v2753, %v2752
        %v2763 = vsel %vm878, %v2734, 0
        %v2766 = vsel %vm878, %v2735, 0
        %v2769 = vsel %vm878, %v2736, 0
        %v2772 = vsel %vm878, %v2737, 0
        %2774 = vmatpush.bf16.msra.mxu0 0
        %2775 = vmatpush.bf16.msra.mxu0 0
        %2776 = vmatpush.bf16.msra.mxu0 0
        %2777 = vmatpush.bf16.msra.mxu0 0
        %2778 = vmatpush.bf16.msra.mxu0 %v2757
        %2779 = vmatpush.bf16.msra.mxu0 %v2756
        %2780 = vmatpush.bf16.msra.mxu0 %v2755
        %2781 = vmatpush.bf16.msra.mxu0 %v2754
        %2782 = vmatmul.bf16.gmra.mxu0 %v2763
        %v2783 = vpop.f32.mrf.mxu0
        %v2784 = vadd.f32 0.0, %v2783
        %v2785 = vpop.f32.mrf.mxu0
        %v2786 = vadd.f32 0.0, %v2785
        %2787 = vmatmul.bf16.gmra.mxu0 %v2766
        %v2788 = vpop.f32.mrf.mxu0
        %v2789 = vadd.f32 0.0, %v2788
        %v2790 = vpop.f32.mrf.mxu0
        %v2791 = vadd.f32 0.0, %v2790
        %2792 = vmatmul.bf16.gmra.mxu0 %v2769
        %v2793 = vpop.f32.mrf.mxu0
        %v2794 = vadd.f32 0.0, %v2793
        %v2795 = vpop.f32.mrf.mxu0
        %v2796 = vadd.f32 0.0, %v2795
        %2797 = vmatmul.bf16.gmra.mxu0 %v2772
        %v2798 = vpop.f32.mrf.mxu0
        %v2799 = vadd.f32 0.0, %v2798
        %v2800 = vpop.f32.mrf.mxu0
        %v2801 = vadd.f32 0.0, %v2800
        %2802 = vdwg.mxu0
        %v2803 = vadd.f32 %v2701, %v2784
        %v2804 = vadd.f32 %v2702, %v2786
        %v2805 = vadd.f32 %v2703, %v2789
        %v2806 = vadd.f32 %v2704, %v2791
        %v2807 = vadd.f32 %v2705, %v2794
        %v2808 = vadd.f32 %v2706, %v2796
        %v2809 = vadd.f32 %v2707, %v2799
        %v2810 = vadd.f32 %v2708, %v2801
        %2811 = vst.msk [vmem:[%s542] sm:$0xff] %vm878, %v2803
        %2812 = vst.msk [vmem:[%s542 + $0x8] sm:$0xff] %vm878, %v2804
        %2813 = vst.msk [vmem:[%s542 + $0x10] sm:$0xff] %vm878, %v2805
        %2814 = vst.msk [vmem:[%s542 + $0x18] sm:$0xff] %vm878, %v2806
        %2815 = vst.msk [vmem:[%s542 + $0x20] sm:$0xff] %vm878, %v2807
        %2816 = vst.msk [vmem:[%s542 + $0x28] sm:$0xff] %vm878, %v2808
        %2817 = vst.msk [vmem:[%s542 + $0x30] sm:$0xff] %vm878, %v2809
        %2818 = vst.msk [vmem:[%s542 + $0x38] sm:$0xff] %vm878, %v2810
        %v2819 = vld [vmem:[#allocation3 + $0x4] sm:$0xf]
        %v2820 = vld [vmem:[#allocation3 + $0x8] sm:$0xf]
        %v2821 = vld [vmem:[#allocation3 + $0xc] sm:$0xf]
        %v2822 = vld [vmem:[#allocation3 + $0x10] sm:$0xf]
        %v2823 = vld [vmem:[#allocation3 + $0x14] sm:$0xf]
        %v2824 = vld [vmem:[#allocation3 + $0x18] sm:$0xf]
        %v2825 = vld [vmem:[#allocation3 + $0x1c] sm:$0xf]
        %v2826 = vld [vmem:[#allocation3 + $0x20] sm:$0xf]
        %v2827 = vld [vmem:[#allocation3 + $0x24] sm:$0x1]
        %v2828 = vunpack.c.l.bf16 %v2819
        %v2829 = vunpack.c.l.bf16 %v2820
        %v2830 = vunpack.c.l.bf16 %v2821
        %v2831 = vunpack.c.l.bf16 %v2822
        %v2832 = vunpack.c.l.bf16 %v2823
        %v2833 = vunpack.c.l.bf16 %v2824
        %v2834 = vunpack.c.l.bf16 %v2825
        %v2835 = vunpack.c.l.bf16 %v2826
        %v2836 = vunpack.c.l.bf16 %v2827
        %v2837 = vmul.f32 %v2828, %v1383
        %v2838 = vmul.f32 %v2829, %v1385
        %v2839 = vmul.f32 %v2830, %v1387
        %v2840 = vmul.f32 %v2831, %v1389
        %v2841 = vmul.f32 %v2832, %v1391
        %v2842 = vmul.f32 %v2833, %v1393
        %v2843 = vmul.f32 %v2834, %v1395
        %v2844 = vmul.f32 %v2835, %v1397
        %v2845 = vmul.f32 %v2836, %v1396
        %v2846 = vpack.c.bf16 %v2838, %v2837
        %v2847 = vpack.c.bf16 %v2840, %v2839
        %v2848 = vpack.c.bf16 %v2842, %v2841
        %v2849 = vpack.c.bf16 %v2844, %v2843
        %v2850 = vpack.c.bf16 %v2845, %v2845
        %v2851 = vld [vmem:[%s542] sm:$0xff]
        %v2852 = vld [vmem:[%s542 + $0x8] sm:$0xff]
        %v2853 = vld [vmem:[%s542 + $0x10] sm:$0xff]
        %v2854 = vld [vmem:[%s542 + $0x18] sm:$0xff]
        %v2855 = vld [vmem:[%s542 + $0x20] sm:$0xff]
        %v2856 = vld [vmem:[%s542 + $0x28] sm:$0xff]
        %v2857 = vld [vmem:[%s542 + $0x30] sm:$0xff]
        %v2858 = vld [vmem:[%s542 + $0x38] sm:$0xff]
        %s2859 = scalar_lea.vmem [#allocation4], 64
        %v2860 = vld [vmem:[%s2859] sm:$0xf]
        %v2861 = vld [vmem:[%s2859 + $0x4] sm:$0xf]
        %v2862 = vld [vmem:[%s2859 + $0x8] sm:$0xf]
        %v2863 = vld [vmem:[%s2859 + $0xc] sm:$0xf]
        %v2864 = vld [vmem:[%s2859 + $0x10] sm:$0xf]
        %v2865 = vld [vmem:[%s2859 + $0x14] sm:$0xf]
        %v2866 = vld [vmem:[%s2859 + $0x18] sm:$0xf]
        %v2867 = vld [vmem:[%s2859 + $0x1c] sm:$0xf]
        %v2869 = vshrl.u32 %v2846, 16
        %v2871 = vshll.u32 %v2846, 16
        %v2873 = vrot.slane %v2871, 1
        %v2874 = vor.u32 %v2869, %v2873
        %v2876 = vshll.u32 %v2847, 16
        %v2878 = vrot.slane %v2876, 1
        %v2879 = vsel %vm1426, %v2874, %v2878
        %v2880 = vshrl.u32 %v2847, 16
        %v2882 = vor.u32 %v2880, %v2878
        %v2884 = vshll.u32 %v2848, 16
        %v2886 = vrot.slane %v2884, 1
        %v2887 = vsel %vm1426, %v2882, %v2886
        %v2888 = vshrl.u32 %v2848, 16
        %v2890 = vor.u32 %v2888, %v2886
        %v2892 = vshll.u32 %v2849, 16
        %v2894 = vrot.slane %v2892, 1
        %v2895 = vsel %vm1426, %v2890, %v2894
        %v2896 = vshrl.u32 %v2849, 16
        %v2898 = vor.u32 %v2896, %v2894
        %v2900 = vshll.u32 %v2850, 16
        %v2902 = vrot.slane %v2900, 1
        %v2903 = vsel %vm1426, %v2898, %v2902
        %v2912 = vunpack.c.l.b16 %v2860
        %v2913 = vunpack.c.l.b16 %v2861
        %v2914 = vunpack.c.l.b16 %v2862
        %v2915 = vunpack.c.l.b16 %v2863
        %v2916 = vunpack.c.l.b16 %v2864
        %v2917 = vunpack.c.l.b16 %v2865
        %v2918 = vunpack.c.l.b16 %v2866
        %v2919 = vunpack.c.l.b16 %v2867
        %v2920 = vpack.c.b16 %v2913, %v2912
        %v2921 = vpack.c.b16 %v2915, %v2914
        %v2922 = vpack.c.b16 %v2917, %v2916
        %v2923 = vpack.c.b16 %v2919, %v2918
        %v2929 = vsel %vm878, %v2879, 0
        %v2932 = vsel %vm878, %v2887, 0
        %v2935 = vsel %vm878, %v2895, 0
        %v2938 = vsel %vm878, %v2903, 0
        %2940 = vmatpush.bf16.msra.mxu0 0
        %2941 = vmatpush.bf16.msra.mxu0 0
        %2942 = vmatpush.bf16.msra.mxu0 0
        %2943 = vmatpush.bf16.msra.mxu0 0
        %2944 = vmatpush.bf16.msra.mxu0 %v2923
        %2945 = vmatpush.bf16.msra.mxu0 %v2922
        %2946 = vmatpush.bf16.msra.mxu0 %v2921
        %2947 = vmatpush.bf16.msra.mxu0 %v2920
        %2948 = vmatmul.bf16.gmra.mxu0 %v2929
        %v2949 = vpop.f32.mrf.mxu0
        %v2950 = vadd.f32 0.0, %v2949
        %v2951 = vpop.f32.mrf.mxu0
        %v2952 = vadd.f32 0.0, %v2951
        %2953 = vmatmul.bf16.gmra.mxu0 %v2932
        %v2954 = vpop.f32.mrf.mxu0
        %v2955 = vadd.f32 0.0, %v2954
        %v2956 = vpop.f32.mrf.mxu0
        %v2957 = vadd.f32 0.0, %v2956
        %2958 = vmatmul.bf16.gmra.mxu0 %v2935
        %v2959 = vpop.f32.mrf.mxu0
        %v2960 = vadd.f32 0.0, %v2959
        %v2961 = vpop.f32.mrf.mxu0
        %v2962 = vadd.f32 0.0, %v2961
        %2963 = vmatmul.bf16.gmra.mxu0 %v2938
        %v2964 = vpop.f32.mrf.mxu0
        %v2965 = vadd.f32 0.0, %v2964
        %v2966 = vpop.f32.mrf.mxu0
        %v2967 = vadd.f32 0.0, %v2966
        %2968 = vdwg.mxu0
        %v2969 = vadd.f32 %v2851, %v2950
        %v2970 = vadd.f32 %v2852, %v2952
        %v2971 = vadd.f32 %v2853, %v2955
        %v2972 = vadd.f32 %v2854, %v2957
        %v2973 = vadd.f32 %v2855, %v2960
        %v2974 = vadd.f32 %v2856, %v2962
        %v2975 = vadd.f32 %v2857, %v2965
        %v2976 = vadd.f32 %v2858, %v2967
        %2977 = vst.msk [vmem:[%s542] sm:$0xff] %vm878, %v2969
        %2978 = vst.msk [vmem:[%s542 + $0x8] sm:$0xff] %vm878, %v2970
        %2979 = vst.msk [vmem:[%s542 + $0x10] sm:$0xff] %vm878, %v2971
        %2980 = vst.msk [vmem:[%s542 + $0x18] sm:$0xff] %vm878, %v2972
        %2981 = vst.msk [vmem:[%s542 + $0x20] sm:$0xff] %vm878, %v2973
        %2982 = vst.msk [vmem:[%s542 + $0x28] sm:$0xff] %vm878, %v2974
        %2983 = vst.msk [vmem:[%s542 + $0x30] sm:$0xff] %vm878, %v2975
        %2984 = vst.msk [vmem:[%s542 + $0x38] sm:$0xff] %vm878, %v2976
        %v2985 = vld [vmem:[#allocation3 + $0x4] sm:$0x8]
        %v2986 = vld [vmem:[#allocation3 + $0x8] sm:$0xf]
        %v2987 = vld [vmem:[#allocation3 + $0xc] sm:$0xf]
        %v2988 = vld [vmem:[#allocation3 + $0x10] sm:$0xf]
        %v2989 = vld [vmem:[#allocation3 + $0x14] sm:$0xf]
        %v2990 = vld [vmem:[#allocation3 + $0x18] sm:$0xf]
        %v2991 = vld [vmem:[#allocation3 + $0x1c] sm:$0xf]
        %v2992 = vld [vmem:[#allocation3 + $0x20] sm:$0xf]
        %v2993 = vld [vmem:[#allocation3 + $0x24] sm:$0xf]
        %v2994 = vunpack.c.l.bf16 %v2985
        %v2995 = vunpack.c.l.bf16 %v2986
        %v2996 = vunpack.c.l.bf16 %v2987
        %v2997 = vunpack.c.l.bf16 %v2988
        %v2998 = vunpack.c.l.bf16 %v2989
        %v2999 = vunpack.c.l.bf16 %v2990
        %v3000 = vunpack.c.l.bf16 %v2991
        %v3001 = vunpack.c.l.bf16 %v2992
        %v3002 = vunpack.c.l.bf16 %v2993
        %v3003 = vmul.f32 %v2994, %v1058
        %v3004 = vmul.f32 %v2995, %v1060
        %v3005 = vmul.f32 %v2996, %v1062
        %v3006 = vmul.f32 %v2997, %v1064
        %v3007 = vmul.f32 %v2998, %v1066
        %v3008 = vmul.f32 %v2999, %v1068
        %v3009 = vmul.f32 %v3000, %v1070
        %v3010 = vmul.f32 %v3001, %v1072
        %v3011 = vmul.f32 %v3002, %v1071
        %v3012 = vpack.c.bf16 %v3004, %v3003
        %v3013 = vpack.c.bf16 %v3006, %v3005
        %v3014 = vpack.c.bf16 %v3008, %v3007
        %v3015 = vpack.c.bf16 %v3010, %v3009
        %v3016 = vpack.c.bf16 %v3011, %v3011
        %v3017 = vld [vmem:[%s542] sm:$0xff]
        %v3018 = vld [vmem:[%s542 + $0x8] sm:$0xff]
        %v3019 = vld [vmem:[%s542 + $0x10] sm:$0xff]
        %v3020 = vld [vmem:[%s542 + $0x18] sm:$0xff]
        %v3021 = vld [vmem:[%s542 + $0x20] sm:$0xff]
        %v3022 = vld [vmem:[%s542 + $0x28] sm:$0xff]
        %v3023 = vld [vmem:[%s542 + $0x30] sm:$0xff]
        %v3024 = vld [vmem:[%s542 + $0x38] sm:$0xff]
        %s3025 = scalar_lea.vmem [#allocation4], 96
        %v3026 = vld [vmem:[%s3025] sm:$0xf]
        %v3027 = vld [vmem:[%s3025 + $0x4] sm:$0xf]
        %v3028 = vld [vmem:[%s3025 + $0x8] sm:$0xf]
        %v3029 = vld [vmem:[%s3025 + $0xc] sm:$0xf]
        %v3030 = vld [vmem:[%s3025 + $0x10] sm:$0xf]
        %v3031 = vld [vmem:[%s3025 + $0x14] sm:$0xf]
        %v3032 = vld [vmem:[%s3025 + $0x18] sm:$0xf]
        %v3033 = vld [vmem:[%s3025 + $0x1c] sm:$0xf]
        %v3035 = vshrl.u32 %v3012, 16
        %v3037 = vrot.slane %v3035, 3
        %v3038 = vshll.u32 %v3012, 16
        %v3040 = vrot.slane %v3038, 4
        %v3041 = vor.u32 %v3037, %v3040
        %v3043 = vshrl.u32 %v3013, 16
        %v3045 = vrot.slane %v3043, 3
        %v3046 = vshll.u32 %v3013, 16
        %v3048 = vrot.slane %v3046, 4
        %v3049 = vor.u32 %v3045, %v3048
        %v3050 = vsel %vm1178, %v3041, %v3049
        %v3052 = vshrl.u32 %v3014, 16
        %v3054 = vrot.slane %v3052, 3
        %v3055 = vshll.u32 %v3014, 16
        %v3057 = vrot.slane %v3055, 4
        %v3058 = vor.u32 %v3054, %v3057
        %v3059 = vsel %vm1178, %v3049, %v3058
        %v3061 = vshrl.u32 %v3015, 16
        %v3063 = vrot.slane %v3061, 3
        %v3064 = vshll.u32 %v3015, 16
        %v3066 = vrot.slane %v3064, 4
        %v3067 = vor.u32 %v3063, %v3066
        %v3068 = vsel %vm1178, %v3058, %v3067
        %v3070 = vshrl.u32 %v3016, 16
        %v3072 = vrot.slane %v3070, 3
        %v3073 = vshll.u32 %v3016, 16
        %v3075 = vrot.slane %v3073, 4
        %v3076 = vor.u32 %v3072, %v3075
        %v3077 = vsel %vm1178, %v3067, %v3076
        %v3086 = vunpack.c.l.b16 %v3026
        %v3087 = vunpack.c.l.b16 %v3027
        %v3088 = vunpack.c.l.b16 %v3028
        %v3089 = vunpack.c.l.b16 %v3029
        %v3090 = vunpack.c.l.b16 %v3030
        %v3091 = vunpack.c.l.b16 %v3031
        %v3092 = vunpack.c.l.b16 %v3032
        %v3093 = vunpack.c.l.b16 %v3033
        %v3094 = vpack.c.b16 %v3087, %v3086
        %v3095 = vpack.c.b16 %v3089, %v3088
        %v3096 = vpack.c.b16 %v3091, %v3090
        %v3097 = vpack.c.b16 %v3093, %v3092
        %v3103 = vsel %vm878, %v3050, 0
        %v3106 = vsel %vm878, %v3059, 0
        %v3109 = vsel %vm878, %v3068, 0
        %v3112 = vsel %vm878, %v3077, 0
        %3114 = vmatpush.bf16.msra.mxu0 0
        %3115 = vmatpush.bf16.msra.mxu0 0
        %3116 = vmatpush.bf16.msra.mxu0 0
        %3117 = vmatpush.bf16.msra.mxu0 0
        %3118 = vmatpush.bf16.msra.mxu0 %v3097
        %3119 = vmatpush.bf16.msra.mxu0 %v3096
        %3120 = vmatpush.bf16.msra.mxu0 %v3095
        %3121 = vmatpush.bf16.msra.mxu0 %v3094
        %3122 = vmatmul.bf16.gmra.mxu0 %v3103
        %v3123 = vpop.f32.mrf.mxu0
        %v3124 = vadd.f32 0.0, %v3123
        %v3125 = vpop.f32.mrf.mxu0
        %v3126 = vadd.f32 0.0, %v3125
        %3127 = vmatmul.bf16.gmra.mxu0 %v3106
        %v3128 = vpop.f32.mrf.mxu0
        %v3129 = vadd.f32 0.0, %v3128
        %v3130 = vpop.f32.mrf.mxu0
        %v3131 = vadd.f32 0.0, %v3130
        %3132 = vmatmul.bf16.gmra.mxu0 %v3109
        %v3133 = vpop.f32.mrf.mxu0
        %v3134 = vadd.f32 0.0, %v3133
        %v3135 = vpop.f32.mrf.mxu0
        %v3136 = vadd.f32 0.0, %v3135
        %3137 = vmatmul.bf16.gmra.mxu0 %v3112
        %v3138 = vpop.f32.mrf.mxu0
        %v3139 = vadd.f32 0.0, %v3138
        %v3140 = vpop.f32.mrf.mxu0
        %v3141 = vadd.f32 0.0, %v3140
        %3142 = vdwg.mxu0
        %v3143 = vadd.f32 %v3017, %v3124
        %v3144 = vadd.f32 %v3018, %v3126
        %v3145 = vadd.f32 %v3019, %v3129
        %v3146 = vadd.f32 %v3020, %v3131
        %v3147 = vadd.f32 %v3021, %v3134
        %v3148 = vadd.f32 %v3022, %v3136
        %v3149 = vadd.f32 %v3023, %v3139
        %v3150 = vadd.f32 %v3024, %v3141
        %3151 = vst.msk [vmem:[%s542] sm:$0xff] %vm878, %v3143
        %3152 = vst.msk [vmem:[%s542 + $0x8] sm:$0xff] %vm878, %v3144
        %3153 = vst.msk [vmem:[%s542 + $0x10] sm:$0xff] %vm878, %v3145
        %3154 = vst.msk [vmem:[%s542 + $0x18] sm:$0xff] %vm878, %v3146
        %3155 = vst.msk [vmem:[%s542 + $0x20] sm:$0xff] %vm878, %v3147
        %3156 = vst.msk [vmem:[%s542 + $0x28] sm:$0xff] %vm878, %v3148
        %3157 = vst.msk [vmem:[%s542 + $0x30] sm:$0xff] %vm878, %v3149
        %3158 = vst.msk [vmem:[%s542 + $0x38] sm:$0xff] %vm878, %v3150
        %v3159 = vld [vmem:[#allocation3 + $0x8] sm:$0xf]
        %v3160 = vld [vmem:[#allocation3 + $0xc] sm:$0xf]
        %v3161 = vld [vmem:[#allocation3 + $0x10] sm:$0xf]
        %v3162 = vld [vmem:[#allocation3 + $0x14] sm:$0xf]
        %v3163 = vld [vmem:[#allocation3 + $0x18] sm:$0xf]
        %v3164 = vld [vmem:[#allocation3 + $0x1c] sm:$0xf]
        %v3165 = vld [vmem:[#allocation3 + $0x20] sm:$0xf]
        %v3166 = vld [vmem:[#allocation3 + $0x24] sm:$0xf]
        %v3167 = vld [vmem:[%s542] sm:$0xff]
        %v3168 = vld [vmem:[%s542 + $0x8] sm:$0xff]
        %v3169 = vld [vmem:[%s542 + $0x10] sm:$0xff]
        %v3170 = vld [vmem:[%s542 + $0x18] sm:$0xff]
        %v3171 = vld [vmem:[%s542 + $0x20] sm:$0xff]
        %v3172 = vld [vmem:[%s542 + $0x28] sm:$0xff]
        %v3173 = vld [vmem:[%s542 + $0x30] sm:$0xff]
        %v3174 = vld [vmem:[%s542 + $0x38] sm:$0xff]
        %s3175 = scalar_lea.vmem [#allocation4], 128
        %v3176 = vld [vmem:[%s3175] sm:$0xf]
        %v3177 = vld [vmem:[%s3175 + $0x4] sm:$0xf]
        %v3178 = vld [vmem:[%s3175 + $0x8] sm:$0xf]
        %v3179 = vld [vmem:[%s3175 + $0xc] sm:$0xf]
        %v3180 = vld [vmem:[%s3175 + $0x10] sm:$0xf]
        %v3181 = vld [vmem:[%s3175 + $0x14] sm:$0xf]
        %v3182 = vld [vmem:[%s3175 + $0x18] sm:$0xf]
        %v3183 = vld [vmem:[%s3175 + $0x1c] sm:$0xf]
        %v3192 = vunpack.c.l.b16 %v3159
        %v3193 = vunpack.c.l.b16 %v3160
        %v3194 = vunpack.c.l.b16 %v3161
        %v3195 = vunpack.c.l.b16 %v3162
        %v3196 = vunpack.c.l.b16 %v3163
        %v3197 = vunpack.c.l.b16 %v3164
        %v3198 = vunpack.c.l.b16 %v3165
        %v3199 = vunpack.c.l.b16 %v3166
        %v3200 = vpack.c.b16 %v3193, %v3192
        %v3201 = vpack.c.b16 %v3195, %v3194
        %v3202 = vpack.c.b16 %v3197, %v3196
        %v3203 = vpack.c.b16 %v3199, %v3198
        %v3212 = vunpack.c.l.b16 %v3176
        %v3213 = vunpack.c.l.b16 %v3177
        %v3214 = vunpack.c.l.b16 %v3178
        %v3215 = vunpack.c.l.b16 %v3179
        %v3216 = vunpack.c.l.b16 %v3180
        %v3217 = vunpack.c.l.b16 %v3181
        %v3218 = vunpack.c.l.b16 %v3182
        %v3219 = vunpack.c.l.b16 %v3183
        %v3220 = vpack.c.b16 %v3213, %v3212
        %v3221 = vpack.c.b16 %v3215, %v3214
        %v3222 = vpack.c.b16 %v3217, %v3216
        %v3223 = vpack.c.b16 %v3219, %v3218
        %v3229 = vsel %vm878, %v3200, 0
        %v3232 = vsel %vm878, %v3201, 0
        %v3235 = vsel %vm878, %v3202, 0
        %v3238 = vsel %vm878, %v3203, 0
        %3240 = vmatpush.bf16.msra.mxu0 0
        %3241 = vmatpush.bf16.msra.mxu0 0
        %3242 = vmatpush.bf16.msra.mxu0 0
        %3243 = vmatpush.bf16.msra.mxu0 0
        %3244 = vmatpush.bf16.msra.mxu0 %v3223
        %3245 = vmatpush.bf16.msra.mxu0 %v3222
        %3246 = vmatpush.bf16.msra.mxu0 %v3221
        %3247 = vmatpush.bf16.msra.mxu0 %v3220
        %3248 = vmatmul.bf16.gmra.mxu0 %v3229
        %v3249 = vpop.f32.mrf.mxu0
        %v3250 = vadd.f32 0.0, %v3249
        %v3251 = vpop.f32.mrf.mxu0
        %v3252 = vadd.f32 0.0, %v3251
        %3253 = vmatmul.bf16.gmra.mxu0 %v3232
        %v3254 = vpop.f32.mrf.mxu0
        %v3255 = vadd.f32 0.0, %v3254
        %v3256 = vpop.f32.mrf.mxu0
        %v3257 = vadd.f32 0.0, %v3256
        %3258 = vmatmul.bf16.gmra.mxu0 %v3235
        %v3259 = vpop.f32.mrf.mxu0
        %v3260 = vadd.f32 0.0, %v3259
        %v3261 = vpop.f32.mrf.mxu0
        %v3262 = vadd.f32 0.0, %v3261
        %3263 = vmatmul.bf16.gmra.mxu0 %v3238
        %v3264 = vpop.f32.mrf.mxu0
        %v3265 = vadd.f32 0.0, %v3264
        %v3266 = vpop.f32.mrf.mxu0
        %v3267 = vadd.f32 0.0, %v3266
        %3268 = vdwg.mxu0
        %v3269 = vadd.f32 %v3167, %v3250
        %v3270 = vadd.f32 %v3168, %v3252
        %v3271 = vadd.f32 %v3169, %v3255
        %v3272 = vadd.f32 %v3170, %v3257
        %v3273 = vadd.f32 %v3171, %v3260
        %v3274 = vadd.f32 %v3172, %v3262
        %v3275 = vadd.f32 %v3173, %v3265
        %v3276 = vadd.f32 %v3174, %v3267
        %3277 = vst.msk [vmem:[%s542] sm:$0xff] %vm878, %v3269
        %3278 = vst.msk [vmem:[%s542 + $0x8] sm:$0xff] %vm878, %v3270
        %3279 = vst.msk [vmem:[%s542 + $0x10] sm:$0xff] %vm878, %v3271
        %3280 = vst.msk [vmem:[%s542 + $0x18] sm:$0xff] %vm878, %v3272
        %3281 = vst.msk [vmem:[%s542 + $0x20] sm:$0xff] %vm878, %v3273
        %3282 = vst.msk [vmem:[%s542 + $0x28] sm:$0xff] %vm878, %v3274
        %3283 = vst.msk [vmem:[%s542 + $0x30] sm:$0xff] %vm878, %v3275
        %3284 = vst.msk [vmem:[%s542 + $0x38] sm:$0xff] %vm878, %v3276
        %v3285 = vld [vmem:[#allocation3 + $0x8] sm:$0xf]
        %v3286 = vld [vmem:[#allocation3 + $0xc] sm:$0xf]
        %v3287 = vld [vmem:[#allocation3 + $0x10] sm:$0xf]
        %v3288 = vld [vmem:[#allocation3 + $0x14] sm:$0xf]
        %v3289 = vld [vmem:[#allocation3 + $0x18] sm:$0xf]
        %v3290 = vld [vmem:[#allocation3 + $0x1c] sm:$0xf]
        %v3291 = vld [vmem:[#allocation3 + $0x20] sm:$0xf]
        %v3292 = vld [vmem:[#allocation3 + $0x24] sm:$0xf]
        %v3293 = vld [vmem:[#allocation3 + $0x28] sm:$0x1]
        %v3294 = vunpack.c.l.bf16 %v3285
        %v3295 = vunpack.c.l.bf16 %v3286
        %v3296 = vunpack.c.l.bf16 %v3287
        %v3297 = vunpack.c.l.bf16 %v3288
        %v3298 = vunpack.c.l.bf16 %v3289
        %v3299 = vunpack.c.l.bf16 %v3290
        %v3300 = vunpack.c.l.bf16 %v3291
        %v3301 = vunpack.c.l.bf16 %v3292
        %v3302 = vunpack.c.l.bf16 %v3293
        %v3303 = vmul.f32 %v3294, %v1383
        %v3304 = vmul.f32 %v3295, %v1385
        %v3305 = vmul.f32 %v3296, %v1387
        %v3306 = vmul.f32 %v3297, %v1389
        %v3307 = vmul.f32 %v3298, %v1391
        %v3308 = vmul.f32 %v3299, %v1393
        %v3309 = vmul.f32 %v3300, %v1395
        %v3310 = vmul.f32 %v3301, %v1397
        %v3311 = vmul.f32 %v3302, %v1396
        %v3312 = vpack.c.bf16 %v3304, %v3303
        %v3313 = vpack.c.bf16 %v3306, %v3305
        %v3314 = vpack.c.bf16 %v3308, %v3307
        %v3315 = vpack.c.bf16 %v3310, %v3309
        %v3316 = vpack.c.bf16 %v3311, %v3311
        %v3317 = vld [vmem:[%s542] sm:$0xff]
        %v3318 = vld [vmem:[%s542 + $0x8] sm:$0xff]
        %v3319 = vld [vmem:[%s542 + $0x10] sm:$0xff]
        %v3320 = vld [vmem:[%s542 + $0x18] sm:$0xff]
        %v3321 = vld [vmem:[%s542 + $0x20] sm:$0xff]
        %v3322 = vld [vmem:[%s542 + $0x28] sm:$0xff]
        %v3323 = vld [vmem:[%s542 + $0x30] sm:$0xff]
        %v3324 = vld [vmem:[%s542 + $0x38] sm:$0xff]
        %s3325 = scalar_lea.vmem [#allocation4], 160
        %v3326 = vld [vmem:[%s3325] sm:$0xf]
        %v3327 = vld [vmem:[%s3325 + $0x4] sm:$0xf]
        %v3328 = vld [vmem:[%s3325 + $0x8] sm:$0xf]
        %v3329 = vld [vmem:[%s3325 + $0xc] sm:$0xf]
        %v3330 = vld [vmem:[%s3325 + $0x10] sm:$0xf]
        %v3331 = vld [vmem:[%s3325 + $0x14] sm:$0xf]
        %v3332 = vld [vmem:[%s3325 + $0x18] sm:$0xf]
        %v3333 = vld [vmem:[%s3325 + $0x1c] sm:$0xf]
        %v3335 = vshrl.u32 %v3312, 16
        %v3337 = vshll.u32 %v3312, 16
        %v3339 = vrot.slane %v3337, 1
        %v3340 = vor.u32 %v3335, %v3339
        %v3342 = vshll.u32 %v3313, 16
        %v3344 = vrot.slane %v3342, 1
        %v3345 = vsel %vm1426, %v3340, %v3344
        %v3346 = vshrl.u32 %v3313, 16
        %v3348 = vor.u32 %v3346, %v3344
        %v3350 = vshll.u32 %v3314, 16
        %v3352 = vrot.slane %v3350, 1
        %v3353 = vsel %vm1426, %v3348, %v3352
        %v3354 = vshrl.u32 %v3314, 16
        %v3356 = vor.u32 %v3354, %v3352
        %v3358 = vshll.u32 %v3315, 16
        %v3360 = vrot.slane %v3358, 1
        %v3361 = vsel %vm1426, %v3356, %v3360
        %v3362 = vshrl.u32 %v3315, 16
        %v3364 = vor.u32 %v3362, %v3360
        %v3366 = vshll.u32 %v3316, 16
        %v3368 = vrot.slane %v3366, 1
        %v3369 = vsel %vm1426, %v3364, %v3368
        %v3378 = vunpack.c.l.b16 %v3326
        %v3379 = vunpack.c.l.b16 %v3327
        %v3380 = vunpack.c.l.b16 %v3328
        %v3381 = vunpack.c.l.b16 %v3329
        %v3382 = vunpack.c.l.b16 %v3330
        %v3383 = vunpack.c.l.b16 %v3331
        %v3384 = vunpack.c.l.b16 %v3332
        %v3385 = vunpack.c.l.b16 %v3333
        %v3386 = vpack.c.b16 %v3379, %v3378
        %v3387 = vpack.c.b16 %v3381, %v3380
        %v3388 = vpack.c.b16 %v3383, %v3382
        %v3389 = vpack.c.b16 %v3385, %v3384
        %v3395 = vsel %vm878, %v3345, 0
        %v3398 = vsel %vm878, %v3353, 0
        %v3401 = vsel %vm878, %v3361, 0
        %v3404 = vsel %vm878, %v3369, 0
        %3406 = vmatpush.bf16.msra.mxu0 0
        %3407 = vmatpush.bf16.msra.mxu0 0
        %3408 = vmatpush.bf16.msra.mxu0 0
        %3409 = vmatpush.bf16.msra.mxu0 0
        %3410 = vmatpush.bf16.msra.mxu0 %v3389
        %3411 = vmatpush.bf16.msra.mxu0 %v3388
        %3412 = vmatpush.bf16.msra.mxu0 %v3387
        %3413 = vmatpush.bf16.msra.mxu0 %v3386
        %3414 = vmatmul.bf16.gmra.mxu0 %v3395
        %v3415 = vpop.f32.mrf.mxu0
        %v3416 = vadd.f32 0.0, %v3415
        %v3417 = vpop.f32.mrf.mxu0
        %v3418 = vadd.f32 0.0, %v3417
        %3419 = vmatmul.bf16.gmra.mxu0 %v3398
        %v3420 = vpop.f32.mrf.mxu0
        %v3421 = vadd.f32 0.0, %v3420
        %v3422 = vpop.f32.mrf.mxu0
        %v3423 = vadd.f32 0.0, %v3422
        %3424 = vmatmul.bf16.gmra.mxu0 %v3401
        %v3425 = vpop.f32.mrf.mxu0
        %v3426 = vadd.f32 0.0, %v3425
        %v3427 = vpop.f32.mrf.mxu0
        %v3428 = vadd.f32 0.0, %v3427
        %3429 = vmatmul.bf16.gmra.mxu0 %v3404
        %v3430 = vpop.f32.mrf.mxu0
        %v3431 = vadd.f32 0.0, %v3430
        %v3432 = vpop.f32.mrf.mxu0
        %v3433 = vadd.f32 0.0, %v3432
        %3434 = vdwg.mxu0
        %v3435 = vadd.f32 %v3317, %v3416
        %v3436 = vadd.f32 %v3318, %v3418
        %v3437 = vadd.f32 %v3319, %v3421
        %v3438 = vadd.f32 %v3320, %v3423
        %v3439 = vadd.f32 %v3321, %v3426
        %v3440 = vadd.f32 %v3322, %v3428
        %v3441 = vadd.f32 %v3323, %v3431
        %v3442 = vadd.f32 %v3324, %v3433
        %3443 = vst.msk [vmem:[%s542] sm:$0xff] %vm878, %v3435
        %3444 = vst.msk [vmem:[%s542 + $0x8] sm:$0xff] %vm878, %v3436
        %3445 = vst.msk [vmem:[%s542 + $0x10] sm:$0xff] %vm878, %v3437
        %3446 = vst.msk [vmem:[%s542 + $0x18] sm:$0xff] %vm878, %v3438
        %3447 = vst.msk [vmem:[%s542 + $0x20] sm:$0xff] %vm878, %v3439
        %3448 = vst.msk [vmem:[%s542 + $0x28] sm:$0xff] %vm878, %v3440
        %3449 = vst.msk [vmem:[%s542 + $0x30] sm:$0xff] %vm878, %v3441
        %3450 = vst.msk [vmem:[%s542 + $0x38] sm:$0xff] %vm878, %v3442
        %v3451 = vld [vmem:[#allocation3 + $0x8] sm:$0x8]
        %v3452 = vld [vmem:[#allocation3 + $0xc] sm:$0xf]
        %v3453 = vld [vmem:[#allocation3 + $0x10] sm:$0xf]
        %v3454 = vld [vmem:[#allocation3 + $0x14] sm:$0xf]
        %v3455 = vld [vmem:[#allocation3 + $0x18] sm:$0xf]
        %v3456 = vld [vmem:[#allocation3 + $0x1c] sm:$0xf]
        %v3457 = vld [vmem:[#allocation3 + $0x20] sm:$0xf]
        %v3458 = vld [vmem:[#allocation3 + $0x24] sm:$0xf]
        %v3459 = vld [vmem:[#allocation3 + $0x28] sm:$0xf]
        %v3460 = vunpack.c.l.bf16 %v3451
        %v3461 = vunpack.c.l.bf16 %v3452
        %v3462 = vunpack.c.l.bf16 %v3453
        %v3463 = vunpack.c.l.bf16 %v3454
        %v3464 = vunpack.c.l.bf16 %v3455
        %v3465 = vunpack.c.l.bf16 %v3456
        %v3466 = vunpack.c.l.bf16 %v3457
        %v3467 = vunpack.c.l.bf16 %v3458
        %v3468 = vunpack.c.l.bf16 %v3459
        %v3469 = vmul.f32 %v3460, %v1058
        %v3470 = vmul.f32 %v3461, %v1060
        %v3471 = vmul.f32 %v3462, %v1062
        %v3472 = vmul.f32 %v3463, %v1064
        %v3473 = vmul.f32 %v3464, %v1066
        %v3474 = vmul.f32 %v3465, %v1068
        %v3475 = vmul.f32 %v3466, %v1070
        %v3476 = vmul.f32 %v3467, %v1072
        %v3477 = vmul.f32 %v3468, %v1071
        %v3478 = vpack.c.bf16 %v3470, %v3469
        %v3479 = vpack.c.bf16 %v3472, %v3471
        %v3480 = vpack.c.bf16 %v3474, %v3473
        %v3481 = vpack.c.bf16 %v3476, %v3475
        %v3482 = vpack.c.bf16 %v3477, %v3477
        %v3483 = vld [vmem:[%s542] sm:$0xff]
        %v3484 = vld [vmem:[%s542 + $0x8] sm:$0xff]
        %v3485 = vld [vmem:[%s542 + $0x10] sm:$0xff]
        %v3486 = vld [vmem:[%s542 + $0x18] sm:$0xff]
        %v3487 = vld [vmem:[%s542 + $0x20] sm:$0xff]
        %v3488 = vld [vmem:[%s542 + $0x28] sm:$0xff]
        %v3489 = vld [vmem:[%s542 + $0x30] sm:$0xff]
        %v3490 = vld [vmem:[%s542 + $0x38] sm:$0xff]
        %s3491 = scalar_lea.vmem [#allocation4], 192
        %v3492 = vld [vmem:[%s3491] sm:$0xf]
        %v3493 = vld [vmem:[%s3491 + $0x4] sm:$0xf]
        %v3494 = vld [vmem:[%s3491 + $0x8] sm:$0xf]
        %v3495 = vld [vmem:[%s3491 + $0xc] sm:$0xf]
        %v3496 = vld [vmem:[%s3491 + $0x10] sm:$0xf]
        %v3497 = vld [vmem:[%s3491 + $0x14] sm:$0xf]
        %v3498 = vld [vmem:[%s3491 + $0x18] sm:$0xf]
        %v3499 = vld [vmem:[%s3491 + $0x1c] sm:$0xf]
        %v3501 = vshrl.u32 %v3478, 16
        %v3503 = vrot.slane %v3501, 3
        %v3504 = vshll.u32 %v3478, 16
        %v3506 = vrot.slane %v3504, 4
        %v3507 = vor.u32 %v3503, %v3506
        %v3509 = vshrl.u32 %v3479, 16
        %v3511 = vrot.slane %v3509, 3
        %v3512 = vshll.u32 %v3479, 16
        %v3514 = vrot.slane %v3512, 4
        %v3515 = vor.u32 %v3511, %v3514
        %v3516 = vsel %vm1178, %v3507, %v3515
        %v3518 = vshrl.u32 %v3480, 16
        %v3520 = vrot.slane %v3518, 3
        %v3521 = vshll.u32 %v3480, 16
        %v3523 = vrot.slane %v3521, 4
        %v3524 = vor.u32 %v3520, %v3523
        %v3525 = vsel %vm1178, %v3515, %v3524
        %v3527 = vshrl.u32 %v3481, 16
        %v3529 = vrot.slane %v3527, 3
        %v3530 = vshll.u32 %v3481, 16
        %v3532 = vrot.slane %v3530, 4
        %v3533 = vor.u32 %v3529, %v3532
        %v3534 = vsel %vm1178, %v3524, %v3533
        %v3536 = vshrl.u32 %v3482, 16
        %v3538 = vrot.slane %v3536, 3
        %v3539 = vshll.u32 %v3482, 16
        %v3541 = vrot.slane %v3539, 4
        %v3542 = vor.u32 %v3538, %v3541
        %v3543 = vsel %vm1178, %v3533, %v3542
        %v3552 = vunpack.c.l.b16 %v3492
        %v3553 = vunpack.c.l.b16 %v3493
        %v3554 = vunpack.c.l.b16 %v3494
        %v3555 = vunpack.c.l.b16 %v3495
        %v3556 = vunpack.c.l.b16 %v3496
        %v3557 = vunpack.c.l.b16 %v3497
        %v3558 = vunpack.c.l.b16 %v3498
        %v3559 = vunpack.c.l.b16 %v3499
        %v3560 = vpack.c.b16 %v3553, %v3552
        %v3561 = vpack.c.b16 %v3555, %v3554
        %v3562 = vpack.c.b16 %v3557, %v3556
        %v3563 = vpack.c.b16 %v3559, %v3558
        %v3569 = vsel %vm878, %v3516, 0
        %v3572 = vsel %vm878, %v3525, 0
        %v3575 = vsel %vm878, %v3534, 0
        %v3578 = vsel %vm878, %v3543, 0
        %3580 = vmatpush.bf16.msra.mxu0 0
        %3581 = vmatpush.bf16.msra.mxu0 0
        %3582 = vmatpush.bf16.msra.mxu0 0
        %3583 = vmatpush.bf16.msra.mxu0 0
        %3584 = vmatpush.bf16.msra.mxu0 %v3563
        %3585 = vmatpush.bf16.msra.mxu0 %v3562
        %3586 = vmatpush.bf16.msra.mxu0 %v3561
        %3587 = vmatpush.bf16.msra.mxu0 %v3560
        %3588 = vmatmul.bf16.gmra.mxu0 %v3569
        %v3589 = vpop.f32.mrf.mxu0
        %v3590 = vadd.f32 0.0, %v3589
        %v3591 = vpop.f32.mrf.mxu0
        %v3592 = vadd.f32 0.0, %v3591
        %3593 = vmatmul.bf16.gmra.mxu0 %v3572
        %v3594 = vpop.f32.mrf.mxu0
        %v3595 = vadd.f32 0.0, %v3594
        %v3596 = vpop.f32.mrf.mxu0
        %v3597 = vadd.f32 0.0, %v3596
        %3598 = vmatmul.bf16.gmra.mxu0 %v3575
        %v3599 = vpop.f32.mrf.mxu0
        %v3600 = vadd.f32 0.0, %v3599
        %v3601 = vpop.f32.mrf.mxu0
        %v3602 = vadd.f32 0.0, %v3601
        %3603 = vmatmul.bf16.gmra.mxu0 %v3578
        %v3604 = vpop.f32.mrf.mxu0
        %v3605 = vadd.f32 0.0, %v3604
        %v3606 = vpop.f32.mrf.mxu0
        %v3607 = vadd.f32 0.0, %v3606
        %3608 = vdwg.mxu0
        %v3609 = vadd.f32 %v3483, %v3590
        %v3610 = vadd.f32 %v3484, %v3592
        %v3611 = vadd.f32 %v3485, %v3595
        %v3612 = vadd.f32 %v3486, %v3597
        %v3613 = vadd.f32 %v3487, %v3600
        %v3614 = vadd.f32 %v3488, %v3602
        %v3615 = vadd.f32 %v3489, %v3605
        %v3616 = vadd.f32 %v3490, %v3607
        %3617 = vst.msk [vmem:[%s542] sm:$0xff] %vm878, %v3609
        %3618 = vst.msk [vmem:[%s542 + $0x8] sm:$0xff] %vm878, %v3610
        %3619 = vst.msk [vmem:[%s542 + $0x10] sm:$0xff] %vm878, %v3611
        %3620 = vst.msk [vmem:[%s542 + $0x18] sm:$0xff] %vm878, %v3612
        %3621 = vst.msk [vmem:[%s542 + $0x20] sm:$0xff] %vm878, %v3613
        %3622 = vst.msk [vmem:[%s542 + $0x28] sm:$0xff] %vm878, %v3614
        %3623 = vst.msk [vmem:[%s542 + $0x30] sm:$0xff] %vm878, %v3615
        %3624 = vst.msk [vmem:[%s542 + $0x38] sm:$0xff] %vm878, %v3616
        %v3625 = vld [vmem:[#allocation3 + $0xc] sm:$0xf]
        %v3626 = vld [vmem:[#allocation3 + $0x10] sm:$0xf]
        %v3627 = vld [vmem:[#allocation3 + $0x14] sm:$0xf]
        %v3628 = vld [vmem:[#allocation3 + $0x18] sm:$0xf]
        %v3629 = vld [vmem:[#allocation3 + $0x1c] sm:$0xf]
        %v3630 = vld [vmem:[#allocation3 + $0x20] sm:$0xf]
        %v3631 = vld [vmem:[#allocation3 + $0x24] sm:$0xf]
        %v3632 = vld [vmem:[#allocation3 + $0x28] sm:$0xf]
        %v3633 = vld [vmem:[%s542] sm:$0xff]
        %v3634 = vld [vmem:[%s542 + $0x8] sm:$0xff]
        %v3635 = vld [vmem:[%s542 + $0x10] sm:$0xff]
        %v3636 = vld [vmem:[%s542 + $0x18] sm:$0xff]
        %v3637 = vld [vmem:[%s542 + $0x20] sm:$0xff]
        %v3638 = vld [vmem:[%s542 + $0x28] sm:$0xff]
        %v3639 = vld [vmem:[%s542 + $0x30] sm:$0xff]
        %v3640 = vld [vmem:[%s542 + $0x38] sm:$0xff]
        %s3641 = scalar_lea.vmem [#allocation4], 224
        %v3642 = vld [vmem:[%s3641] sm:$0xf]
        %v3643 = vld [vmem:[%s3641 + $0x4] sm:$0xf]
        %v3644 = vld [vmem:[%s3641 + $0x8] sm:$0xf]
        %v3645 = vld [vmem:[%s3641 + $0xc] sm:$0xf]
        %v3646 = vld [vmem:[%s3641 + $0x10] sm:$0xf]
        %v3647 = vld [vmem:[%s3641 + $0x14] sm:$0xf]
        %v3648 = vld [vmem:[%s3641 + $0x18] sm:$0xf]
        %v3649 = vld [vmem:[%s3641 + $0x1c] sm:$0xf]
        %v3658 = vunpack.c.l.b16 %v3625
        %v3659 = vunpack.c.l.b16 %v3626
        %v3660 = vunpack.c.l.b16 %v3627
        %v3661 = vunpack.c.l.b16 %v3628
        %v3662 = vunpack.c.l.b16 %v3629
        %v3663 = vunpack.c.l.b16 %v3630
        %v3664 = vunpack.c.l.b16 %v3631
        %v3665 = vunpack.c.l.b16 %v3632
        %v3666 = vpack.c.b16 %v3659, %v3658
        %v3667 = vpack.c.b16 %v3661, %v3660
        %v3668 = vpack.c.b16 %v3663, %v3662
        %v3669 = vpack.c.b16 %v3665, %v3664
        %v3678 = vunpack.c.l.b16 %v3642
        %v3679 = vunpack.c.l.b16 %v3643
        %v3680 = vunpack.c.l.b16 %v3644
        %v3681 = vunpack.c.l.b16 %v3645
        %v3682 = vunpack.c.l.b16 %v3646
        %v3683 = vunpack.c.l.b16 %v3647
        %v3684 = vunpack.c.l.b16 %v3648
        %v3685 = vunpack.c.l.b16 %v3649
        %v3686 = vpack.c.b16 %v3679, %v3678
        %v3687 = vpack.c.b16 %v3681, %v3680
        %v3688 = vpack.c.b16 %v3683, %v3682
        %v3689 = vpack.c.b16 %v3685, %v3684
        %v3695 = vsel %vm878, %v3666, 0
        %v3698 = vsel %vm878, %v3667, 0
        %v3701 = vsel %vm878, %v3668, 0
        %v3704 = vsel %vm878, %v3669, 0
        %3706 = vmatpush.bf16.msra.mxu0 0
        %3707 = vmatpush.bf16.msra.mxu0 0
        %3708 = vmatpush.bf16.msra.mxu0 0
        %3709 = vmatpush.bf16.msra.mxu0 0
        %3710 = vmatpush.bf16.msra.mxu0 %v3689
        %3711 = vmatpush.bf16.msra.mxu0 %v3688
        %3712 = vmatpush.bf16.msra.mxu0 %v3687
        %3713 = vmatpush.bf16.msra.mxu0 %v3686
        %3714 = vmatmul.bf16.gmra.mxu0 %v3695
        %v3715 = vpop.f32.mrf.mxu0
        %v3716 = vadd.f32 0.0, %v3715
        %v3717 = vpop.f32.mrf.mxu0
        %v3718 = vadd.f32 0.0, %v3717
        %3719 = vmatmul.bf16.gmra.mxu0 %v3698
        %v3720 = vpop.f32.mrf.mxu0
        %v3721 = vadd.f32 0.0, %v3720
        %v3722 = vpop.f32.mrf.mxu0
        %v3723 = vadd.f32 0.0, %v3722
        %3724 = vmatmul.bf16.gmra.mxu0 %v3701
        %v3725 = vpop.f32.mrf.mxu0
        %v3726 = vadd.f32 0.0, %v3725
        %v3727 = vpop.f32.mrf.mxu0
        %v3728 = vadd.f32 0.0, %v3727
        %3729 = vmatmul.bf16.gmra.mxu0 %v3704
        %v3730 = vpop.f32.mrf.mxu0
        %v3731 = vadd.f32 0.0, %v3730
        %v3732 = vpop.f32.mrf.mxu0
        %v3733 = vadd.f32 0.0, %v3732
        %3734 = vdwg.mxu0
        %v3735 = vadd.f32 %v3633, %v3716
        %v3736 = vadd.f32 %v3634, %v3718
        %v3737 = vadd.f32 %v3635, %v3721
        %v3738 = vadd.f32 %v3636, %v3723
        %v3739 = vadd.f32 %v3637, %v3726
        %v3740 = vadd.f32 %v3638, %v3728
        %v3741 = vadd.f32 %v3639, %v3731
        %v3742 = vadd.f32 %v3640, %v3733
        %3743 = vst.msk [vmem:[%s542] sm:$0xff] %vm878, %v3735
        %3744 = vst.msk [vmem:[%s542 + $0x8] sm:$0xff] %vm878, %v3736
        %3745 = vst.msk [vmem:[%s542 + $0x10] sm:$0xff] %vm878, %v3737
        %3746 = vst.msk [vmem:[%s542 + $0x18] sm:$0xff] %vm878, %v3738
        %3747 = vst.msk [vmem:[%s542 + $0x20] sm:$0xff] %vm878, %v3739
        %3748 = vst.msk [vmem:[%s542 + $0x28] sm:$0xff] %vm878, %v3740
        %3749 = vst.msk [vmem:[%s542 + $0x30] sm:$0xff] %vm878, %v3741
        %3750 = vst.msk [vmem:[%s542 + $0x38] sm:$0xff] %vm878, %v3742
        %v3751 = vld [vmem:[#allocation3 + $0xc] sm:$0xf]
        %v3752 = vld [vmem:[#allocation3 + $0x10] sm:$0xf]
        %v3753 = vld [vmem:[#allocation3 + $0x14] sm:$0xf]
        %v3754 = vld [vmem:[#allocation3 + $0x18] sm:$0xf]
        %v3755 = vld [vmem:[#allocation3 + $0x1c] sm:$0xf]
        %v3756 = vld [vmem:[#allocation3 + $0x20] sm:$0xf]
        %v3757 = vld [vmem:[#allocation3 + $0x24] sm:$0xf]
        %v3758 = vld [vmem:[#allocation3 + $0x28] sm:$0xf]
        %v3759 = vld [vmem:[#allocation3 + $0x2c] sm:$0x1]
        %v3760 = vunpack.c.l.bf16 %v3751
        %v3761 = vunpack.c.l.bf16 %v3752
        %v3762 = vunpack.c.l.bf16 %v3753
        %v3763 = vunpack.c.l.bf16 %v3754
        %v3764 = vunpack.c.l.bf16 %v3755
        %v3765 = vunpack.c.l.bf16 %v3756
        %v3766 = vunpack.c.l.bf16 %v3757
        %v3767 = vunpack.c.l.bf16 %v3758
        %v3768 = vunpack.c.l.bf16 %v3759
        %v3769 = vmul.f32 %v3760, %v1383
        %v3770 = vmul.f32 %v3761, %v1385
        %v3771 = vmul.f32 %v3762, %v1387
        %v3772 = vmul.f32 %v3763, %v1389
        %v3773 = vmul.f32 %v3764, %v1391
        %v3774 = vmul.f32 %v3765, %v1393
        %v3775 = vmul.f32 %v3766, %v1395
        %v3776 = vmul.f32 %v3767, %v1397
        %v3777 = vmul.f32 %v3768, %v1396
        %v3778 = vpack.c.bf16 %v3770, %v3769
        %v3779 = vpack.c.bf16 %v3772, %v3771
        %v3780 = vpack.c.bf16 %v3774, %v3773
        %v3781 = vpack.c.bf16 %v3776, %v3775
        %v3782 = vpack.c.bf16 %v3777, %v3777
        %v3783 = vld [vmem:[%s542] sm:$0xff]
        %v3784 = vld [vmem:[%s542 + $0x8] sm:$0xff]
        %v3785 = vld [vmem:[%s542 + $0x10] sm:$0xff]
        %v3786 = vld [vmem:[%s542 + $0x18] sm:$0xff]
        %v3787 = vld [vmem:[%s542 + $0x20] sm:$0xff]
        %v3788 = vld [vmem:[%s542 + $0x28] sm:$0xff]
        %v3789 = vld [vmem:[%s542 + $0x30] sm:$0xff]
        %v3790 = vld [vmem:[%s542 + $0x38] sm:$0xff]
        %s3791 = scalar_lea.vmem [#allocation4], 256
        %v3792 = vld [vmem:[%s3791] sm:$0xf]
        %v3793 = vld [vmem:[%s3791 + $0x4] sm:$0xf]
        %v3794 = vld [vmem:[%s3791 + $0x8] sm:$0xf]
        %v3795 = vld [vmem:[%s3791 + $0xc] sm:$0xf]
        %v3796 = vld [vmem:[%s3791 + $0x10] sm:$0xf]
        %v3797 = vld [vmem:[%s3791 + $0x14] sm:$0xf]
        %v3798 = vld [vmem:[%s3791 + $0x18] sm:$0xf]
        %v3799 = vld [vmem:[%s3791 + $0x1c] sm:$0xf]
        %v3801 = vshrl.u32 %v3778, 16
        %v3803 = vshll.u32 %v3778, 16
        %v3805 = vrot.slane %v3803, 1
        %v3806 = vor.u32 %v3801, %v3805
        %v3808 = vshll.u32 %v3779, 16
        %v3810 = vrot.slane %v3808, 1
        %v3811 = vsel %vm1426, %v3806, %v3810
        %v3812 = vshrl.u32 %v3779, 16
        %v3814 = vor.u32 %v3812, %v3810
        %v3816 = vshll.u32 %v3780, 16
        %v3818 = vrot.slane %v3816, 1
        %v3819 = vsel %vm1426, %v3814, %v3818
        %v3820 = vshrl.u32 %v3780, 16
        %v3822 = vor.u32 %v3820, %v3818
        %v3824 = vshll.u32 %v3781, 16
        %v3826 = vrot.slane %v3824, 1
        %v3827 = vsel %vm1426, %v3822, %v3826
        %v3828 = vshrl.u32 %v3781, 16
        %v3830 = vor.u32 %v3828, %v3826
        %v3832 = vshll.u32 %v3782, 16
        %v3834 = vrot.slane %v3832, 1
        %v3835 = vsel %vm1426, %v3830, %v3834
        %v3844 = vunpack.c.l.b16 %v3792
        %v3845 = vunpack.c.l.b16 %v3793
        %v3846 = vunpack.c.l.b16 %v3794
        %v3847 = vunpack.c.l.b16 %v3795
        %v3848 = vunpack.c.l.b16 %v3796
        %v3849 = vunpack.c.l.b16 %v3797
        %v3850 = vunpack.c.l.b16 %v3798
        %v3851 = vunpack.c.l.b16 %v3799
        %v3852 = vpack.c.b16 %v3845, %v3844
        %v3853 = vpack.c.b16 %v3847, %v3846
        %v3854 = vpack.c.b16 %v3849, %v3848
        %v3855 = vpack.c.b16 %v3851, %v3850
        %v3861 = vsel %vm878, %v3811, 0
        %v3864 = vsel %vm878, %v3819, 0
        %v3867 = vsel %vm878, %v3827, 0
        %v3870 = vsel %vm878, %v3835, 0
        %3872 = vmatpush.bf16.msra.mxu0 0
        %3873 = vmatpush.bf16.msra.mxu0 0
        %3874 = vmatpush.bf16.msra.mxu0 0
        %3875 = vmatpush.bf16.msra.mxu0 0
        %3876 = vmatpush.bf16.msra.mxu0 %v3855
        %3877 = vmatpush.bf16.msra.mxu0 %v3854
        %3878 = vmatpush.bf16.msra.mxu0 %v3853
        %3879 = vmatpush.bf16.msra.mxu0 %v3852
        %3880 = vmatmul.bf16.gmra.mxu0 %v3861
        %v3881 = vpop.f32.mrf.mxu0
        %v3882 = vadd.f32 0.0, %v3881
        %v3883 = vpop.f32.mrf.mxu0
        %v3884 = vadd.f32 0.0, %v3883
        %3885 = vmatmul.bf16.gmra.mxu0 %v3864
        %v3886 = vpop.f32.mrf.mxu0
        %v3887 = vadd.f32 0.0, %v3886
        %v3888 = vpop.f32.mrf.mxu0
        %v3889 = vadd.f32 0.0, %v3888
        %3890 = vmatmul.bf16.gmra.mxu0 %v3867
        %v3891 = vpop.f32.mrf.mxu0
        %v3892 = vadd.f32 0.0, %v3891
        %v3893 = vpop.f32.mrf.mxu0
        %v3894 = vadd.f32 0.0, %v3893
        %3895 = vmatmul.bf16.gmra.mxu0 %v3870
        %v3896 = vpop.f32.mrf.mxu0
        %v3897 = vadd.f32 0.0, %v3896
        %v3898 = vpop.f32.mrf.mxu0
        %v3899 = vadd.f32 0.0, %v3898
        %3900 = vdwg.mxu0
        %v3901 = vadd.f32 %v3783, %v3882
        %v3902 = vadd.f32 %v3784, %v3884
        %v3903 = vadd.f32 %v3785, %v3887
        %v3904 = vadd.f32 %v3786, %v3889
        %v3905 = vadd.f32 %v3787, %v3892
        %v3906 = vadd.f32 %v3788, %v3894
        %v3907 = vadd.f32 %v3789, %v3897
        %v3908 = vadd.f32 %v3790, %v3899
        %3909 = vst.msk [vmem:[%s542] sm:$0xff] %vm878, %v3901
        %3910 = vst.msk [vmem:[%s542 + $0x8] sm:$0xff] %vm878, %v3902
        %3911 = vst.msk [vmem:[%s542 + $0x10] sm:$0xff] %vm878, %v3903
        %3912 = vst.msk [vmem:[%s542 + $0x18] sm:$0xff] %vm878, %v3904
        %3913 = vst.msk [vmem:[%s542 + $0x20] sm:$0xff] %vm878, %v3905
        %3914 = vst.msk [vmem:[%s542 + $0x28] sm:$0xff] %vm878, %v3906
        %3915 = vst.msk [vmem:[%s542 + $0x30] sm:$0xff] %vm878, %v3907
        %3916 = vst.msk [vmem:[%s542 + $0x38] sm:$0xff] %vm878, %v3908
        %s3917 = sand.u32 %s385, 1
        %s3918 = scalar_lea.sflag [#allocation6], %s3917
        %s3919 = sand.u32 %s385, 1
        %s3920 = smul.addr %s3919, 64
        %s3921 = scalar_lea.vmem [#allocation7], %s3920
        // Predicated region
        $region89: #{tpu_custom_call.1} parent=83 // pred_check
          %p3922 = pneg %p395
        $region90: #{tpu_custom_call.1} parent=83 // pred_check_branch
          %3924 = sbr.rel (%p3922) target = $region92
        $region91: #{tpu_custom_call.1} parent=83 // pred_region
          %3926 = vsyncadd %s3918, 0
          %s3927 = smul.addr %s31, 8
          %s3928 = smul.addr %s3927, 8
          %s3929 = scalar_lea.hbm %s16, %s3928
          %s3930 = sshll.u32 %s3921, 4
          %s3931 = int_to_ptr.vmem [resolvable:$true] %s3930
          %s3932 = sshll.u32 %s3929, 4
          %s3933 = int_to_ptr.hbm [resolvable:$true] %s3932
          %3938 = dma.vmem_to_hbm [thread:$0]  %s3931, 1024, %s3933, %s3918, 128, 128, 8
        $region92: #{tpu_custom_call.1} parent=83 // pred_fallthru
          _
      $region84: #{tpu_custom_call.1} parent=5 // pred_fallthru
        _
      %p3939 = scmp.le.s32.totalorder 2, %s26
      // Predicated region
      $region93: #{tpu_custom_call.1} parent=5 // pred_check
        %p3940 = pneg %p3939
      $region94: #{tpu_custom_call.1} parent=5 // pred_check_branch
        %3942 = sbr.rel (%p3940) target = $region96
      $region95: #{tpu_custom_call.1} parent=5 // pred_region
        %s3943 = ssub.s32 %s26, 2
        // Predicated region
        $region97: #{tpu_custom_call.1} parent=95 // pred_check
          %p3944 = pneg %p401
        $region98: #{tpu_custom_call.1} parent=95 // pred_check_branch
          %3946 = sbr.rel (%p3944) target = $region100
        $region99: #{tpu_custom_call.1} parent=95 // pred_region
          %s3947 = sand.u32 %s386, 1
          %s3948 = scalar_lea.sflag [#allocation6], %s3947
          %s3949 = sand.u32 %s386, 1
          %s3950 = smul.addr %s3949, 64
          %s3951 = scalar_lea.vmem [#allocation7], %s3950
          %3953 = dma.done %s3948, 1024
        $region100: #{tpu_custom_call.1} parent=95 // pred_fallthru
          _
      $region96: #{tpu_custom_call.1} parent=5 // pred_fallthru
        _
    $region6: #{tpu_custom_call.1} parent=1 // loop_footer
      %s30 = sadd.s32 1, %s26
    $region7: #{tpu_custom_call.1} parent=1 // loop_footer_branch
      %25 = sbr.rel target = $region3
    $region8: #{tpu_custom_call.1} parent=1 // loop_exit
      _
    %3954 = vsyncpa [#allocation5], 1
    %s3955 = scalar_lea.sflag [#allocation5], 1
    %3956 = vsyncpa %s3955, 1
    %3957 = vsyncpa [#allocation6], 1
    %s3958 = scalar_lea.sflag [#allocation6], 1
    %3959 = vsyncpa %s3958, 1

</llo_original>
